<compile_context>
chip_gen: v5e
topology: v5e:2x2
jax: 0.10.0
libtpu: 0.0.40
codegen_flags: <defaults>
</compile_context>

<pallas_src>
import numpy as np
import jax
import jax.numpy as jnp
from jax import lax
from jax.experimental import pallas as pl
from jax.experimental.pallas import tpu as pltpu


# ----------------------------------------------------------------------------------
# Kernel 1: trans_feature  (3x3 conv + ReLU + 1x1 conv), one grid step per image,
#           lane-dense NCHW (Cout, H*W) output written in-kernel.
# ----------------------------------------------------------------------------------
def trans_feature_pallas(x_nchw, w1, b1, w2, b2):
    bs, cin, H, W = x_nchw.shape
    cmid = w1.shape[3]
    cout = w2.shape[1]
    HW = H * W

    x_nhwc = jnp.transpose(x_nchw, (0, 2, 3, 1)).astype(jnp.bfloat16)
    # TODO(synk): for detector-scale maps, replace this whole-image pad with an in-kernel halo.
    x_pad = jnp.pad(x_nhwc, ((0, 0), (1, 1), (1, 1), (0, 0)))
    # NOTE: w1 must be HWIO (kh, kw, cin, cout); permute from torch OIHW before calling.
    w1r = w1.reshape(9 * cin, cmid).astype(jnp.bfloat16)
    w2b = w2.astype(jnp.bfloat16)
    b1r = b1.reshape(1, -1).astype(jnp.float32)
    b2r = b2.reshape(1, -1).astype(jnp.float32)

    def kernel(xp_ref, w1_ref, b1_ref, w2_ref, b2_ref, o_ref):
        # xp_ref: (1, H+2, W+2, Cin) bf16 padded image (whole image per grid step)
        # Single im2col patch -> one K = 9*Cin MXU matmul.
        pieces = []
        for t in range(9):
            dy, dx = t // 3, t % 3
            sl = xp_ref[0, dy:dy + H, dx:dx + W, :]          # (H, W, Cin)
            pieces.append(sl.reshape(HW, cin))
        patch = jnp.concatenate(pieces, axis=-1)             # (H*W, 9*Cin)
        h1 = jnp.dot(patch, w1_ref[...], preferred_element_type=jnp.float32)
        h1 = jnp.maximum(h1 + b1_ref[...], 0.0)              # ReLU after 3x3 conv
        out = jnp.dot(h1.astype(jnp.bfloat16), w2_ref[...],
                      preferred_element_type=jnp.float32) + b2_ref[...]   # (H*W, Cout)
        # Transpose once in-kernel -> lane-dense NCHW slab, unmasked vst on H*W lanes.
        o_ref[...] = out.T.reshape(1, cout, HW)

    out = pl.pallas_call(
        kernel,
        out_shape=jax.ShapeDtypeStruct((bs, cout, HW), jnp.float32),
        grid=(bs,),
        in_specs=[
            pl.BlockSpec((1, H + 2, W + 2, cin), lambda b: (b, 0, 0, 0)),
            pl.BlockSpec((9 * cin, cmid), lambda b: (0, 0)),
            pl.BlockSpec((1, cmid), lambda b: (0, 0)),
            pl.BlockSpec((cmid, cout), lambda b: (0, 0)),
            pl.BlockSpec((1, cout), lambda b: (0, 0)),
        ],
        out_specs=pl.BlockSpec((1, cout, HW), lambda b: (b, 0, 0)),
        compiler_params=pltpu.CompilerParams(dimension_semantics=("parallel",)),
    )(x_pad, w1r, b1r, w2b, b2r)
    return out.reshape(bs, cout, H, W)                       # free reshape, still NCHW


# ----------------------------------------------------------------------------------
# Kernel 2: pnp polygon rasterization.  Per-edge math hoisted out of the pixel loop,
#           pixel coords built as a single (1, hw) row, lane-dense (blk, H*W) output.
# ----------------------------------------------------------------------------------
# TODO(synk): the original `pnp()` source is not provided; implemented as the standard
#             even-odd ray-casting point-in-polygon binary rasterizer.
def pnp_pallas(polys, h, w):
    n, p, _ = polys.shape
    hw = h * w
    blk = min(128, ((n + 7) // 8) * 8)          # big blocks amortize per-step overhead
    n_pad = ((n + blk - 1) // blk) * blk
    xs = polys[..., 0].astype(jnp.float32)      # (n, p)
    ys = polys[..., 1].astype(jnp.float32)
    if n_pad != n:
        # zero padding -> degenerate polygons -> all-zero masks (never read back)
        xs = jnp.pad(xs, ((0, n_pad - n), (0, 0)))
        ys = jnp.pad(ys, ((0, n_pad - n), (0, 0)))
    x2 = jnp.roll(xs, -1, axis=1)               # next vertex per edge
    y2 = jnp.roll(ys, -1, axis=1)
    inv_w = 1.0 / float(w)

    def kernel(x1_ref, y1_ref, x2_ref, y2_ref, o_ref):
        xa = x1_ref[...]; ya = y1_ref[...]      # (blk, p)
        xb = x2_ref[...]; yb = y2_ref[...]
        denom = yb - ya
        inv = 1.0 / jnp.where(denom == 0.0, 1.0, denom)      # one batched (blk,p) divide
        slope = (xb - xa) * inv                              # hoisted per-edge constants
        intercept = xa - ya * slope
        idx = lax.broadcasted_iota(jnp.float32, (1, hw), 1)  # single-row pixel index
        py = jnp.floor((idx + 0.5) * inv_w)                  # (1, hw) row coordinate
        px = idx - py * float(w)                             # (1, hw) col coordinate
        inside = jnp.zeros((blk, hw), dtype=jnp.bool_)
        for j in range(p):
            y1j = ya[:, j:j + 1]; y2j = yb[:, j:j + 1]       # (blk, 1)
            sj = slope[:, j:j + 1]; cj = intercept[:, j:j + 1]
            crosses = (y1j > py) != (y2j > py)               # (blk, hw)
            x_int = sj * py + cj                             # one FMA per pixel per edge
            inside = jnp.logical_xor(inside, jnp.logical_and(crosses, px < x_int))
        o_ref[...] = inside.astype(jnp.float32)

    out = pl.pallas_call(
        kernel,
        out_shape=jax.ShapeDtypeStruct((n_pad, hw), jnp.float32),
        grid=(n_pad // blk,),
        in_specs=[pl.BlockSpec((blk, p), lambda i: (i, 0))] * 4,
        out_specs=pl.BlockSpec((blk, hw), lambda i: (i, 0)),
        compiler_params=pltpu.CompilerParams(dimension_semantics=("parallel",)),
    )(xs, ys, x2, y2)
    return out[:n]                               # (n, h*w) flat masks


# ----------------------------------------------------------------------------------
# Kernel 3: fused mask_batch construction + channel-max + relu(f*(m+1))
#   Consumes the raw (N, hw) pnp masks directly (no mask_batch HBM round-trip).
#   Per-image start/count come in via scalar prefetch; the per-image rows are gathered
#   with a tiny one-hot selection matmul; mask_batch is a kernel output (write-only).
# ----------------------------------------------------------------------------------
def _fuse_pnp_kernel(starts_ref, counts_ref, mask_ref, feat_ref, maskb_ref, o_ref):
    b = pl.program_id(0)
    nrows, thw = mask_ref.shape
    mc = maskb_ref.shape[1]
    start = starts_ref[b]
    cnt = counts_ref[b]
    # one-hot row-selection matrix: sel[j, r] = (r == start + j) and (j < cnt)
    j_ids = lax.broadcasted_iota(jnp.int32, (mc, nrows), 0)
    r_ids = lax.broadcasted_iota(jnp.int32, (mc, nrows), 1)
    sel = jnp.logical_and(r_ids == start + j_ids, j_ids < cnt).astype(jnp.float32)
    blk = jnp.dot(sel, mask_ref[...], preferred_element_type=jnp.float32)   # (mc, thw)
    maskb_ref[...] = blk.reshape(1, mc, thw)                 # mask_batch slice (write-only)
    m = jnp.max(blk, axis=0, keepdims=True)                  # fused channel-max (1, thw)
    o_ref[...] = jnp.maximum(feat_ref[...] * (m.reshape(1, 1, thw) + 1.0), 0.0)


def pnp_contour_feature(contour, cnn_feature, ct_num):
    # PnP_contour_feature.forward_train
    bs, c, h, w = cnn_feature.shape
    hw = h * w
    mask = pnp_pallas(contour, h, w)                         # (N, hw) raw polygon masks
    n = mask.shape[0]
    max_channel = int(max(ct_num))
    # NOTE: reproduces the reference module's indexing exactly (start = ct_num[i-1], not cumsum)
    starts = [0] + [int(ct_num[i - 1]) for i in range(1, bs)]
    counts = [int(ct_num[i]) for i in range(bs)]

    n_pad = ((n + 7) // 8) * 8                               # sublane-align raw mask rows
    if n_pad != n:
        mask = jnp.pad(mask, ((0, n_pad - n), (0, 0)))
    feat_flat = cnn_feature.reshape(bs, c, hw)
    starts_arr = jnp.asarray(starts, jnp.int32)
    counts_arr = jnp.asarray(counts, jnp.int32)

    # tile the hw axis when large so VMEM stays bounded (v7x: 64 MiB physical)
    if hw > 2048 and hw % 512 == 0:
        thw = 512
    else:
        thw = hw
    grid = (bs, hw // thw)

    maskb, fused = pl.pallas_call(
        _fuse_pnp_kernel,
        out_shape=(jax.ShapeDtypeStruct((bs, max_channel, hw), jnp.float32),
                   jax.ShapeDtypeStruct((bs, c, hw), jnp.float32)),
        grid_spec=pltpu.PrefetchScalarGridSpec(
            num_scalar_prefetch=2,
            grid=grid,
            in_specs=[pl.BlockSpec((n_pad, thw), lambda b, t, st, cn: (0, t)),
                      pl.BlockSpec((1, c, thw), lambda b, t, st, cn: (b, 0, t))],
            out_specs=[pl.BlockSpec((1, max_channel, thw), lambda b, t, st, cn: (b, 0, t)),
                       pl.BlockSpec((1, c, thw), lambda b, t, st, cn: (b, 0, t))]),
        compiler_params=pltpu.CompilerParams(
            dimension_semantics=("parallel", "parallel")),
    )(starts_arr, counts_arr, mask, feat_flat)
    return maskb.reshape(bs, max_channel, h, w), fused.reshape(bs, c, h, w)


# ----------------------------------------------------------------------------------
# Kernel 4: global_deform linear layers:  (x @ W_poly) @ W_fuse + b_fuse
#   Kept as one small Pallas call (overhead-dominated at this M per review); f32 so the
#   offset regression head keeps full precision.
# ----------------------------------------------------------------------------------
def _deform_kernel(x_ref, w1_ref, w2_ref, b2_ref, o_ref):
    h1 = jnp.dot(x_ref[...], w1_ref[...], preferred_element_type=jnp.float32)
    o_ref[...] = jnp.dot(h1, w2_ref[...], preferred_element_type=jnp.float32) + b2_ref[...]


def deform_pallas(x, w1, w2, b2):
    n, din = x.shape
    n_pad = ((n + 7) // 8) * 8                               # sublane-align the tiny M dim
    xf = x.astype(jnp.float32)
    if n_pad != n:
        xf = jnp.pad(xf, ((0, n_pad - n), (0, 0)))
    dmid, dout = w1.shape[1], w2.shape[1]
    out = pl.pallas_call(
        _deform_kernel,
        out_shape=jax.ShapeDtypeStruct((n_pad, dout), jnp.float32),
        grid=(1,),
        in_specs=[pl.BlockSpec((n_pad, din), lambda i: (0, 0)),
                  pl.BlockSpec((din, dmid), lambda i: (0, 0)),
                  pl.BlockSpec((dmid, dout), lambda i: (0, 0)),
                  pl.BlockSpec((1, dout), lambda i: (0, 0))],
        out_specs=pl.BlockSpec((n_pad, dout), lambda i: (0, 0)),
        compiler_params=pltpu.CompilerParams(dimension_semantics=("arbitrary",)),
    )(xf, w1.astype(jnp.float32), w2.astype(jnp.float32),
      b2.reshape(1, -1).astype(jnp.float32))
    return out[:n]


# ----------------------------------------------------------------------------------
# JAX glue (gathers with data-dependent indices)
# ----------------------------------------------------------------------------------
def get_gcn_feature(feat_nchw, points, img_idx, h, w):
    # torch.nn.functional.grid_sample(bilinear, align_corners=False, zero padding) with
    # grid = poly/(size/2) - 1  <=>  sample at pixel coordinate (p - 0.5).
    feat_nhwc = jnp.transpose(feat_nchw, (0, 2, 3, 1))       # (bs, H, W, C)
    x = points[..., 0] - 0.5
    y = points[..., 1] - 0.5
    x0 = jnp.floor(x)
    y0 = jnp.floor(y)
    wx1 = x - x0
    wx0 = 1.0 - wx1
    wy1 = y - y0
    wy0 = 1.0 - wy1

    def gather(xi, yi):
        valid = (xi >= 0) & (xi <= w - 1) & (yi >= 0) & (yi <= h - 1)
        xc = jnp.clip(xi, 0, w - 1).astype(jnp.int32)
        yc = jnp.clip(yi, 0, h - 1).astype(jnp.int32)
        vals = feat_nhwc[img_idx[:, None], yc, xc, :]        # (N, P1, C)
        return vals * valid[..., None].astype(vals.dtype)

    out = (gather(x0, y0) * (wx0 * wy0)[..., None]
           + gather(x0 + 1.0, y0) * (wx1 * wy0)[..., None]
           + gather(x0, y0 + 1.0) * (wx0 * wy1)[..., None]
           + gather(x0 + 1.0, y0 + 1.0) * (wx1 * wy1)[..., None])
    # torch returns (N, C, P1).view(N, -1)  -> flatten with C outer, P1 inner
    return jnp.transpose(out, (0, 2, 1)).reshape(out.shape[0], -1)


def refine_forward(params, feature, ct_polys, init_polys, ct_img_idx, ct_num,
                   num_point, coarse_stride):
    h, w = feature.shape[2], feature.shape[3]
    poly_num = ct_polys.shape[0]
    feature = trans_feature_pallas(feature, params['w_conv1'], params['b_conv1'],
                                   params['w_conv2'], params['b_conv2'])
    mask_batch, feature = pnp_contour_feature(init_polys, feature, ct_num)
    points = jnp.concatenate([ct_polys[:, None, :], init_polys], axis=1)   # (N, P+1, 2)
    feature_points = get_gcn_feature(feature, points, ct_img_idx, h, w)    # (N, 64*(P+1))
    offsets = deform_pallas(feature_points, params['w_trans_poly'],
                            params['w_trans_fuse'], params['b_trans_fuse'])
    offsets = offsets.reshape(poly_num, num_point, 2)
    coarse_polys = offsets * coarse_stride + init_polys
    return coarse_polys, mask_batch, feature


def decode_train_forward(params, data_input, output, cnn_feature,
                         init_stride=10.0, coarse_stride=4.0,
                         down_sample=4.0, num_point=16):
    meta = data_input['meta']
    ct_num = meta['ct_num']                                  # python list (static)
    ct_01 = np.asarray(data_input['ct_01']).astype(bool)
    ct_ind = np.asarray(data_input['ct_ind'])[ct_01]         # boolean-mask select (host glue)
    ct_img_idx = np.asarray(data_input['ct_img_idx'])[ct_01]
    _, _, height, width = data_input['ct_hm'].shape
    wh_pred = output['wh']

    ct_x = (ct_ind % width).astype(np.int32)
    ct_y = (ct_ind // width).astype(np.int32)
    n = ct_x.shape[0]
    img_idx = jnp.asarray(ct_img_idx.astype(np.int32))

    ct_offset = wh_pred[img_idx, :, jnp.asarray(ct_y), jnp.asarray(ct_x)]   # (N, 2*P)
    ct_offset = ct_offset.reshape(n, -1, 2)
    ct = jnp.stack([jnp.asarray(ct_x, jnp.float32), jnp.asarray(ct_y, jnp.float32)], axis=1)
    init_polys = ct_offset * init_stride + ct[:, None, :]

    coarse_polys, mask_batch_init, feature = refine_forward(
        params, cnn_feature, ct, init_polys, img_idx, ct_num,
        num_point=num_point, coarse_stride=coarse_stride)

    mask_batch_coarse, feature = pnp_contour_feature(coarse_polys, feature, ct_num)

    output['poly_init'] = init_polys * down_sample
    output['poly_coarse'] = coarse_polys * down_sample
    output['mask_batch_init'] = mask_batch_init
    output['mask_batch_coarse'] = mask_batch_coarse
    return feature


# ----------------------------------------------------------------------------------
# Main
# ----------------------------------------------------------------------------------
if __name__ == "__main__":
    key = jax.random.PRNGKey(0)
    bs, c_in, H, W = 2, 64, 16, 16          # module default c_in = 64
    num_point = 16
    max_obj = 4
    ct_num = [3, 2]

    keys = jax.random.split(key, 10)
    params = {
        'w_conv1': jax.random.normal(keys[0], (3, 3, c_in, 256), jnp.float32) * 0.05,
        'b_conv1': jax.random.normal(keys[1], (256,), jnp.float32) * 0.01,
        'w_conv2': jax.random.normal(keys[2], (256, 64), jnp.float32) * 0.05,
        'b_conv2': jax.random.normal(keys[3], (64,), jnp.float32) * 0.01,
        'w_trans_poly': jax.random.normal(keys[4], ((num_point + 1) * 64, num_point * 4),
                                          jnp.float32) * 0.02,
        'w_trans_fuse': jax.random.normal(keys[5], (num_point * 4, num_point * 2),
                                          jnp.float32) * 0.02,
        'b_trans_fuse': jax.random.normal(keys[6], (num_point * 2,), jnp.float32) * 0.01,
    }

    cnn_feature = jax.random.normal(keys[7], (bs, c_in, H, W), jnp.float32)
    wh_pred = jax.random.normal(keys[8], (bs, 2 * num_point, H, W), jnp.float32) * 0.5
    ct_hm = jnp.zeros((bs, 1, H, W), jnp.float32)

    ct_01 = np.zeros((bs, max_obj), dtype=bool)
    ct_01[0, :ct_num[0]] = True
    ct_01[1, :ct_num[1]] = True
    rng = np.random.RandomState(0)
    ct_ind = rng.randint(0, H * W, size=(bs, max_obj)).astype(np.int32)
    ct_img_idx = np.tile(np.arange(bs, dtype=np.int32)[:, None], (1, max_obj))

    data_input = {'meta': {'ct_num': ct_num}, 'ct_01': ct_01, 'ct_ind': ct_ind,
                  'ct_img_idx': ct_img_idx, 'ct_hm': ct_hm}
    output = {'wh': wh_pred, 'ct_hm': jnp.zeros((bs, 1, H, W), jnp.float32)}

    feature = decode_train_forward(params, data_input, output, cnn_feature,
                                   init_stride=10.0, coarse_stride=4.0,
                                   down_sample=4.0, num_point=num_point)

    jax.block_until_ready(feature)
    jax.block_until_ready(output['poly_init'])
    jax.block_until_ready(output['poly_coarse'])
    jax.block_until_ready(output['mask_batch_init'])
    jax.block_until_ready(output['mask_batch_coarse'])
    print("KERNEL_OK")
</pallas_src>

<mosaic_0001>
module attributes {stable_mosaic.version = 11 : i64} {
  func.func @kernel(%arg0: i32, %arg1: memref<1x18x18x64xbf16, #tpu.memory_space<vmem>>, %arg2: memref<576x256xbf16, #tpu.memory_space<vmem>>, %arg3: memref<1x256xf32, #tpu.memory_space<vmem>>, %arg4: memref<256x64xbf16, #tpu.memory_space<vmem>>, %arg5: memref<1x64xf32, #tpu.memory_space<vmem>>, %arg6: memref<1x64x256xf32, #tpu.memory_space<vmem>>) attributes {dimension_semantics = [#tpu.dimension_semantics<parallel>], iteration_bounds = array<i64: 2>, scalar_prefetch = 0 : i64, scratch_operands = 0 : i64, tpu.core_type = #tpu.core_type<tc>, window_params = [{transform_indices = @transform_0, window_bounds = array<i64: 1, 18, 18, 64>}, {pipeline_mode = #tpu.pipeline_mode<synchronous>, transform_indices = @transform_1, window_bounds = array<i64: 576, 256>}, {pipeline_mode = #tpu.pipeline_mode<synchronous>, transform_indices = @transform_2, window_bounds = array<i64: 1, 256>}, {pipeline_mode = #tpu.pipeline_mode<synchronous>, transform_indices = @transform_3, window_bounds = array<i64: 256, 64>}, {pipeline_mode = #tpu.pipeline_mode<synchronous>, transform_indices = @transform_4, window_bounds = array<i64: 1, 64>}, {transform_indices = @transform_5, window_bounds = array<i64: 1, 64, 256>}]} {
    %c0 = arith.constant 0 : index
    %c0_0 = arith.constant 0 : index
    %c0_1 = arith.constant 0 : index
    %c0_2 = arith.constant 0 : index
    %0 = vector.load %arg1[%c0, %c0_0, %c0_1, %c0_2] : memref<1x18x18x64xbf16, #tpu.memory_space<vmem>>, vector<1x16x16x64xbf16>
    %1 = vector.shape_cast %0 : vector<1x16x16x64xbf16> to vector<16x16x64xbf16>
    %2 = vector.shape_cast %1 : vector<16x16x64xbf16> to vector<256x64xbf16>
    %c0_3 = arith.constant 0 : index
    %c0_4 = arith.constant 0 : index
    %c1 = arith.constant 1 : index
    %c0_5 = arith.constant 0 : index
    %3 = vector.load %arg1[%c0_3, %c0_4, %c1, %c0_5] : memref<1x18x18x64xbf16, #tpu.memory_space<vmem>>, vector<1x16x16x64xbf16>
    %4 = vector.shape_cast %3 : vector<1x16x16x64xbf16> to vector<16x16x64xbf16>
    %5 = vector.shape_cast %4 : vector<16x16x64xbf16> to vector<256x64xbf16>
    %c0_6 = arith.constant 0 : index
    %c0_7 = arith.constant 0 : index
    %c2 = arith.constant 2 : index
    %c0_8 = arith.constant 0 : index
    %6 = vector.load %arg1[%c0_6, %c0_7, %c2, %c0_8] : memref<1x18x18x64xbf16, #tpu.memory_space<vmem>>, vector<1x16x16x64xbf16>
    %7 = vector.shape_cast %6 : vector<1x16x16x64xbf16> to vector<16x16x64xbf16>
    %8 = vector.shape_cast %7 : vector<16x16x64xbf16> to vector<256x64xbf16>
    %c0_9 = arith.constant 0 : index
    %c1_10 = arith.constant 1 : index
    %c0_11 = arith.constant 0 : index
    %c0_12 = arith.constant 0 : index
    %9 = vector.load %arg1[%c0_9, %c1_10, %c0_11, %c0_12] : memref<1x18x18x64xbf16, #tpu.memory_space<vmem>>, vector<1x16x16x64xbf16>
    %10 = vector.shape_cast %9 : vector<1x16x16x64xbf16> to vector<16x16x64xbf16>
    %11 = vector.shape_cast %10 : vector<16x16x64xbf16> to vector<256x64xbf16>
    %c0_13 = arith.constant 0 : index
    %c1_14 = arith.constant 1 : index
    %c1_15 = arith.constant 1 : index
    %c0_16 = arith.constant 0 : index
    %12 = vector.load %arg1[%c0_13, %c1_14, %c1_15, %c0_16] : memref<1x18x18x64xbf16, #tpu.memory_space<vmem>>, vector<1x16x16x64xbf16>
    %13 = vector.shape_cast %12 : vector<1x16x16x64xbf16> to vector<16x16x64xbf16>
    %14 = vector.shape_cast %13 : vector<16x16x64xbf16> to vector<256x64xbf16>
    %c0_17 = arith.constant 0 : index
    %c1_18 = arith.constant 1 : index
    %c2_19 = arith.constant 2 : index
    %c0_20 = arith.constant 0 : index
    %15 = vector.load %arg1[%c0_17, %c1_18, %c2_19, %c0_20] : memref<1x18x18x64xbf16, #tpu.memory_space<vmem>>, vector<1x16x16x64xbf16>
    %16 = vector.shape_cast %15 : vector<1x16x16x64xbf16> to vector<16x16x64xbf16>
    %17 = vector.shape_cast %16 : vector<16x16x64xbf16> to vector<256x64xbf16>
    %c0_21 = arith.constant 0 : index
    %c2_22 = arith.constant 2 : index
    %c0_23 = arith.constant 0 : index
    %c0_24 = arith.constant 0 : index
    %18 = vector.load %arg1[%c0_21, %c2_22, %c0_23, %c0_24] : memref<1x18x18x64xbf16, #tpu.memory_space<vmem>>, vector<1x16x16x64xbf16>
    %19 = vector.shape_cast %18 : vector<1x16x16x64xbf16> to vector<16x16x64xbf16>
    %20 = vector.shape_cast %19 : vector<16x16x64xbf16> to vector<256x64xbf16>
    %c0_25 = arith.constant 0 : index
    %c2_26 = arith.constant 2 : index
    %c1_27 = arith.constant 1 : index
    %c0_28 = arith.constant 0 : index
    %21 = vector.load %arg1[%c0_25, %c2_26, %c1_27, %c0_28] : memref<1x18x18x64xbf16, #tpu.memory_space<vmem>>, vector<1x16x16x64xbf16>
    %22 = vector.shape_cast %21 : vector<1x16x16x64xbf16> to vector<16x16x64xbf16>
    %23 = vector.shape_cast %22 : vector<16x16x64xbf16> to vector<256x64xbf16>
    %c0_29 = arith.constant 0 : index
    %c2_30 = arith.constant 2 : index
    %c2_31 = arith.constant 2 : index
    %c0_32 = arith.constant 0 : index
    %24 = vector.load %arg1[%c0_29, %c2_30, %c2_31, %c0_32] : memref<1x18x18x64xbf16, #tpu.memory_space<vmem>>, vector<1x16x16x64xbf16>
    %25 = vector.shape_cast %24 : vector<1x16x16x64xbf16> to vector<16x16x64xbf16>
    %26 = vector.shape_cast %25 : vector<16x16x64xbf16> to vector<256x64xbf16>
    %27 = tpu.concatenate %2, %5, %8, %11, %14, %17, %20, %23, %26 in 1 : vector<256x64xbf16>, vector<256x64xbf16>, vector<256x64xbf16>, vector<256x64xbf16>, vector<256x64xbf16>, vector<256x64xbf16>, vector<256x64xbf16>, vector<256x64xbf16>, vector<256x64xbf16> -> vector<256x576xbf16>
    %c0_33 = arith.constant 0 : index
    %c0_34 = arith.constant 0 : index
    %28 = vector.load %arg2[%c0_33, %c0_34] : memref<576x256xbf16, #tpu.memory_space<vmem>>, vector<576x256xbf16>
    %cst = arith.constant dense<0.000000e+00> : vector<256x256xf32>
    %29 = tpu.matmul %27, %28, %cst {dimension_numbers = #tpu.dot_dimension_numbers<[1], [0], [0], [1], [0, 0, 1, 1], [], []>} : vector<256x576xbf16>, vector<576x256xbf16>, vector<256x256xf32> -> vector<256x256xf32>
    %c0_35 = arith.constant 0 : index
    %c0_36 = arith.constant 0 : index
    %30 = vector.load %arg3[%c0_35, %c0_36] : memref<1x256xf32, #tpu.memory_space<vmem>>, vector<1x256xf32>
    %31 = vector.broadcast %30 : vector<1x256xf32> to vector<256x256xf32>
    %32 = arith.addf %29, %31 : vector<256x256xf32>
    %cst_37 = arith.constant 0.000000e+00 : f32
    %33 = vector.broadcast %cst_37 : f32 to vector<256x256xf32>
    %34 = arith.maximumf %32, %33 : vector<256x256xf32>
    %35 = arith.truncf %34 : vector<256x256xf32> to vector<256x256xbf16>
    %c0_38 = arith.constant 0 : index
    %c0_39 = arith.constant 0 : index
    %36 = vector.load %arg4[%c0_38, %c0_39] : memref<256x64xbf16, #tpu.memory_space<vmem>>, vector<256x64xbf16>
    %cst_40 = arith.constant dense<0.000000e+00> : vector<256x64xf32>
    %37 = tpu.matmul %35, %36, %cst_40 {dimension_numbers = #tpu.dot_dimension_numbers<[1], [0], [0], [1], [0, 0, 1, 1], [], []>} : vector<256x256xbf16>, vector<256x64xbf16>, vector<256x64xf32> -> vector<256x64xf32>
    %c0_41 = arith.constant 0 : index
    %c0_42 = arith.constant 0 : index
    %38 = vector.load %arg5[%c0_41, %c0_42] : memref<1x64xf32, #tpu.memory_space<vmem>>, vector<1x64xf32>
    %39 = vector.broadcast %38 : vector<1x64xf32> to vector<256x64xf32>
    %40 = arith.addf %37, %39 : vector<256x64xf32>
    %41 = tpu.transpose %40, [1, 0] : vector<256x64xf32> -> vector<64x256xf32>
    %42 = vector.shape_cast %41 : vector<64x256xf32> to vector<1x64x256xf32>
    %c0_43 = arith.constant 0 : index
    %c0_44 = arith.constant 0 : index
    %c0_45 = arith.constant 0 : index
    %43 = vector.load %arg6[%c0_43, %c0_44, %c0_45] : memref<1x64x256xf32, #tpu.memory_space<vmem>>, vector<1x64x256xf32>
    tpu.vector_store %arg6[%c0_43, %c0_44, %c0_45], %42 {strides = array<i32>} : memref<1x64x256xf32, #tpu.memory_space<vmem>>, vector<1x64x256xf32>,
    return
  }
  func.func @transform_0(%arg0: i32) -> (i32, i32, i32, i32) {
    %c0_i32 = arith.constant 0 : i32
    %c0_i32_0 = arith.constant 0 : i32
    %c0_i32_1 = arith.constant 0 : i32
    %c0_i32_2 = arith.constant 0 : i32
    return %arg0, %c0_i32, %c0_i32_0, %c0_i32_1 : i32, i32, i32, i32
  }
  func.func @transform_1(%arg0: i32) -> (i32, i32) {
    %c0_i32 = arith.constant 0 : i32
    %c0_i32_0 = arith.constant 0 : i32
    %c0_i32_1 = arith.constant 0 : i32
    return %c0_i32, %c0_i32_0 : i32, i32
  }
  func.func @transform_2(%arg0: i32) -> (i32, i32) {
    %c0_i32 = arith.constant 0 : i32
    %c0_i32_0 = arith.constant 0 : i32
    %c0_i32_1 = arith.constant 0 : i32
    return %c0_i32, %c0_i32_0 : i32, i32
  }
  func.func @transform_3(%arg0: i32) -> (i32, i32) {
    %c0_i32 = arith.constant 0 : i32
    %c0_i32_0 = arith.constant 0 : i32
    %c0_i32_1 = arith.constant 0 : i32
    return %c0_i32, %c0_i32_0 : i32, i32
  }
  func.func @transform_4(%arg0: i32) -> (i32, i32) {
    %c0_i32 = arith.constant 0 : i32
    %c0_i32_0 = arith.constant 0 : i32
    %c0_i32_1 = arith.constant 0 : i32
    return %c0_i32, %c0_i32_0 : i32, i32
  }
  func.func @transform_5(%arg0: i32) -> (i32, i32, i32) {
    %c0_i32 = arith.constant 0 : i32
    %c0_i32_0 = arith.constant 0 : i32
    %c0_i32_1 = arith.constant 0 : i32
    return %arg0, %c0_i32, %c0_i32_0 : i32, i32, i32
  }
}

</mosaic_0001>

<llo_original>
// kernel: tpu_custom_call.1
$region0: #{tpu_custom_call.1}
  #allocation0 [shape = 'u32[]', space=smem, size = 0x4, offset = 0x4, fixed_abs, tag = 'smem constant byte address 0x4 - core index']
  #allocation1 [shape = 'u32[72,128]{1,0:T(1,128)}', space=vmem, size = 0x9000, scoped, tag = 'internal scratch']
  %s0 = inlined_call_operand.vmem [shape: bf16[2,18,18,64], index: 0, kind: input, shape index: {}]
  %s1 = inlined_call_operand.vmem [shape: bf16[576,256], index: 1, kind: input, shape index: {}]
  %s2 = inlined_call_operand.vmem [shape: f32[1,256], index: 2, kind: input, shape index: {}]
  %s3 = inlined_call_operand.vmem [shape: bf16[256,64], index: 3, kind: input, shape index: {}]
  %s4 = inlined_call_operand.vmem [shape: f32[1,64], index: 4, kind: input, shape index: {}]
  %s5 = inlined_call_operand.hbm [shape: f32[2,64,256], index: 5, kind: output, shape index: {}]
  %s6 = sld [smem:[#allocation0]]
  $region53: #{tpu_custom_call.1} parent=0
    _
  %s8 = ssub.s32 1, %s6
  %s9 = scalar_select 0, %s8, %s6
  $region1: #{tpu_custom_call.1} parent=0
    #allocation2 [shape = 'u8[131072]{0}', space=vmem, size = 0x20000, scoped, tag = 'output window, operand 0']
    #allocation3 [shape = 's32[2]{0}', space=sflag, size = 0x8, scoped, tag = 'scoped memory for tpu_custom_call.1']
    %10 = vsyncpa [#allocation3], 0
    %s11 = scalar_lea.sflag [#allocation3], 1
    %12 = vsyncpa %s11, 0
    loop: start=0, step=1, limit=4
    $region2: #{tpu_custom_call.1} parent=1 // loop_pre_header
      _
    $region3: #{tpu_custom_call.1} parent=1 // loop_header
      %s14 = sphi 0, %s18
      %p15 = scmp.ge.s32.totalorder %s14, 4
      %s24 = sphi 0, %s26
      %s27 = sphi 0, %s24
      %s28 = sphi 0, %s27
      %s44 = sphi 0, %s28
      %s48 = sphi 0, %s48
      %s50 = sphi 0, %s48
      %s51 = sphi 0, %s50
      %s65 = sphi 0, %s51
      %s69 = sphi 0, %s69
      %s71 = sphi 0, %s69
      %s72 = sphi 0, %s71
      %s86 = sphi 0, %s72
      %s90 = sphi 0, %s90
      %s92 = sphi 0, %s90
      %s93 = sphi 0, %s92
      %s107 = sphi 0, %s93
      %s111 = sphi 0, %s111
      %s113 = sphi 0, %s111
      %s114 = sphi 0, %s113
      %s128 = sphi 0, %s114
      %s134 = sphi 0, %s136
      %s137 = sphi 0, %s134
      %s138 = sphi 0, %s137
      %s154 = sphi 0, %s138
    $region4: #{tpu_custom_call.1} parent=1 // loop_header_branch
      %17 = sbr.rel (%p15) target = $region8
    $region5: #{tpu_custom_call.1} parent=1 // loop_body
      %s19 = ssub.s32 %s14, 1
      %s20 = ssub.s32 %s14, 2
      %s21 = sadd.s32 %s14, 1
      %s22 = ssub.s32 %s14, %s21
      %p23 = scmp.eq.s32.totalorder %s22, 0
      %s25 = sadd.s32 %s24, 1
      %s26 = scalar_select %p23, %s24, %s25
      %p29 = pneg %p23
      %p30 = scmp.eq.s32.totalorder %s14, 1
      %p31 = por %p29, %p30
      %p32 = scmp.ne.s32.totalorder %s24, %s27
      %p33 = scmp.eq.s32.totalorder %s14, 0
      %p34 = por %p32, %p33
      %p35 = scmp.ne.s32.totalorder %s24, %s27
      %p36 = scmp.eq.s32.totalorder %s19, 1
      %p37 = por %p35, %p36
      %p38 = scmp.ne.s32.totalorder %s27, %s28
      %p39 = scmp.eq.s32.totalorder %s19, 0
      %p40 = por %p38, %p39
      %p41 = scmp.ne.s32.totalorder %s27, %s28
      %p42 = scmp.eq.s32.totalorder %s20, 1
      %p43 = por %p41, %p42
      %p45 = scmp.ne.s32.totalorder %s28, %s44
      %p46 = scmp.eq.s32.totalorder %s20, 0
      %p47 = por %p45, %p46
      %s49 = sadd.s32 %s48, 1
      %p52 = scmp.eq.s32.totalorder %s14, 1
      %p53 = scmp.ne.s32.totalorder %s48, %s50
      %p54 = scmp.eq.s32.totalorder %s14, 0
      %p55 = por %p53, %p54
      %p56 = scmp.ne.s32.totalorder %s48, %s50
      %p57 = scmp.eq.s32.totalorder %s19, 1
      %p58 = por %p56, %p57
      %p59 = scmp.ne.s32.totalorder %s50, %s51
      %p60 = scmp.eq.s32.totalorder %s19, 0
      %p61 = por %p59, %p60
      %p62 = scmp.ne.s32.totalorder %s50, %s51
      %p63 = scmp.eq.s32.totalorder %s20, 1
      %p64 = por %p62, %p63
      %p66 = scmp.ne.s32.totalorder %s51, %s65
      %p67 = scmp.eq.s32.totalorder %s20, 0
      %p68 = por %p66, %p67
      %s70 = sadd.s32 %s69, 1
      %p73 = scmp.eq.s32.totalorder %s14, 1
      %p74 = scmp.ne.s32.totalorder %s69, %s71
      %p75 = scmp.eq.s32.totalorder %s14, 0
      %p76 = por %p74, %p75
      %p77 = scmp.ne.s32.totalorder %s69, %s71
      %p78 = scmp.eq.s32.totalorder %s19, 1
      %p79 = por %p77, %p78
      %p80 = scmp.ne.s32.totalorder %s71, %s72
      %p81 = scmp.eq.s32.totalorder %s19, 0
      %p82 = por %p80, %p81
      %p83 = scmp.ne.s32.totalorder %s71, %s72
      %p84 = scmp.eq.s32.totalorder %s20, 1
      %p85 = por %p83, %p84
      %p87 = scmp.ne.s32.totalorder %s72, %s86
      %p88 = scmp.eq.s32.totalorder %s20, 0
      %p89 = por %p87, %p88
      %s91 = sadd.s32 %s90, 1
      %p94 = scmp.eq.s32.totalorder %s14, 1
      %p95 = scmp.ne.s32.totalorder %s90, %s92
      %p96 = scmp.eq.s32.totalorder %s14, 0
      %p97 = por %p95, %p96
      %p98 = scmp.ne.s32.totalorder %s90, %s92
      %p99 = scmp.eq.s32.totalorder %s19, 1
      %p100 = por %p98, %p99
      %p101 = scmp.ne.s32.totalorder %s92, %s93
      %p102 = scmp.eq.s32.totalorder %s19, 0
      %p103 = por %p101, %p102
      %p104 = scmp.ne.s32.totalorder %s92, %s93
      %p105 = scmp.eq.s32.totalorder %s20, 1
      %p106 = por %p104, %p105
      %p108 = scmp.ne.s32.totalorder %s93, %s107
      %p109 = scmp.eq.s32.totalorder %s20, 0
      %p110 = por %p108, %p109
      %s112 = sadd.s32 %s111, 1
      %p115 = scmp.eq.s32.totalorder %s14, 1
      %p116 = scmp.ne.s32.totalorder %s111, %s113
      %p117 = scmp.eq.s32.totalorder %s14, 0
      %p118 = por %p116, %p117
      %p119 = scmp.ne.s32.totalorder %s111, %s113
      %p120 = scmp.eq.s32.totalorder %s19, 1
      %p121 = por %p119, %p120
      %p122 = scmp.ne.s32.totalorder %s113, %s114
      %p123 = scmp.eq.s32.totalorder %s19, 0
      %p124 = por %p122, %p123
      %p125 = scmp.ne.s32.totalorder %s113, %s114
      %p126 = scmp.eq.s32.totalorder %s20, 1
      %p127 = por %p125, %p126
      %p129 = scmp.ne.s32.totalorder %s114, %s128
      %p130 = scmp.eq.s32.totalorder %s20, 0
      %p131 = por %p129, %p130
      %s132 = ssub.s32 %s14, %s21
      %p133 = scmp.eq.s32.totalorder %s132, 0
      %s135 = sadd.s32 %s134, 1
      %s136 = scalar_select %p133, %s134, %s135
      %p139 = pneg %p133
      %p140 = scmp.eq.s32.totalorder %s14, 1
      %p141 = por %p139, %p140
      %p142 = scmp.ne.s32.totalorder %s134, %s137
      %p143 = scmp.eq.s32.totalorder %s14, 0
      %p144 = por %p142, %p143
      %p145 = scmp.ne.s32.totalorder %s134, %s137
      %p146 = scmp.eq.s32.totalorder %s19, 1
      %p147 = por %p145, %p146
      %p148 = scmp.ne.s32.totalorder %s137, %s138
      %p149 = scmp.eq.s32.totalorder %s19, 0
      %p150 = por %p148, %p149
      %p151 = scmp.ne.s32.totalorder %s137, %s138
      %p152 = scmp.eq.s32.totalorder %s20, 1
      %p153 = por %p151, %p152
      %p155 = scmp.ne.s32.totalorder %s138, %s154
      %p156 = scmp.eq.s32.totalorder %s20, 0
      %p157 = por %p155, %p156
      %p158 = scmp.le.s32.totalorder 1, %s14
      %p159 = scmp.lt.s32.totalorder %s14, 3
      %p160 = pnand %p158, %p159
      %p161 = pneg %p160
      // Predicated region
      $region9: #{tpu_custom_call.1} parent=5 // pred_check
        _
      $region10: #{tpu_custom_call.1} parent=5 // pred_check_branch
        %163 = sbr.rel (%p160) target = $region12
      $region11: #{tpu_custom_call.1} parent=5 // pred_region
        %s164 = ssub.s32 %s14, 1
        // Predicated region
        $region13: #{tpu_custom_call.1} parent=11 // pred_check
          %p165 = pneg %p61
        $region14: #{tpu_custom_call.1} parent=11 // pred_check_branch
          %167 = sbr.rel (%p165) target = $region16
        $region15: #{tpu_custom_call.1} parent=11 // pred_region
          _
        $region16: #{tpu_custom_call.1} parent=11 // pred_fallthru
          _
        // Predicated region
        $region17: #{tpu_custom_call.1} parent=11 // pred_check
          %p168 = pneg %p82
        $region18: #{tpu_custom_call.1} parent=11 // pred_check_branch
          %170 = sbr.rel (%p168) target = $region20
        $region19: #{tpu_custom_call.1} parent=11 // pred_region
          _
        $region20: #{tpu_custom_call.1} parent=11 // pred_fallthru
          _
        // Predicated region
        $region21: #{tpu_custom_call.1} parent=11 // pred_check
          %p171 = pneg %p103
        $region22: #{tpu_custom_call.1} parent=11 // pred_check_branch
          %173 = sbr.rel (%p171) target = $region24
        $region23: #{tpu_custom_call.1} parent=11 // pred_region
          _
        $region24: #{tpu_custom_call.1} parent=11 // pred_fallthru
          _
        // Predicated region
        $region25: #{tpu_custom_call.1} parent=11 // pred_check
          %p174 = pneg %p124
        $region26: #{tpu_custom_call.1} parent=11 // pred_check_branch
          %176 = sbr.rel (%p174) target = $region28
        $region27: #{tpu_custom_call.1} parent=11 // pred_region
          _
        $region28: #{tpu_custom_call.1} parent=11 // pred_fallthru
          _
      $region12: #{tpu_custom_call.1} parent=5 // pred_fallthru
        _
      %p177 = scmp.lt.s32.totalorder %s14, 2
      // Predicated region
      $region29: #{tpu_custom_call.1} parent=5 // pred_check
        %p178 = pneg %p177
      $region30: #{tpu_custom_call.1} parent=5 // pred_check_branch
        %180 = sbr.rel (%p178) target = $region32
      $region31: #{tpu_custom_call.1} parent=5 // pred_region
        // Predicated region
        $region33: #{tpu_custom_call.1} parent=31 // pred_check
          %p181 = pneg %p34
        $region34: #{tpu_custom_call.1} parent=31 // pred_check_branch
          %183 = sbr.rel (%p181) target = $region36
        $region35: #{tpu_custom_call.1} parent=31 // pred_region
          %p184 = scmp.lt.s32.totalorder %s14, 1
          %s185 = scalar_select %p184, %s14, 1
          %s186 = smul.addr %s185, 54
          %s187 = smul.addr %s186, 4
          %s188 = scalar_lea.vmem %s0, %s187
        $region36: #{tpu_custom_call.1} parent=31 // pred_fallthru
          _
      $region32: #{tpu_custom_call.1} parent=5 // pred_fallthru
        _
      %p189 = scmp.le.s32.totalorder 1, %s14
      %p190 = scmp.lt.s32.totalorder %s14, 3
      %p191 = pnand %p189, %p190
      %p192 = pneg %p191
      // Predicated region
      $region37: #{tpu_custom_call.1} parent=5 // pred_check
        _
      $region38: #{tpu_custom_call.1} parent=5 // pred_check_branch
        %194 = sbr.rel (%p191) target = $region40
      $region39: #{tpu_custom_call.1} parent=5 // pred_region
        %s195 = ssub.s32 %s14, 1
        %p196 = scmp.lt.s32.totalorder %s19, 1
        %s197 = scalar_select %p196, %s19, 1
        %s198 = smul.addr %s197, 54
        %s199 = smul.addr %s198, 4
        %s200 = scalar_lea.vmem %s0, %s199
        %p201 = pneg %p40
        %p202 = pneg %p37
        %p203 = pneg %p61
        %p204 = pneg %p58
        %p205 = pneg %p82
        %p206 = pneg %p79
        %p207 = pneg %p103
        %p208 = pneg %p100
        %p209 = pneg %p124
        %p210 = pneg %p121
        %p211 = pneg %p150
        %p212 = pneg %p147
        %s213 = sand.u32 %s137, 1
        %s214 = scalar_lea.sflag [#allocation3], %s213
        %s215 = sand.u32 %s137, 1
        %s216 = smul.addr %s215, 128
        %s217 = scalar_lea.vmem [#allocation2], %s216
        %p218 = scmp.lt.s32.totalorder %s19, 1
        %s219 = scalar_select %p218, %s19, 1
        %s220 = smul.addr %s219, 54
        %s221 = smul.addr %s220, 4
        %s222 = scalar_lea.vmem %s0, %s221
        %v224 = vld [vmem:[%s222] sm:$0xf]
        %v225 = vld [vmem:[%s222 + $0x4] sm:$0xf]
        %v226 = vld [vmem:[%s222 + $0xc] sm:$0xf]
        %v227 = vld [vmem:[%s222 + $0x10] sm:$0xf]
        %v228 = vld [vmem:[%s222 + $0x18] sm:$0xf]
        %v229 = vld [vmem:[%s222 + $0x1c] sm:$0xf]
        %v230 = vld [vmem:[%s222 + $0x24] sm:$0xf]
        %v231 = vld [vmem:[%s222 + $0x28] sm:$0xf]
        %v232 = vld [vmem:[%s222 + $0x30] sm:$0xf]
        %v233 = vld [vmem:[%s222 + $0x34] sm:$0xf]
        %v234 = vld [vmem:[%s222 + $0x3c] sm:$0xf]
        %v235 = vld [vmem:[%s222 + $0x40] sm:$0xf]
        %v236 = vld [vmem:[%s222 + $0x48] sm:$0xf]
        %v237 = vld [vmem:[%s222 + $0x4c] sm:$0xf]
        %v238 = vld [vmem:[%s222 + $0x54] sm:$0xf]
        %v239 = vld [vmem:[%s222 + $0x58] sm:$0xf]
        %v240 = vld [vmem:[%s222 + $0x60] sm:$0xf]
        %v241 = vld [vmem:[%s222 + $0x64] sm:$0xf]
        %v242 = vld [vmem:[%s222 + $0x6c] sm:$0xf]
        %v243 = vld [vmem:[%s222 + $0x70] sm:$0xf]
        %v244 = vld [vmem:[%s222 + $0x78] sm:$0xf]
        %v245 = vld [vmem:[%s222 + $0x7c] sm:$0xf]
        %v246 = vld [vmem:[%s222 + $0x84] sm:$0xf]
        %v247 = vld [vmem:[%s222 + $0x88] sm:$0xf]
        %v248 = vld [vmem:[%s222 + $0x90] sm:$0xf]
        %v249 = vld [vmem:[%s222 + $0x94] sm:$0xf]
        %v250 = vld [vmem:[%s222 + $0x9c] sm:$0xf]
        %v251 = vld [vmem:[%s222 + $0xa0] sm:$0xf]
        %v252 = vld [vmem:[%s222 + $0xa8] sm:$0xf]
        %v253 = vld [vmem:[%s222 + $0xac] sm:$0xf]
        %v254 = vld [vmem:[%s222 + $0xb4] sm:$0xf]
        %v255 = vld [vmem:[%s222 + $0xb8] sm:$0xf]
        %v256 = vld [vmem:[%s222 + $0x8] sm:$0x1]
        %v257 = vld [vmem:[%s222 + $0x14] sm:$0x1]
        %v258 = vld [vmem:[%s222 + $0x20] sm:$0x1]
        %v259 = vld [vmem:[%s222 + $0x2c] sm:$0x1]
        %v260 = vld [vmem:[%s222 + $0x38] sm:$0x1]
        %v261 = vld [vmem:[%s222 + $0x44] sm:$0x1]
        %v262 = vld [vmem:[%s222 + $0x50] sm:$0x1]
        %v263 = vld [vmem:[%s222 + $0x5c] sm:$0x1]
        %v264 = vld [vmem:[%s222 + $0x68] sm:$0x1]
        %v265 = vld [vmem:[%s222 + $0x74] sm:$0x1]
        %v266 = vld [vmem:[%s222 + $0x80] sm:$0x1]
        %v267 = vld [vmem:[%s222 + $0x8c] sm:$0x1]
        %v268 = vld [vmem:[%s222 + $0x98] sm:$0x1]
        %v269 = vld [vmem:[%s222 + $0xa4] sm:$0x1]
        %v270 = vld [vmem:[%s222 + $0xb0] sm:$0x1]
        %v271 = vld [vmem:[%s222 + $0xbc] sm:$0x1]
        %vm272 = vsmask.f32 3328
        %vm273 = vsmask.f32 7440
        %vm274 = vmor %vm272, %vm273
        %v276 = vshrl.u32 %v224, 16
        %v278 = vrot.slane %v276, 4
        %v279 = vshll.u32 %v224, 16
        %v281 = vrot.slane %v279, 5
        %v282 = vor.u32 %v278, %v281
        %v283 = vrot.slane %v282, 4
        %v285 = vshll.u32 %v225, 16
        %v287 = vrot.slane %v285, 5
        %v288 = vsel %vm274, %v283, %v287
        %v289 = vshrl.u32 %v225, 16
        %v291 = vrot.slane %v289, 4
        %v292 = vor.u32 %v291, %v287
        %v293 = vrot.slane %v292, 4
        %v295 = vshll.u32 %v256, 16
        %v297 = vrot.slane %v295, 5
        %v298 = vsel %vm274, %v293, %v297
        %v300 = vshrl.u32 %v226, 16
        %v302 = vrot.slane %v300, 4
        %v303 = vshll.u32 %v226, 16
        %v305 = vrot.slane %v303, 5
        %v306 = vor.u32 %v302, %v305
        %v307 = vrot.slane %v306, 4
        %v309 = vshll.u32 %v227, 16
        %v311 = vrot.slane %v309, 5
        %v312 = vsel %vm274, %v307, %v311
        %v313 = vshrl.u32 %v227, 16
        %v315 = vrot.slane %v313, 4
        %v316 = vor.u32 %v315, %v311
        %v317 = vrot.slane %v316, 4
        %v319 = vshll.u32 %v257, 16
        %v321 = vrot.slane %v319, 5
        %v322 = vsel %vm274, %v317, %v321
        %v324 = vshrl.u32 %v228, 16
        %v326 = vrot.slane %v324, 4
        %v327 = vshll.u32 %v228, 16
        %v329 = vrot.slane %v327, 5
        %v330 = vor.u32 %v326, %v329
        %v331 = vrot.slane %v330, 4
        %v333 = vshll.u32 %v229, 16
        %v335 = vrot.slane %v333, 5
        %v336 = vsel %vm274, %v331, %v335
        %v337 = vshrl.u32 %v229, 16
        %v339 = vrot.slane %v337, 4
        %v340 = vor.u32 %v339, %v335
        %v341 = vrot.slane %v340, 4
        %v343 = vshll.u32 %v258, 16
        %v345 = vrot.slane %v343, 5
        %v346 = vsel %vm274, %v341, %v345
        %v348 = vshrl.u32 %v230, 16
        %v350 = vrot.slane %v348, 4
        %v351 = vshll.u32 %v230, 16
        %v353 = vrot.slane %v351, 5
        %v354 = vor.u32 %v350, %v353
        %v355 = vrot.slane %v354, 4
        %v357 = vshll.u32 %v231, 16
        %v359 = vrot.slane %v357, 5
        %v360 = vsel %vm274, %v355, %v359
        %v361 = vshrl.u32 %v231, 16
        %v363 = vrot.slane %v361, 4
        %v364 = vor.u32 %v363, %v359
        %v365 = vrot.slane %v364, 4
        %v367 = vshll.u32 %v259, 16
        %v369 = vrot.slane %v367, 5
        %v370 = vsel %vm274, %v365, %v369
        %v372 = vshrl.u32 %v232, 16
        %v374 = vrot.slane %v372, 4
        %v375 = vshll.u32 %v232, 16
        %v377 = vrot.slane %v375, 5
        %v378 = vor.u32 %v374, %v377
        %v379 = vrot.slane %v378, 4
        %v381 = vshll.u32 %v233, 16
        %v383 = vrot.slane %v381, 5
        %v384 = vsel %vm274, %v379, %v383
        %v385 = vshrl.u32 %v233, 16
        %v387 = vrot.slane %v385, 4
        %v388 = vor.u32 %v387, %v383
        %v389 = vrot.slane %v388, 4
        %v391 = vshll.u32 %v260, 16
        %v393 = vrot.slane %v391, 5
        %v394 = vsel %vm274, %v389, %v393
        %v396 = vshrl.u32 %v234, 16
        %v398 = vrot.slane %v396, 4
        %v399 = vshll.u32 %v234, 16
        %v401 = vrot.slane %v399, 5
        %v402 = vor.u32 %v398, %v401
        %v403 = vrot.slane %v402, 4
        %v405 = vshll.u32 %v235, 16
        %v407 = vrot.slane %v405, 5
        %v408 = vsel %vm274, %v403, %v407
        %v409 = vshrl.u32 %v235, 16
        %v411 = vrot.slane %v409, 4
        %v412 = vor.u32 %v411, %v407
        %v413 = vrot.slane %v412, 4
        %v415 = vshll.u32 %v261, 16
        %v417 = vrot.slane %v415, 5
        %v418 = vsel %vm274, %v413, %v417
        %v420 = vshrl.u32 %v236, 16
        %v422 = vrot.slane %v420, 4
        %v423 = vshll.u32 %v236, 16
        %v425 = vrot.slane %v423, 5
        %v426 = vor.u32 %v422, %v425
        %v427 = vrot.slane %v426, 4
        %v429 = vshll.u32 %v237, 16
        %v431 = vrot.slane %v429, 5
        %v432 = vsel %vm274, %v427, %v431
        %v433 = vshrl.u32 %v237, 16
        %v435 = vrot.slane %v433, 4
        %v436 = vor.u32 %v435, %v431
        %v437 = vrot.slane %v436, 4
        %v439 = vshll.u32 %v262, 16
        %v441 = vrot.slane %v439, 5
        %v442 = vsel %vm274, %v437, %v441
        %v444 = vshrl.u32 %v238, 16
        %v446 = vrot.slane %v444, 4
        %v447 = vshll.u32 %v238, 16
        %v449 = vrot.slane %v447, 5
        %v450 = vor.u32 %v446, %v449
        %v451 = vrot.slane %v450, 4
        %v453 = vshll.u32 %v239, 16
        %v455 = vrot.slane %v453, 5
        %v456 = vsel %vm274, %v451, %v455
        %v457 = vshrl.u32 %v239, 16
        %v459 = vrot.slane %v457, 4
        %v460 = vor.u32 %v459, %v455
        %v461 = vrot.slane %v460, 4
        %v463 = vshll.u32 %v263, 16
        %v465 = vrot.slane %v463, 5
        %v466 = vsel %vm274, %v461, %v465
        %v468 = vshrl.u32 %v240, 16
        %v470 = vrot.slane %v468, 4
        %v471 = vshll.u32 %v240, 16
        %v473 = vrot.slane %v471, 5
        %v474 = vor.u32 %v470, %v473
        %v475 = vrot.slane %v474, 4
        %v477 = vshll.u32 %v241, 16
        %v479 = vrot.slane %v477, 5
        %v480 = vsel %vm274, %v475, %v479
        %v481 = vshrl.u32 %v241, 16
        %v483 = vrot.slane %v481, 4
        %v484 = vor.u32 %v483, %v479
        %v485 = vrot.slane %v484, 4
        %v487 = vshll.u32 %v264, 16
        %v489 = vrot.slane %v487, 5
        %v490 = vsel %vm274, %v485, %v489
        %v492 = vshrl.u32 %v242, 16
        %v494 = vrot.slane %v492, 4
        %v495 = vshll.u32 %v242, 16
        %v497 = vrot.slane %v495, 5
        %v498 = vor.u32 %v494, %v497
        %v499 = vrot.slane %v498, 4
        %v501 = vshll.u32 %v243, 16
        %v503 = vrot.slane %v501, 5
        %v504 = vsel %vm274, %v499, %v503
        %v505 = vshrl.u32 %v243, 16
        %v507 = vrot.slane %v505, 4
        %v508 = vor.u32 %v507, %v503
        %v509 = vrot.slane %v508, 4
        %v511 = vshll.u32 %v265, 16
        %v513 = vrot.slane %v511, 5
        %v514 = vsel %vm274, %v509, %v513
        %v516 = vshrl.u32 %v244, 16
        %v518 = vrot.slane %v516, 4
        %v519 = vshll.u32 %v244, 16
        %v521 = vrot.slane %v519, 5
        %v522 = vor.u32 %v518, %v521
        %v523 = vrot.slane %v522, 4
        %v525 = vshll.u32 %v245, 16
        %v527 = vrot.slane %v525, 5
        %v528 = vsel %vm274, %v523, %v527
        %v529 = vshrl.u32 %v245, 16
        %v531 = vrot.slane %v529, 4
        %v532 = vor.u32 %v531, %v527
        %v533 = vrot.slane %v532, 4
        %v535 = vshll.u32 %v266, 16
        %v537 = vrot.slane %v535, 5
        %v538 = vsel %vm274, %v533, %v537
        %v540 = vshrl.u32 %v246, 16
        %v542 = vrot.slane %v540, 4
        %v543 = vshll.u32 %v246, 16
        %v545 = vrot.slane %v543, 5
        %v546 = vor.u32 %v542, %v545
        %v547 = vrot.slane %v546, 4
        %v549 = vshll.u32 %v247, 16
        %v551 = vrot.slane %v549, 5
        %v552 = vsel %vm274, %v547, %v551
        %v553 = vshrl.u32 %v247, 16
        %v555 = vrot.slane %v553, 4
        %v556 = vor.u32 %v555, %v551
        %v557 = vrot.slane %v556, 4
        %v559 = vshll.u32 %v267, 16
        %v561 = vrot.slane %v559, 5
        %v562 = vsel %vm274, %v557, %v561
        %v564 = vshrl.u32 %v248, 16
        %v566 = vrot.slane %v564, 4
        %v567 = vshll.u32 %v248, 16
        %v569 = vrot.slane %v567, 5
        %v570 = vor.u32 %v566, %v569
        %v571 = vrot.slane %v570, 4
        %v573 = vshll.u32 %v249, 16
        %v575 = vrot.slane %v573, 5
        %v576 = vsel %vm274, %v571, %v575
        %v577 = vshrl.u32 %v249, 16
        %v579 = vrot.slane %v577, 4
        %v580 = vor.u32 %v579, %v575
        %v581 = vrot.slane %v580, 4
        %v583 = vshll.u32 %v268, 16
        %v585 = vrot.slane %v583, 5
        %v586 = vsel %vm274, %v581, %v585
        %v588 = vshrl.u32 %v250, 16
        %v590 = vrot.slane %v588, 4
        %v591 = vshll.u32 %v250, 16
        %v593 = vrot.slane %v591, 5
        %v594 = vor.u32 %v590, %v593
        %v595 = vrot.slane %v594, 4
        %v597 = vshll.u32 %v251, 16
        %v599 = vrot.slane %v597, 5
        %v600 = vsel %vm274, %v595, %v599
        %v601 = vshrl.u32 %v251, 16
        %v603 = vrot.slane %v601, 4
        %v604 = vor.u32 %v603, %v599
        %v605 = vrot.slane %v604, 4
        %v607 = vshll.u32 %v269, 16
        %v609 = vrot.slane %v607, 5
        %v610 = vsel %vm274, %v605, %v609
        %v612 = vshrl.u32 %v252, 16
        %v614 = vrot.slane %v612, 4
        %v615 = vshll.u32 %v252, 16
        %v617 = vrot.slane %v615, 5
        %v618 = vor.u32 %v614, %v617
        %v619 = vrot.slane %v618, 4
        %v621 = vshll.u32 %v253, 16
        %v623 = vrot.slane %v621, 5
        %v624 = vsel %vm274, %v619, %v623
        %v625 = vshrl.u32 %v253, 16
        %v627 = vrot.slane %v625, 4
        %v628 = vor.u32 %v627, %v623
        %v629 = vrot.slane %v628, 4
        %v631 = vshll.u32 %v270, 16
        %v633 = vrot.slane %v631, 5
        %v634 = vsel %vm274, %v629, %v633
        %v636 = vshrl.u32 %v254, 16
        %v638 = vrot.slane %v636, 4
        %v639 = vshll.u32 %v254, 16
        %v641 = vrot.slane %v639, 5
        %v642 = vor.u32 %v638, %v641
        %v643 = vrot.slane %v642, 4
        %v645 = vshll.u32 %v255, 16
        %v647 = vrot.slane %v645, 5
        %v648 = vsel %vm274, %v643, %v647
        %v649 = vshrl.u32 %v255, 16
        %v651 = vrot.slane %v649, 4
        %v652 = vor.u32 %v651, %v647
        %v653 = vrot.slane %v652, 4
        %v655 = vshll.u32 %v271, 16
        %v657 = vrot.slane %v655, 5
        %v658 = vsel %vm274, %v653, %v657
        %v659 = vld [vmem:[%s222] sm:$0xe]
        %v660 = vld [vmem:[%s222 + $0xc] sm:$0xe]
        %v661 = vld [vmem:[%s222 + $0x18] sm:$0xe]
        %v662 = vld [vmem:[%s222 + $0x24] sm:$0xe]
        %v663 = vld [vmem:[%s222 + $0x30] sm:$0xe]
        %v664 = vld [vmem:[%s222 + $0x3c] sm:$0xe]
        %v665 = vld [vmem:[%s222 + $0x48] sm:$0xe]
        %v666 = vld [vmem:[%s222 + $0x54] sm:$0xe]
        %v667 = vld [vmem:[%s222 + $0x60] sm:$0xe]
        %v668 = vld [vmem:[%s222 + $0x6c] sm:$0xe]
        %v669 = vld [vmem:[%s222 + $0x78] sm:$0xe]
        %v670 = vld [vmem:[%s222 + $0x84] sm:$0xe]
        %v671 = vld [vmem:[%s222 + $0x90] sm:$0xe]
        %v672 = vld [vmem:[%s222 + $0x9c] sm:$0xe]
        %v673 = vld [vmem:[%s222 + $0xa8] sm:$0xe]
        %v674 = vld [vmem:[%s222 + $0xb4] sm:$0xe]
        %vm723 = vcmask 1042432
        %vm724 = vcmask 1046532
        %vm725 = vmor %vm723, %vm724
        %v726 = vrot.slane %v659, 5
        %v727 = vrot.slane %v726, 4
        %v728 = vrot.slane %v225, 5
        %v729 = vsel %vm725, %v727, %v728
        %v730 = vrot.slane %v728, 4
        %v731 = vrot.slane %v256, 5
        %v732 = vsel %vm725, %v730, %v731
        %v733 = vrot.slane %v660, 5
        %v734 = vrot.slane %v733, 4
        %v735 = vrot.slane %v227, 5
        %v736 = vsel %vm725, %v734, %v735
        %v737 = vrot.slane %v735, 4
        %v738 = vrot.slane %v257, 5
        %v739 = vsel %vm725, %v737, %v738
        %v740 = vrot.slane %v661, 5
        %v741 = vrot.slane %v740, 4
        %v742 = vrot.slane %v229, 5
        %v743 = vsel %vm725, %v741, %v742
        %v744 = vrot.slane %v742, 4
        %v745 = vrot.slane %v258, 5
        %v746 = vsel %vm725, %v744, %v745
        %v747 = vrot.slane %v662, 5
        %v748 = vrot.slane %v747, 4
        %v749 = vrot.slane %v231, 5
        %v750 = vsel %vm725, %v748, %v749
        %v751 = vrot.slane %v749, 4
        %v752 = vrot.slane %v259, 5
        %v753 = vsel %vm725, %v751, %v752
        %v754 = vrot.slane %v663, 5
        %v755 = vrot.slane %v754, 4
        %v756 = vrot.slane %v233, 5
        %v757 = vsel %vm725, %v755, %v756
        %v758 = vrot.slane %v756, 4
        %v759 = vrot.slane %v260, 5
        %v760 = vsel %vm725, %v758, %v759
        %v761 = vrot.slane %v664, 5
        %v762 = vrot.slane %v761, 4
        %v763 = vrot.slane %v235, 5
        %v764 = vsel %vm725, %v762, %v763
        %v765 = vrot.slane %v763, 4
        %v766 = vrot.slane %v261, 5
        %v767 = vsel %vm725, %v765, %v766
        %v768 = vrot.slane %v665, 5
        %v769 = vrot.slane %v768, 4
        %v770 = vrot.slane %v237, 5
        %v771 = vsel %vm725, %v769, %v770
        %v772 = vrot.slane %v770, 4
        %v773 = vrot.slane %v262, 5
        %v774 = vsel %vm725, %v772, %v773
        %v775 = vrot.slane %v666, 5
        %v776 = vrot.slane %v775, 4
        %v777 = vrot.slane %v239, 5
        %v778 = vsel %vm725, %v776, %v777
        %v779 = vrot.slane %v777, 4
        %v780 = vrot.slane %v263, 5
        %v781 = vsel %vm725, %v779, %v780
        %v782 = vrot.slane %v667, 5
        %v783 = vrot.slane %v782, 4
        %v784 = vrot.slane %v241, 5
        %v785 = vsel %vm725, %v783, %v784
        %v786 = vrot.slane %v784, 4
        %v787 = vrot.slane %v264, 5
        %v788 = vsel %vm725, %v786, %v787
        %v789 = vrot.slane %v668, 5
        %v790 = vrot.slane %v789, 4
        %v791 = vrot.slane %v243, 5
        %v792 = vsel %vm725, %v790, %v791
        %v793 = vrot.slane %v791, 4
        %v794 = vrot.slane %v265, 5
        %v795 = vsel %vm725, %v793, %v794
        %v796 = vrot.slane %v669, 5
        %v797 = vrot.slane %v796, 4
        %v798 = vrot.slane %v245, 5
        %v799 = vsel %vm725, %v797, %v798
        %v800 = vrot.slane %v798, 4
        %v801 = vrot.slane %v266, 5
        %v802 = vsel %vm725, %v800, %v801
        %v803 = vrot.slane %v670, 5
        %v804 = vrot.slane %v803, 4
        %v805 = vrot.slane %v247, 5
        %v806 = vsel %vm725, %v804, %v805
        %v807 = vrot.slane %v805, 4
        %v808 = vrot.slane %v267, 5
        %v809 = vsel %vm725, %v807, %v808
        %v810 = vrot.slane %v671, 5
        %v811 = vrot.slane %v810, 4
        %v812 = vrot.slane %v249, 5
        %v813 = vsel %vm725, %v811, %v812
        %v814 = vrot.slane %v812, 4
        %v815 = vrot.slane %v268, 5
        %v816 = vsel %vm725, %v814, %v815
        %v817 = vrot.slane %v672, 5
        %v818 = vrot.slane %v817, 4
        %v819 = vrot.slane %v251, 5
        %v820 = vsel %vm725, %v818, %v819
        %v821 = vrot.slane %v819, 4
        %v822 = vrot.slane %v269, 5
        %v823 = vsel %vm725, %v821, %v822
        %v824 = vrot.slane %v673, 5
        %v825 = vrot.slane %v824, 4
        %v826 = vrot.slane %v253, 5
        %v827 = vsel %vm725, %v825, %v826
        %v828 = vrot.slane %v826, 4
        %v829 = vrot.slane %v270, 5
        %v830 = vsel %vm725, %v828, %v829
        %v831 = vrot.slane %v674, 5
        %v832 = vrot.slane %v831, 4
        %v833 = vrot.slane %v255, 5
        %v834 = vsel %vm725, %v832, %v833
        %v835 = vrot.slane %v833, 4
        %v836 = vrot.slane %v271, 5
        %v837 = vsel %vm725, %v835, %v836
        %s838 = scalar_lea.vmem %s222, 12
        %v839 = vld [vmem:[%s838] sm:$0xf]
        %v840 = vld [vmem:[%s838 + $0x4] sm:$0xf]
        %v841 = vld [vmem:[%s838 + $0xc] sm:$0xf]
        %v842 = vld [vmem:[%s838 + $0x10] sm:$0xf]
        %v843 = vld [vmem:[%s838 + $0x18] sm:$0xf]
        %v844 = vld [vmem:[%s838 + $0x1c] sm:$0xf]
        %v845 = vld [vmem:[%s838 + $0x24] sm:$0xf]
        %v846 = vld [vmem:[%s838 + $0x28] sm:$0xf]
        %v847 = vld [vmem:[%s838 + $0x30] sm:$0xf]
        %v848 = vld [vmem:[%s838 + $0x34] sm:$0xf]
        %v849 = vld [vmem:[%s838 + $0x3c] sm:$0xf]
        %v850 = vld [vmem:[%s838 + $0x40] sm:$0xf]
        %v851 = vld [vmem:[%s838 + $0x48] sm:$0xf]
        %v852 = vld [vmem:[%s838 + $0x4c] sm:$0xf]
        %v853 = vld [vmem:[%s838 + $0x54] sm:$0xf]
        %v854 = vld [vmem:[%s838 + $0x58] sm:$0xf]
        %v855 = vld [vmem:[%s838 + $0x60] sm:$0xf]
        %v856 = vld [vmem:[%s838 + $0x64] sm:$0xf]
        %v857 = vld [vmem:[%s838 + $0x6c] sm:$0xf]
        %v858 = vld [vmem:[%s838 + $0x70] sm:$0xf]
        %v859 = vld [vmem:[%s838 + $0x78] sm:$0xf]
        %v860 = vld [vmem:[%s838 + $0x7c] sm:$0xf]
        %v861 = vld [vmem:[%s838 + $0x84] sm:$0xf]
        %v862 = vld [vmem:[%s838 + $0x88] sm:$0xf]
        %v863 = vld [vmem:[%s838 + $0x90] sm:$0xf]
        %v864 = vld [vmem:[%s838 + $0x94] sm:$0xf]
        %v865 = vld [vmem:[%s838 + $0x9c] sm:$0xf]
        %v866 = vld [vmem:[%s838 + $0xa0] sm:$0xf]
        %v867 = vld [vmem:[%s838 + $0xa8] sm:$0xf]
        %v868 = vld [vmem:[%s838 + $0xac] sm:$0xf]
        %v869 = vld [vmem:[%s838 + $0xb4] sm:$0xf]
        %v870 = vld [vmem:[%s838 + $0xb8] sm:$0xf]
        %v871 = vld [vmem:[%s838 + $0x8] sm:$0x1]
        %v872 = vld [vmem:[%s838 + $0x14] sm:$0x1]
        %v873 = vld [vmem:[%s838 + $0x20] sm:$0x1]
        %v874 = vld [vmem:[%s838 + $0x2c] sm:$0x1]
        %v875 = vld [vmem:[%s838 + $0x38] sm:$0x1]
        %v876 = vld [vmem:[%s838 + $0x44] sm:$0x1]
        %v877 = vld [vmem:[%s838 + $0x50] sm:$0x1]
        %v878 = vld [vmem:[%s838 + $0x5c] sm:$0x1]
        %v879 = vld [vmem:[%s838 + $0x68] sm:$0x1]
        %v880 = vld [vmem:[%s838 + $0x74] sm:$0x1]
        %v881 = vld [vmem:[%s838 + $0x80] sm:$0x1]
        %v882 = vld [vmem:[%s838 + $0x8c] sm:$0x1]
        %v883 = vld [vmem:[%s838 + $0x98] sm:$0x1]
        %v884 = vld [vmem:[%s838 + $0xa4] sm:$0x1]
        %v885 = vld [vmem:[%s838 + $0xb0] sm:$0x1]
        %v886 = vld [vmem:[%s838 + $0xbc] sm:$0x1]
        %v888 = vshrl.u32 %v839, 16
        %v890 = vrot.slane %v888, 4
        %v891 = vshll.u32 %v839, 16
        %v893 = vrot.slane %v891, 5
        %v894 = vor.u32 %v890, %v893
        %v895 = vrot.slane %v894, 4
        %v897 = vshll.u32 %v840, 16
        %v899 = vrot.slane %v897, 5
        %v900 = vsel %vm274, %v895, %v899
        %v901 = vshrl.u32 %v840, 16
        %v903 = vrot.slane %v901, 4
        %v904 = vor.u32 %v903, %v899
        %v905 = vrot.slane %v904, 4
        %v907 = vshll.u32 %v871, 16
        %v909 = vrot.slane %v907, 5
        %v910 = vsel %vm274, %v905, %v909
        %v912 = vshrl.u32 %v841, 16
        %v914 = vrot.slane %v912, 4
        %v915 = vshll.u32 %v841, 16
        %v917 = vrot.slane %v915, 5
        %v918 = vor.u32 %v914, %v917
        %v919 = vrot.slane %v918, 4
        %v921 = vshll.u32 %v842, 16
        %v923 = vrot.slane %v921, 5
        %v924 = vsel %vm274, %v919, %v923
        %v925 = vshrl.u32 %v842, 16
        %v927 = vrot.slane %v925, 4
        %v928 = vor.u32 %v927, %v923
        %v929 = vrot.slane %v928, 4
        %v931 = vshll.u32 %v872, 16
        %v933 = vrot.slane %v931, 5
        %v934 = vsel %vm274, %v929, %v933
        %v936 = vshrl.u32 %v843, 16
        %v938 = vrot.slane %v936, 4
        %v939 = vshll.u32 %v843, 16
        %v941 = vrot.slane %v939, 5
        %v942 = vor.u32 %v938, %v941
        %v943 = vrot.slane %v942, 4
        %v945 = vshll.u32 %v844, 16
        %v947 = vrot.slane %v945, 5
        %v948 = vsel %vm274, %v943, %v947
        %v949 = vshrl.u32 %v844, 16
        %v951 = vrot.slane %v949, 4
        %v952 = vor.u32 %v951, %v947
        %v953 = vrot.slane %v952, 4
        %v955 = vshll.u32 %v873, 16
        %v957 = vrot.slane %v955, 5
        %v958 = vsel %vm274, %v953, %v957
        %v960 = vshrl.u32 %v845, 16
        %v962 = vrot.slane %v960, 4
        %v963 = vshll.u32 %v845, 16
        %v965 = vrot.slane %v963, 5
        %v966 = vor.u32 %v962, %v965
        %v967 = vrot.slane %v966, 4
        %v969 = vshll.u32 %v846, 16
        %v971 = vrot.slane %v969, 5
        %v972 = vsel %vm274, %v967, %v971
        %v973 = vshrl.u32 %v846, 16
        %v975 = vrot.slane %v973, 4
        %v976 = vor.u32 %v975, %v971
        %v977 = vrot.slane %v976, 4
        %v979 = vshll.u32 %v874, 16
        %v981 = vrot.slane %v979, 5
        %v982 = vsel %vm274, %v977, %v981
        %v984 = vshrl.u32 %v847, 16
        %v986 = vrot.slane %v984, 4
        %v987 = vshll.u32 %v847, 16
        %v989 = vrot.slane %v987, 5
        %v990 = vor.u32 %v986, %v989
        %v991 = vrot.slane %v990, 4
        %v993 = vshll.u32 %v848, 16
        %v995 = vrot.slane %v993, 5
        %v996 = vsel %vm274, %v991, %v995
        %v997 = vshrl.u32 %v848, 16
        %v999 = vrot.slane %v997, 4
        %v1000 = vor.u32 %v999, %v995
        %v1001 = vrot.slane %v1000, 4
        %v1003 = vshll.u32 %v875, 16
        %v1005 = vrot.slane %v1003, 5
        %v1006 = vsel %vm274, %v1001, %v1005
        %v1008 = vshrl.u32 %v849, 16
        %v1010 = vrot.slane %v1008, 4
        %v1011 = vshll.u32 %v849, 16
        %v1013 = vrot.slane %v1011, 5
        %v1014 = vor.u32 %v1010, %v1013
        %v1015 = vrot.slane %v1014, 4
        %v1017 = vshll.u32 %v850, 16
        %v1019 = vrot.slane %v1017, 5
        %v1020 = vsel %vm274, %v1015, %v1019
        %v1021 = vshrl.u32 %v850, 16
        %v1023 = vrot.slane %v1021, 4
        %v1024 = vor.u32 %v1023, %v1019
        %v1025 = vrot.slane %v1024, 4
        %v1027 = vshll.u32 %v876, 16
        %v1029 = vrot.slane %v1027, 5
        %v1030 = vsel %vm274, %v1025, %v1029
        %v1032 = vshrl.u32 %v851, 16
        %v1034 = vrot.slane %v1032, 4
        %v1035 = vshll.u32 %v851, 16
        %v1037 = vrot.slane %v1035, 5
        %v1038 = vor.u32 %v1034, %v1037
        %v1039 = vrot.slane %v1038, 4
        %v1041 = vshll.u32 %v852, 16
        %v1043 = vrot.slane %v1041, 5
        %v1044 = vsel %vm274, %v1039, %v1043
        %v1045 = vshrl.u32 %v852, 16
        %v1047 = vrot.slane %v1045, 4
        %v1048 = vor.u32 %v1047, %v1043
        %v1049 = vrot.slane %v1048, 4
        %v1051 = vshll.u32 %v877, 16
        %v1053 = vrot.slane %v1051, 5
        %v1054 = vsel %vm274, %v1049, %v1053
        %v1056 = vshrl.u32 %v853, 16
        %v1058 = vrot.slane %v1056, 4
        %v1059 = vshll.u32 %v853, 16
        %v1061 = vrot.slane %v1059, 5
        %v1062 = vor.u32 %v1058, %v1061
        %v1063 = vrot.slane %v1062, 4
        %v1065 = vshll.u32 %v854, 16
        %v1067 = vrot.slane %v1065, 5
        %v1068 = vsel %vm274, %v1063, %v1067
        %v1069 = vshrl.u32 %v854, 16
        %v1071 = vrot.slane %v1069, 4
        %v1072 = vor.u32 %v1071, %v1067
        %v1073 = vrot.slane %v1072, 4
        %v1075 = vshll.u32 %v878, 16
        %v1077 = vrot.slane %v1075, 5
        %v1078 = vsel %vm274, %v1073, %v1077
        %v1080 = vshrl.u32 %v855, 16
        %v1082 = vrot.slane %v1080, 4
        %v1083 = vshll.u32 %v855, 16
        %v1085 = vrot.slane %v1083, 5
        %v1086 = vor.u32 %v1082, %v1085
        %v1087 = vrot.slane %v1086, 4
        %v1089 = vshll.u32 %v856, 16
        %v1091 = vrot.slane %v1089, 5
        %v1092 = vsel %vm274, %v1087, %v1091
        %v1093 = vshrl.u32 %v856, 16
        %v1095 = vrot.slane %v1093, 4
        %v1096 = vor.u32 %v1095, %v1091
        %v1097 = vrot.slane %v1096, 4
        %v1099 = vshll.u32 %v879, 16
        %v1101 = vrot.slane %v1099, 5
        %v1102 = vsel %vm274, %v1097, %v1101
        %v1104 = vshrl.u32 %v857, 16
        %v1106 = vrot.slane %v1104, 4
        %v1107 = vshll.u32 %v857, 16
        %v1109 = vrot.slane %v1107, 5
        %v1110 = vor.u32 %v1106, %v1109
        %v1111 = vrot.slane %v1110, 4
        %v1113 = vshll.u32 %v858, 16
        %v1115 = vrot.slane %v1113, 5
        %v1116 = vsel %vm274, %v1111, %v1115
        %v1117 = vshrl.u32 %v858, 16
        %v1119 = vrot.slane %v1117, 4
        %v1120 = vor.u32 %v1119, %v1115
        %v1121 = vrot.slane %v1120, 4
        %v1123 = vshll.u32 %v880, 16
        %v1125 = vrot.slane %v1123, 5
        %v1126 = vsel %vm274, %v1121, %v1125
        %v1128 = vshrl.u32 %v859, 16
        %v1130 = vrot.slane %v1128, 4
        %v1131 = vshll.u32 %v859, 16
        %v1133 = vrot.slane %v1131, 5
        %v1134 = vor.u32 %v1130, %v1133
        %v1135 = vrot.slane %v1134, 4
        %v1137 = vshll.u32 %v860, 16
        %v1139 = vrot.slane %v1137, 5
        %v1140 = vsel %vm274, %v1135, %v1139
        %v1141 = vshrl.u32 %v860, 16
        %v1143 = vrot.slane %v1141, 4
        %v1144 = vor.u32 %v1143, %v1139
        %v1145 = vrot.slane %v1144, 4
        %v1147 = vshll.u32 %v881, 16
        %v1149 = vrot.slane %v1147, 5
        %v1150 = vsel %vm274, %v1145, %v1149
        %v1152 = vshrl.u32 %v861, 16
        %v1154 = vrot.slane %v1152, 4
        %v1155 = vshll.u32 %v861, 16
        %v1157 = vrot.slane %v1155, 5
        %v1158 = vor.u32 %v1154, %v1157
        %v1159 = vrot.slane %v1158, 4
        %v1161 = vshll.u32 %v862, 16
        %v1163 = vrot.slane %v1161, 5
        %v1164 = vsel %vm274, %v1159, %v1163
        %v1165 = vshrl.u32 %v862, 16
        %v1167 = vrot.slane %v1165, 4
        %v1168 = vor.u32 %v1167, %v1163
        %v1169 = vrot.slane %v1168, 4
        %v1171 = vshll.u32 %v882, 16
        %v1173 = vrot.slane %v1171, 5
        %v1174 = vsel %vm274, %v1169, %v1173
        %v1176 = vshrl.u32 %v863, 16
        %v1178 = vrot.slane %v1176, 4
        %v1179 = vshll.u32 %v863, 16
        %v1181 = vrot.slane %v1179, 5
        %v1182 = vor.u32 %v1178, %v1181
        %v1183 = vrot.slane %v1182, 4
        %v1185 = vshll.u32 %v864, 16
        %v1187 = vrot.slane %v1185, 5
        %v1188 = vsel %vm274, %v1183, %v1187
        %v1189 = vshrl.u32 %v864, 16
        %v1191 = vrot.slane %v1189, 4
        %v1192 = vor.u32 %v1191, %v1187
        %v1193 = vrot.slane %v1192, 4
        %v1195 = vshll.u32 %v883, 16
        %v1197 = vrot.slane %v1195, 5
        %v1198 = vsel %vm274, %v1193, %v1197
        %v1200 = vshrl.u32 %v865, 16
        %v1202 = vrot.slane %v1200, 4
        %v1203 = vshll.u32 %v865, 16
        %v1205 = vrot.slane %v1203, 5
        %v1206 = vor.u32 %v1202, %v1205
        %v1207 = vrot.slane %v1206, 4
        %v1209 = vshll.u32 %v866, 16
        %v1211 = vrot.slane %v1209, 5
        %v1212 = vsel %vm274, %v1207, %v1211
        %v1213 = vshrl.u32 %v866, 16
        %v1215 = vrot.slane %v1213, 4
        %v1216 = vor.u32 %v1215, %v1211
        %v1217 = vrot.slane %v1216, 4
        %v1219 = vshll.u32 %v884, 16
        %v1221 = vrot.slane %v1219, 5
        %v1222 = vsel %vm274, %v1217, %v1221
        %v1224 = vshrl.u32 %v867, 16
        %v1226 = vrot.slane %v1224, 4
        %v1227 = vshll.u32 %v867, 16
        %v1229 = vrot.slane %v1227, 5
        %v1230 = vor.u32 %v1226, %v1229
        %v1231 = vrot.slane %v1230, 4
        %v1233 = vshll.u32 %v868, 16
        %v1235 = vrot.slane %v1233, 5
        %v1236 = vsel %vm274, %v1231, %v1235
        %v1237 = vshrl.u32 %v868, 16
        %v1239 = vrot.slane %v1237, 4
        %v1240 = vor.u32 %v1239, %v1235
        %v1241 = vrot.slane %v1240, 4
        %v1243 = vshll.u32 %v885, 16
        %v1245 = vrot.slane %v1243, 5
        %v1246 = vsel %vm274, %v1241, %v1245
        %v1248 = vshrl.u32 %v869, 16
        %v1250 = vrot.slane %v1248, 4
        %v1251 = vshll.u32 %v869, 16
        %v1253 = vrot.slane %v1251, 5
        %v1254 = vor.u32 %v1250, %v1253
        %v1255 = vrot.slane %v1254, 4
        %v1257 = vshll.u32 %v870, 16
        %v1259 = vrot.slane %v1257, 5
        %v1260 = vsel %vm274, %v1255, %v1259
        %v1261 = vshrl.u32 %v870, 16
        %v1263 = vrot.slane %v1261, 4
        %v1264 = vor.u32 %v1263, %v1259
        %v1265 = vrot.slane %v1264, 4
        %v1267 = vshll.u32 %v886, 16
        %v1269 = vrot.slane %v1267, 5
        %v1270 = vsel %vm274, %v1265, %v1269
        %v1271 = vld [vmem:[%s838] sm:$0xe]
        %v1272 = vld [vmem:[%s838 + $0xc] sm:$0xe]
        %v1273 = vld [vmem:[%s838 + $0x18] sm:$0xe]
        %v1274 = vld [vmem:[%s838 + $0x24] sm:$0xe]
        %v1275 = vld [vmem:[%s838 + $0x30] sm:$0xe]
        %v1276 = vld [vmem:[%s838 + $0x3c] sm:$0xe]
        %v1277 = vld [vmem:[%s838 + $0x48] sm:$0xe]
        %v1278 = vld [vmem:[%s838 + $0x54] sm:$0xe]
        %v1279 = vld [vmem:[%s838 + $0x60] sm:$0xe]
        %v1280 = vld [vmem:[%s838 + $0x6c] sm:$0xe]
        %v1281 = vld [vmem:[%s838 + $0x78] sm:$0xe]
        %v1282 = vld [vmem:[%s838 + $0x84] sm:$0xe]
        %v1283 = vld [vmem:[%s838 + $0x90] sm:$0xe]
        %v1284 = vld [vmem:[%s838 + $0x9c] sm:$0xe]
        %v1285 = vld [vmem:[%s838 + $0xa8] sm:$0xe]
        %v1286 = vld [vmem:[%s838 + $0xb4] sm:$0xe]
        %v1335 = vrot.slane %v1271, 5
        %v1336 = vrot.slane %v1335, 4
        %v1337 = vrot.slane %v840, 5
        %v1338 = vsel %vm725, %v1336, %v1337
        %v1339 = vrot.slane %v1337, 4
        %v1340 = vrot.slane %v871, 5
        %v1341 = vsel %vm725, %v1339, %v1340
        %v1342 = vrot.slane %v1272, 5
        %v1343 = vrot.slane %v1342, 4
        %v1344 = vrot.slane %v842, 5
        %v1345 = vsel %vm725, %v1343, %v1344
        %v1346 = vrot.slane %v1344, 4
        %v1347 = vrot.slane %v872, 5
        %v1348 = vsel %vm725, %v1346, %v1347
        %v1349 = vrot.slane %v1273, 5
        %v1350 = vrot.slane %v1349, 4
        %v1351 = vrot.slane %v844, 5
        %v1352 = vsel %vm725, %v1350, %v1351
        %v1353 = vrot.slane %v1351, 4
        %v1354 = vrot.slane %v873, 5
        %v1355 = vsel %vm725, %v1353, %v1354
        %v1356 = vrot.slane %v1274, 5
        %v1357 = vrot.slane %v1356, 4
        %v1358 = vrot.slane %v846, 5
        %v1359 = vsel %vm725, %v1357, %v1358
        %v1360 = vrot.slane %v1358, 4
        %v1361 = vrot.slane %v874, 5
        %v1362 = vsel %vm725, %v1360, %v1361
        %v1363 = vrot.slane %v1275, 5
        %v1364 = vrot.slane %v1363, 4
        %v1365 = vrot.slane %v848, 5
        %v1366 = vsel %vm725, %v1364, %v1365
        %v1367 = vrot.slane %v1365, 4
        %v1368 = vrot.slane %v875, 5
        %v1369 = vsel %vm725, %v1367, %v1368
        %v1370 = vrot.slane %v1276, 5
        %v1371 = vrot.slane %v1370, 4
        %v1372 = vrot.slane %v850, 5
        %v1373 = vsel %vm725, %v1371, %v1372
        %v1374 = vrot.slane %v1372, 4
        %v1375 = vrot.slane %v876, 5
        %v1376 = vsel %vm725, %v1374, %v1375
        %v1377 = vrot.slane %v1277, 5
        %v1378 = vrot.slane %v1377, 4
        %v1379 = vrot.slane %v852, 5
        %v1380 = vsel %vm725, %v1378, %v1379
        %v1381 = vrot.slane %v1379, 4
        %v1382 = vrot.slane %v877, 5
        %v1383 = vsel %vm725, %v1381, %v1382
        %v1384 = vrot.slane %v1278, 5
        %v1385 = vrot.slane %v1384, 4
        %v1386 = vrot.slane %v854, 5
        %v1387 = vsel %vm725, %v1385, %v1386
        %v1388 = vrot.slane %v1386, 4
        %v1389 = vrot.slane %v878, 5
        %v1390 = vsel %vm725, %v1388, %v1389
        %v1391 = vrot.slane %v1279, 5
        %v1392 = vrot.slane %v1391, 4
        %v1393 = vrot.slane %v856, 5
        %v1394 = vsel %vm725, %v1392, %v1393
        %v1395 = vrot.slane %v1393, 4
        %v1396 = vrot.slane %v879, 5
        %v1397 = vsel %vm725, %v1395, %v1396
        %v1398 = vrot.slane %v1280, 5
        %v1399 = vrot.slane %v1398, 4
        %v1400 = vrot.slane %v858, 5
        %v1401 = vsel %vm725, %v1399, %v1400
        %v1402 = vrot.slane %v1400, 4
        %v1403 = vrot.slane %v880, 5
        %v1404 = vsel %vm725, %v1402, %v1403
        %v1405 = vrot.slane %v1281, 5
        %v1406 = vrot.slane %v1405, 4
        %v1407 = vrot.slane %v860, 5
        %v1408 = vsel %vm725, %v1406, %v1407
        %v1409 = vrot.slane %v1407, 4
        %v1410 = vrot.slane %v881, 5
        %v1411 = vsel %vm725, %v1409, %v1410
        %v1412 = vrot.slane %v1282, 5
        %v1413 = vrot.slane %v1412, 4
        %v1414 = vrot.slane %v862, 5
        %v1415 = vsel %vm725, %v1413, %v1414
        %v1416 = vrot.slane %v1414, 4
        %v1417 = vrot.slane %v882, 5
        %v1418 = vsel %vm725, %v1416, %v1417
        %v1419 = vrot.slane %v1283, 5
        %v1420 = vrot.slane %v1419, 4
        %v1421 = vrot.slane %v864, 5
        %v1422 = vsel %vm725, %v1420, %v1421
        %v1423 = vrot.slane %v1421, 4
        %v1424 = vrot.slane %v883, 5
        %v1425 = vsel %vm725, %v1423, %v1424
        %v1426 = vrot.slane %v1284, 5
        %v1427 = vrot.slane %v1426, 4
        %v1428 = vrot.slane %v866, 5
        %v1429 = vsel %vm725, %v1427, %v1428
        %v1430 = vrot.slane %v1428, 4
        %v1431 = vrot.slane %v884, 5
        %v1432 = vsel %vm725, %v1430, %v1431
        %v1433 = vrot.slane %v1285, 5
        %v1434 = vrot.slane %v1433, 4
        %v1435 = vrot.slane %v868, 5
        %v1436 = vsel %vm725, %v1434, %v1435
        %v1437 = vrot.slane %v1435, 4
        %v1438 = vrot.slane %v885, 5
        %v1439 = vsel %vm725, %v1437, %v1438
        %v1440 = vrot.slane %v1286, 5
        %v1441 = vrot.slane %v1440, 4
        %v1442 = vrot.slane %v870, 5
        %v1443 = vsel %vm725, %v1441, %v1442
        %v1444 = vrot.slane %v1442, 4
        %v1445 = vrot.slane %v886, 5
        %v1446 = vsel %vm725, %v1444, %v1445
        %s1447 = scalar_lea.vmem %s222, 24
        %v1448 = vld [vmem:[%s1447] sm:$0xf]
        %v1449 = vld [vmem:[%s1447 + $0x4] sm:$0xf]
        %v1450 = vld [vmem:[%s1447 + $0xc] sm:$0xf]
        %v1451 = vld [vmem:[%s1447 + $0x10] sm:$0xf]
        %v1452 = vld [vmem:[%s1447 + $0x18] sm:$0xf]
        %v1453 = vld [vmem:[%s1447 + $0x1c] sm:$0xf]
        %v1454 = vld [vmem:[%s1447 + $0x24] sm:$0xf]
        %v1455 = vld [vmem:[%s1447 + $0x28] sm:$0xf]
        %v1456 = vld [vmem:[%s1447 + $0x30] sm:$0xf]
        %v1457 = vld [vmem:[%s1447 + $0x34] sm:$0xf]
        %v1458 = vld [vmem:[%s1447 + $0x3c] sm:$0xf]
        %v1459 = vld [vmem:[%s1447 + $0x40] sm:$0xf]
        %v1460 = vld [vmem:[%s1447 + $0x48] sm:$0xf]
        %v1461 = vld [vmem:[%s1447 + $0x4c] sm:$0xf]
        %v1462 = vld [vmem:[%s1447 + $0x54] sm:$0xf]
        %v1463 = vld [vmem:[%s1447 + $0x58] sm:$0xf]
        %v1464 = vld [vmem:[%s1447 + $0x60] sm:$0xf]
        %v1465 = vld [vmem:[%s1447 + $0x64] sm:$0xf]
        %v1466 = vld [vmem:[%s1447 + $0x6c] sm:$0xf]
        %v1467 = vld [vmem:[%s1447 + $0x70] sm:$0xf]
        %v1468 = vld [vmem:[%s1447 + $0x78] sm:$0xf]
        %v1469 = vld [vmem:[%s1447 + $0x7c] sm:$0xf]
        %v1470 = vld [vmem:[%s1447 + $0x84] sm:$0xf]
        %v1471 = vld [vmem:[%s1447 + $0x88] sm:$0xf]
        %v1472 = vld [vmem:[%s1447 + $0x90] sm:$0xf]
        %v1473 = vld [vmem:[%s1447 + $0x94] sm:$0xf]
        %v1474 = vld [vmem:[%s1447 + $0x9c] sm:$0xf]
        %v1475 = vld [vmem:[%s1447 + $0xa0] sm:$0xf]
        %v1476 = vld [vmem:[%s1447 + $0xa8] sm:$0xf]
        %v1477 = vld [vmem:[%s1447 + $0xac] sm:$0xf]
        %v1478 = vld [vmem:[%s1447 + $0xb4] sm:$0xf]
        %v1479 = vld [vmem:[%s1447 + $0xb8] sm:$0xf]
        %v1480 = vld [vmem:[%s1447 + $0x8] sm:$0x1]
        %v1481 = vld [vmem:[%s1447 + $0x14] sm:$0x1]
        %v1482 = vld [vmem:[%s1447 + $0x20] sm:$0x1]
        %v1483 = vld [vmem:[%s1447 + $0x2c] sm:$0x1]
        %v1484 = vld [vmem:[%s1447 + $0x38] sm:$0x1]
        %v1485 = vld [vmem:[%s1447 + $0x44] sm:$0x1]
        %v1486 = vld [vmem:[%s1447 + $0x50] sm:$0x1]
        %v1487 = vld [vmem:[%s1447 + $0x5c] sm:$0x1]
        %v1488 = vld [vmem:[%s1447 + $0x68] sm:$0x1]
        %v1489 = vld [vmem:[%s1447 + $0x74] sm:$0x1]
        %v1490 = vld [vmem:[%s1447 + $0x80] sm:$0x1]
        %v1491 = vld [vmem:[%s1447 + $0x8c] sm:$0x1]
        %v1492 = vld [vmem:[%s1447 + $0x98] sm:$0x1]
        %v1493 = vld [vmem:[%s1447 + $0xa4] sm:$0x1]
        %v1494 = vld [vmem:[%s1447 + $0xb0] sm:$0x1]
        %v1495 = vld [vmem:[%s1447 + $0xbc] sm:$0x1]
        %v1497 = vshrl.u32 %v1448, 16
        %v1499 = vrot.slane %v1497, 4
        %v1500 = vshll.u32 %v1448, 16
        %v1502 = vrot.slane %v1500, 5
        %v1503 = vor.u32 %v1499, %v1502
        %v1504 = vrot.slane %v1503, 4
        %v1506 = vshll.u32 %v1449, 16
        %v1508 = vrot.slane %v1506, 5
        %v1509 = vsel %vm274, %v1504, %v1508
        %v1510 = vshrl.u32 %v1449, 16
        %v1512 = vrot.slane %v1510, 4
        %v1513 = vor.u32 %v1512, %v1508
        %v1514 = vrot.slane %v1513, 4
        %v1516 = vshll.u32 %v1480, 16
        %v1518 = vrot.slane %v1516, 5
        %v1519 = vsel %vm274, %v1514, %v1518
        %v1521 = vshrl.u32 %v1450, 16
        %v1523 = vrot.slane %v1521, 4
        %v1524 = vshll.u32 %v1450, 16
        %v1526 = vrot.slane %v1524, 5
        %v1527 = vor.u32 %v1523, %v1526
        %v1528 = vrot.slane %v1527, 4
        %v1530 = vshll.u32 %v1451, 16
        %v1532 = vrot.slane %v1530, 5
        %v1533 = vsel %vm274, %v1528, %v1532
        %v1534 = vshrl.u32 %v1451, 16
        %v1536 = vrot.slane %v1534, 4
        %v1537 = vor.u32 %v1536, %v1532
        %v1538 = vrot.slane %v1537, 4
        %v1540 = vshll.u32 %v1481, 16
        %v1542 = vrot.slane %v1540, 5
        %v1543 = vsel %vm274, %v1538, %v1542
        %v1545 = vshrl.u32 %v1452, 16
        %v1547 = vrot.slane %v1545, 4
        %v1548 = vshll.u32 %v1452, 16
        %v1550 = vrot.slane %v1548, 5
        %v1551 = vor.u32 %v1547, %v1550
        %v1552 = vrot.slane %v1551, 4
        %v1554 = vshll.u32 %v1453, 16
        %v1556 = vrot.slane %v1554, 5
        %v1557 = vsel %vm274, %v1552, %v1556
        %v1558 = vshrl.u32 %v1453, 16
        %v1560 = vrot.slane %v1558, 4
        %v1561 = vor.u32 %v1560, %v1556
        %v1562 = vrot.slane %v1561, 4
        %v1564 = vshll.u32 %v1482, 16
        %v1566 = vrot.slane %v1564, 5
        %v1567 = vsel %vm274, %v1562, %v1566
        %v1569 = vshrl.u32 %v1454, 16
        %v1571 = vrot.slane %v1569, 4
        %v1572 = vshll.u32 %v1454, 16
        %v1574 = vrot.slane %v1572, 5
        %v1575 = vor.u32 %v1571, %v1574
        %v1576 = vrot.slane %v1575, 4
        %v1578 = vshll.u32 %v1455, 16
        %v1580 = vrot.slane %v1578, 5
        %v1581 = vsel %vm274, %v1576, %v1580
        %v1582 = vshrl.u32 %v1455, 16
        %v1584 = vrot.slane %v1582, 4
        %v1585 = vor.u32 %v1584, %v1580
        %v1586 = vrot.slane %v1585, 4
        %v1588 = vshll.u32 %v1483, 16
        %v1590 = vrot.slane %v1588, 5
        %v1591 = vsel %vm274, %v1586, %v1590
        %v1593 = vshrl.u32 %v1456, 16
        %v1595 = vrot.slane %v1593, 4
        %v1596 = vshll.u32 %v1456, 16
        %v1598 = vrot.slane %v1596, 5
        %v1599 = vor.u32 %v1595, %v1598
        %v1600 = vrot.slane %v1599, 4
        %v1602 = vshll.u32 %v1457, 16
        %v1604 = vrot.slane %v1602, 5
        %v1605 = vsel %vm274, %v1600, %v1604
        %v1606 = vshrl.u32 %v1457, 16
        %v1608 = vrot.slane %v1606, 4
        %v1609 = vor.u32 %v1608, %v1604
        %v1610 = vrot.slane %v1609, 4
        %v1612 = vshll.u32 %v1484, 16
        %v1614 = vrot.slane %v1612, 5
        %v1615 = vsel %vm274, %v1610, %v1614
        %v1617 = vshrl.u32 %v1458, 16
        %v1619 = vrot.slane %v1617, 4
        %v1620 = vshll.u32 %v1458, 16
        %v1622 = vrot.slane %v1620, 5
        %v1623 = vor.u32 %v1619, %v1622
        %v1624 = vrot.slane %v1623, 4
        %v1626 = vshll.u32 %v1459, 16
        %v1628 = vrot.slane %v1626, 5
        %v1629 = vsel %vm274, %v1624, %v1628
        %v1630 = vshrl.u32 %v1459, 16
        %v1632 = vrot.slane %v1630, 4
        %v1633 = vor.u32 %v1632, %v1628
        %v1634 = vrot.slane %v1633, 4
        %v1636 = vshll.u32 %v1485, 16
        %v1638 = vrot.slane %v1636, 5
        %v1639 = vsel %vm274, %v1634, %v1638
        %v1641 = vshrl.u32 %v1460, 16
        %v1643 = vrot.slane %v1641, 4
        %v1644 = vshll.u32 %v1460, 16
        %v1646 = vrot.slane %v1644, 5
        %v1647 = vor.u32 %v1643, %v1646
        %v1648 = vrot.slane %v1647, 4
        %v1650 = vshll.u32 %v1461, 16
        %v1652 = vrot.slane %v1650, 5
        %v1653 = vsel %vm274, %v1648, %v1652
        %v1654 = vshrl.u32 %v1461, 16
        %v1656 = vrot.slane %v1654, 4
        %v1657 = vor.u32 %v1656, %v1652
        %v1658 = vrot.slane %v1657, 4
        %v1660 = vshll.u32 %v1486, 16
        %v1662 = vrot.slane %v1660, 5
        %v1663 = vsel %vm274, %v1658, %v1662
        %v1665 = vshrl.u32 %v1462, 16
        %v1667 = vrot.slane %v1665, 4
        %v1668 = vshll.u32 %v1462, 16
        %v1670 = vrot.slane %v1668, 5
        %v1671 = vor.u32 %v1667, %v1670
        %v1672 = vrot.slane %v1671, 4
        %v1674 = vshll.u32 %v1463, 16
        %v1676 = vrot.slane %v1674, 5
        %v1677 = vsel %vm274, %v1672, %v1676
        %v1678 = vshrl.u32 %v1463, 16
        %v1680 = vrot.slane %v1678, 4
        %v1681 = vor.u32 %v1680, %v1676
        %v1682 = vrot.slane %v1681, 4
        %v1684 = vshll.u32 %v1487, 16
        %v1686 = vrot.slane %v1684, 5
        %v1687 = vsel %vm274, %v1682, %v1686
        %v1689 = vshrl.u32 %v1464, 16
        %v1691 = vrot.slane %v1689, 4
        %v1692 = vshll.u32 %v1464, 16
        %v1694 = vrot.slane %v1692, 5
        %v1695 = vor.u32 %v1691, %v1694
        %v1696 = vrot.slane %v1695, 4
        %v1698 = vshll.u32 %v1465, 16
        %v1700 = vrot.slane %v1698, 5
        %v1701 = vsel %vm274, %v1696, %v1700
        %v1702 = vshrl.u32 %v1465, 16
        %v1704 = vrot.slane %v1702, 4
        %v1705 = vor.u32 %v1704, %v1700
        %v1706 = vrot.slane %v1705, 4
        %v1708 = vshll.u32 %v1488, 16
        %v1710 = vrot.slane %v1708, 5
        %v1711 = vsel %vm274, %v1706, %v1710
        %v1713 = vshrl.u32 %v1466, 16
        %v1715 = vrot.slane %v1713, 4
        %v1716 = vshll.u32 %v1466, 16
        %v1718 = vrot.slane %v1716, 5
        %v1719 = vor.u32 %v1715, %v1718
        %v1720 = vrot.slane %v1719, 4
        %v1722 = vshll.u32 %v1467, 16
        %v1724 = vrot.slane %v1722, 5
        %v1725 = vsel %vm274, %v1720, %v1724
        %v1726 = vshrl.u32 %v1467, 16
        %v1728 = vrot.slane %v1726, 4
        %v1729 = vor.u32 %v1728, %v1724
        %v1730 = vrot.slane %v1729, 4
        %v1732 = vshll.u32 %v1489, 16
        %v1734 = vrot.slane %v1732, 5
        %v1735 = vsel %vm274, %v1730, %v1734
        %v1737 = vshrl.u32 %v1468, 16
        %v1739 = vrot.slane %v1737, 4
        %v1740 = vshll.u32 %v1468, 16
        %v1742 = vrot.slane %v1740, 5
        %v1743 = vor.u32 %v1739, %v1742
        %v1744 = vrot.slane %v1743, 4
        %v1746 = vshll.u32 %v1469, 16
        %v1748 = vrot.slane %v1746, 5
        %v1749 = vsel %vm274, %v1744, %v1748
        %v1750 = vshrl.u32 %v1469, 16
        %v1752 = vrot.slane %v1750, 4
        %v1753 = vor.u32 %v1752, %v1748
        %v1754 = vrot.slane %v1753, 4
        %v1756 = vshll.u32 %v1490, 16
        %v1758 = vrot.slane %v1756, 5
        %v1759 = vsel %vm274, %v1754, %v1758
        %v1761 = vshrl.u32 %v1470, 16
        %v1763 = vrot.slane %v1761, 4
        %v1764 = vshll.u32 %v1470, 16
        %v1766 = vrot.slane %v1764, 5
        %v1767 = vor.u32 %v1763, %v1766
        %v1768 = vrot.slane %v1767, 4
        %v1770 = vshll.u32 %v1471, 16
        %v1772 = vrot.slane %v1770, 5
        %v1773 = vsel %vm274, %v1768, %v1772
        %v1774 = vshrl.u32 %v1471, 16
        %v1776 = vrot.slane %v1774, 4
        %v1777 = vor.u32 %v1776, %v1772
        %v1778 = vrot.slane %v1777, 4
        %v1780 = vshll.u32 %v1491, 16
        %v1782 = vrot.slane %v1780, 5
        %v1783 = vsel %vm274, %v1778, %v1782
        %v1785 = vshrl.u32 %v1472, 16
        %v1787 = vrot.slane %v1785, 4
        %v1788 = vshll.u32 %v1472, 16
        %v1790 = vrot.slane %v1788, 5
        %v1791 = vor.u32 %v1787, %v1790
        %v1792 = vrot.slane %v1791, 4
        %v1794 = vshll.u32 %v1473, 16
        %v1796 = vrot.slane %v1794, 5
        %v1797 = vsel %vm274, %v1792, %v1796
        %v1798 = vshrl.u32 %v1473, 16
        %v1800 = vrot.slane %v1798, 4
        %v1801 = vor.u32 %v1800, %v1796
        %v1802 = vrot.slane %v1801, 4
        %v1804 = vshll.u32 %v1492, 16
        %v1806 = vrot.slane %v1804, 5
        %v1807 = vsel %vm274, %v1802, %v1806
        %v1809 = vshrl.u32 %v1474, 16
        %v1811 = vrot.slane %v1809, 4
        %v1812 = vshll.u32 %v1474, 16
        %v1814 = vrot.slane %v1812, 5
        %v1815 = vor.u32 %v1811, %v1814
        %v1816 = vrot.slane %v1815, 4
        %v1818 = vshll.u32 %v1475, 16
        %v1820 = vrot.slane %v1818, 5
        %v1821 = vsel %vm274, %v1816, %v1820
        %v1822 = vshrl.u32 %v1475, 16
        %v1824 = vrot.slane %v1822, 4
        %v1825 = vor.u32 %v1824, %v1820
        %v1826 = vrot.slane %v1825, 4
        %v1828 = vshll.u32 %v1493, 16
        %v1830 = vrot.slane %v1828, 5
        %v1831 = vsel %vm274, %v1826, %v1830
        %v1833 = vshrl.u32 %v1476, 16
        %v1835 = vrot.slane %v1833, 4
        %v1836 = vshll.u32 %v1476, 16
        %v1838 = vrot.slane %v1836, 5
        %v1839 = vor.u32 %v1835, %v1838
        %v1840 = vrot.slane %v1839, 4
        %v1842 = vshll.u32 %v1477, 16
        %v1844 = vrot.slane %v1842, 5
        %v1845 = vsel %vm274, %v1840, %v1844
        %v1846 = vshrl.u32 %v1477, 16
        %v1848 = vrot.slane %v1846, 4
        %v1849 = vor.u32 %v1848, %v1844
        %v1850 = vrot.slane %v1849, 4
        %v1852 = vshll.u32 %v1494, 16
        %v1854 = vrot.slane %v1852, 5
        %v1855 = vsel %vm274, %v1850, %v1854
        %v1857 = vshrl.u32 %v1478, 16
        %v1859 = vrot.slane %v1857, 4
        %v1860 = vshll.u32 %v1478, 16
        %v1862 = vrot.slane %v1860, 5
        %v1863 = vor.u32 %v1859, %v1862
        %v1864 = vrot.slane %v1863, 4
        %v1866 = vshll.u32 %v1479, 16
        %v1868 = vrot.slane %v1866, 5
        %v1869 = vsel %vm274, %v1864, %v1868
        %v1870 = vshrl.u32 %v1479, 16
        %v1872 = vrot.slane %v1870, 4
        %v1873 = vor.u32 %v1872, %v1868
        %v1874 = vrot.slane %v1873, 4
        %v1876 = vshll.u32 %v1495, 16
        %v1878 = vrot.slane %v1876, 5
        %v1879 = vsel %vm274, %v1874, %v1878
        %v1880 = vld [vmem:[%s1447] sm:$0xe]
        %v1881 = vld [vmem:[%s1447 + $0xc] sm:$0xe]
        %v1882 = vld [vmem:[%s1447 + $0x18] sm:$0xe]
        %v1883 = vld [vmem:[%s1447 + $0x24] sm:$0xe]
        %v1884 = vld [vmem:[%s1447 + $0x30] sm:$0xe]
        %v1885 = vld [vmem:[%s1447 + $0x3c] sm:$0xe]
        %v1886 = vld [vmem:[%s1447 + $0x48] sm:$0xe]
        %v1887 = vld [vmem:[%s1447 + $0x54] sm:$0xe]
        %v1888 = vld [vmem:[%s1447 + $0x60] sm:$0xe]
        %v1889 = vld [vmem:[%s1447 + $0x6c] sm:$0xe]
        %v1890 = vld [vmem:[%s1447 + $0x78] sm:$0xe]
        %v1891 = vld [vmem:[%s1447 + $0x84] sm:$0xe]
        %v1892 = vld [vmem:[%s1447 + $0x90] sm:$0xe]
        %v1893 = vld [vmem:[%s1447 + $0x9c] sm:$0xe]
        %v1894 = vld [vmem:[%s1447 + $0xa8] sm:$0xe]
        %v1895 = vld [vmem:[%s1447 + $0xb4] sm:$0xe]
        %v1944 = vrot.slane %v1880, 5
        %v1945 = vrot.slane %v1944, 4
        %v1946 = vrot.slane %v1449, 5
        %v1947 = vsel %vm725, %v1945, %v1946
        %v1948 = vrot.slane %v1946, 4
        %v1949 = vrot.slane %v1480, 5
        %v1950 = vsel %vm725, %v1948, %v1949
        %v1951 = vrot.slane %v1881, 5
        %v1952 = vrot.slane %v1951, 4
        %v1953 = vrot.slane %v1451, 5
        %v1954 = vsel %vm725, %v1952, %v1953
        %v1955 = vrot.slane %v1953, 4
        %v1956 = vrot.slane %v1481, 5
        %v1957 = vsel %vm725, %v1955, %v1956
        %v1958 = vrot.slane %v1882, 5
        %v1959 = vrot.slane %v1958, 4
        %v1960 = vrot.slane %v1453, 5
        %v1961 = vsel %vm725, %v1959, %v1960
        %v1962 = vrot.slane %v1960, 4
        %v1963 = vrot.slane %v1482, 5
        %v1964 = vsel %vm725, %v1962, %v1963
        %v1965 = vrot.slane %v1883, 5
        %v1966 = vrot.slane %v1965, 4
        %v1967 = vrot.slane %v1455, 5
        %v1968 = vsel %vm725, %v1966, %v1967
        %v1969 = vrot.slane %v1967, 4
        %v1970 = vrot.slane %v1483, 5
        %v1971 = vsel %vm725, %v1969, %v1970
        %v1972 = vrot.slane %v1884, 5
        %v1973 = vrot.slane %v1972, 4
        %v1974 = vrot.slane %v1457, 5
        %v1975 = vsel %vm725, %v1973, %v1974
        %v1976 = vrot.slane %v1974, 4
        %v1977 = vrot.slane %v1484, 5
        %v1978 = vsel %vm725, %v1976, %v1977
        %v1979 = vrot.slane %v1885, 5
        %v1980 = vrot.slane %v1979, 4
        %v1981 = vrot.slane %v1459, 5
        %v1982 = vsel %vm725, %v1980, %v1981
        %v1983 = vrot.slane %v1981, 4
        %v1984 = vrot.slane %v1485, 5
        %v1985 = vsel %vm725, %v1983, %v1984
        %v1986 = vrot.slane %v1886, 5
        %v1987 = vrot.slane %v1986, 4
        %v1988 = vrot.slane %v1461, 5
        %v1989 = vsel %vm725, %v1987, %v1988
        %v1990 = vrot.slane %v1988, 4
        %v1991 = vrot.slane %v1486, 5
        %v1992 = vsel %vm725, %v1990, %v1991
        %v1993 = vrot.slane %v1887, 5
        %v1994 = vrot.slane %v1993, 4
        %v1995 = vrot.slane %v1463, 5
        %v1996 = vsel %vm725, %v1994, %v1995
        %v1997 = vrot.slane %v1995, 4
        %v1998 = vrot.slane %v1487, 5
        %v1999 = vsel %vm725, %v1997, %v1998
        %v2000 = vrot.slane %v1888, 5
        %v2001 = vrot.slane %v2000, 4
        %v2002 = vrot.slane %v1465, 5
        %v2003 = vsel %vm725, %v2001, %v2002
        %v2004 = vrot.slane %v2002, 4
        %v2005 = vrot.slane %v1488, 5
        %v2006 = vsel %vm725, %v2004, %v2005
        %v2007 = vrot.slane %v1889, 5
        %v2008 = vrot.slane %v2007, 4
        %v2009 = vrot.slane %v1467, 5
        %v2010 = vsel %vm725, %v2008, %v2009
        %v2011 = vrot.slane %v2009, 4
        %v2012 = vrot.slane %v1489, 5
        %v2013 = vsel %vm725, %v2011, %v2012
        %v2014 = vrot.slane %v1890, 5
        %v2015 = vrot.slane %v2014, 4
        %v2016 = vrot.slane %v1469, 5
        %v2017 = vsel %vm725, %v2015, %v2016
        %v2018 = vrot.slane %v2016, 4
        %v2019 = vrot.slane %v1490, 5
        %v2020 = vsel %vm725, %v2018, %v2019
        %v2021 = vrot.slane %v1891, 5
        %v2022 = vrot.slane %v2021, 4
        %v2023 = vrot.slane %v1471, 5
        %v2024 = vsel %vm725, %v2022, %v2023
        %v2025 = vrot.slane %v2023, 4
        %v2026 = vrot.slane %v1491, 5
        %v2027 = vsel %vm725, %v2025, %v2026
        %v2028 = vrot.slane %v1892, 5
        %v2029 = vrot.slane %v2028, 4
        %v2030 = vrot.slane %v1473, 5
        %v2031 = vsel %vm725, %v2029, %v2030
        %v2032 = vrot.slane %v2030, 4
        %v2033 = vrot.slane %v1492, 5
        %v2034 = vsel %vm725, %v2032, %v2033
        %v2035 = vrot.slane %v1893, 5
        %v2036 = vrot.slane %v2035, 4
        %v2037 = vrot.slane %v1475, 5
        %v2038 = vsel %vm725, %v2036, %v2037
        %v2039 = vrot.slane %v2037, 4
        %v2040 = vrot.slane %v1493, 5
        %v2041 = vsel %vm725, %v2039, %v2040
        %v2042 = vrot.slane %v1894, 5
        %v2043 = vrot.slane %v2042, 4
        %v2044 = vrot.slane %v1477, 5
        %v2045 = vsel %vm725, %v2043, %v2044
        %v2046 = vrot.slane %v2044, 4
        %v2047 = vrot.slane %v1494, 5
        %v2048 = vsel %vm725, %v2046, %v2047
        %v2049 = vrot.slane %v1895, 5
        %v2050 = vrot.slane %v2049, 4
        %v2051 = vrot.slane %v1479, 5
        %v2052 = vsel %vm725, %v2050, %v2051
        %v2053 = vrot.slane %v2051, 4
        %v2054 = vrot.slane %v1495, 5
        %v2055 = vsel %vm725, %v2053, %v2054
        %v2072 = vunpack.c.l.b16 %v224
        %v2073 = vunpack.c.l.b16 %v225
        %v2074 = vunpack.c.l.b16 %v226
        %v2075 = vunpack.c.l.b16 %v227
        %v2076 = vunpack.c.l.b16 %v228
        %v2077 = vunpack.c.l.b16 %v229
        %v2078 = vunpack.c.l.b16 %v230
        %v2079 = vunpack.c.l.b16 %v231
        %v2080 = vunpack.c.l.b16 %v232
        %v2081 = vunpack.c.l.b16 %v233
        %v2082 = vunpack.c.l.b16 %v234
        %v2083 = vunpack.c.l.b16 %v235
        %v2084 = vunpack.c.l.b16 %v236
        %v2085 = vunpack.c.l.b16 %v237
        %v2086 = vunpack.c.l.b16 %v238
        %v2087 = vunpack.c.l.b16 %v239
        %v2088 = vunpack.c.l.b16 %v240
        %v2089 = vunpack.c.l.b16 %v241
        %v2090 = vunpack.c.l.b16 %v242
        %v2091 = vunpack.c.l.b16 %v243
        %v2092 = vunpack.c.l.b16 %v244
        %v2093 = vunpack.c.l.b16 %v245
        %v2094 = vunpack.c.l.b16 %v246
        %v2095 = vunpack.c.l.b16 %v247
        %v2096 = vunpack.c.l.b16 %v248
        %v2097 = vunpack.c.l.b16 %v249
        %v2098 = vunpack.c.l.b16 %v250
        %v2099 = vunpack.c.l.b16 %v251
        %v2100 = vunpack.c.l.b16 %v252
        %v2101 = vunpack.c.l.b16 %v253
        %v2102 = vunpack.c.l.b16 %v254
        %v2103 = vunpack.c.l.b16 %v255
        %v2104 = vpack.c.b16 %v2073, %v2072
        %v2105 = vpack.c.b16 %v2075, %v2074
        %v2106 = vpack.c.b16 %v2077, %v2076
        %v2107 = vpack.c.b16 %v2079, %v2078
        %v2108 = vpack.c.b16 %v2081, %v2080
        %v2109 = vpack.c.b16 %v2083, %v2082
        %v2110 = vpack.c.b16 %v2085, %v2084
        %v2111 = vpack.c.b16 %v2087, %v2086
        %v2112 = vpack.c.b16 %v2089, %v2088
        %v2113 = vpack.c.b16 %v2091, %v2090
        %v2114 = vpack.c.b16 %v2093, %v2092
        %v2115 = vpack.c.b16 %v2095, %v2094
        %v2116 = vpack.c.b16 %v2097, %v2096
        %v2117 = vpack.c.b16 %v2099, %v2098
        %v2118 = vpack.c.b16 %v2101, %v2100
        %v2119 = vpack.c.b16 %v2103, %v2102
        %v2120 = vunpack.c.l.b16 %v288
        %v2121 = vunpack.c.l.b16 %v298
        %v2122 = vunpack.c.l.b16 %v312
        %v2123 = vunpack.c.l.b16 %v322
        %v2124 = vunpack.c.l.b16 %v336
        %v2125 = vunpack.c.l.b16 %v346
        %v2126 = vunpack.c.l.b16 %v360
        %v2127 = vunpack.c.l.b16 %v370
        %v2128 = vunpack.c.l.b16 %v384
        %v2129 = vunpack.c.l.b16 %v394
        %v2130 = vunpack.c.l.b16 %v408
        %v2131 = vunpack.c.l.b16 %v418
        %v2132 = vunpack.c.l.b16 %v432
        %v2133 = vunpack.c.l.b16 %v442
        %v2134 = vunpack.c.l.b16 %v456
        %v2135 = vunpack.c.l.b16 %v466
        %v2136 = vunpack.c.l.b16 %v480
        %v2137 = vunpack.c.l.b16 %v490
        %v2138 = vunpack.c.l.b16 %v504
        %v2139 = vunpack.c.l.b16 %v514
        %v2140 = vunpack.c.l.b16 %v528
        %v2141 = vunpack.c.l.b16 %v538
        %v2142 = vunpack.c.l.b16 %v552
        %v2143 = vunpack.c.l.b16 %v562
        %v2144 = vunpack.c.l.b16 %v576
        %v2145 = vunpack.c.l.b16 %v586
        %v2146 = vunpack.c.l.b16 %v600
        %v2147 = vunpack.c.l.b16 %v610
        %v2148 = vunpack.c.l.b16 %v624
        %v2149 = vunpack.c.l.b16 %v634
        %v2150 = vunpack.c.l.b16 %v648
        %v2151 = vunpack.c.l.b16 %v658
        %v2152 = vpack.c.b16 %v2121, %v2120
        %v2153 = vpack.c.b16 %v2123, %v2122
        %v2154 = vpack.c.b16 %v2125, %v2124
        %v2155 = vpack.c.b16 %v2127, %v2126
        %v2156 = vpack.c.b16 %v2129, %v2128
        %v2157 = vpack.c.b16 %v2131, %v2130
        %v2158 = vpack.c.b16 %v2133, %v2132
        %v2159 = vpack.c.b16 %v2135, %v2134
        %v2160 = vpack.c.b16 %v2137, %v2136
        %v2161 = vpack.c.b16 %v2139, %v2138
        %v2162 = vpack.c.b16 %v2141, %v2140
        %v2163 = vpack.c.b16 %v2143, %v2142
        %v2164 = vpack.c.b16 %v2145, %v2144
        %v2165 = vpack.c.b16 %v2147, %v2146
        %v2166 = vpack.c.b16 %v2149, %v2148
        %v2167 = vpack.c.b16 %v2151, %v2150
        %2168 = vrot.lane.b32.xlu0 %v2152, 64
        %v2169 = vpop.permute.xlu0 %2168
        %2170 = vrot.lane.b32.xlu0 %v2153, 64
        %v2171 = vpop.permute.xlu0 %2170
        %2172 = vrot.lane.b32.xlu0 %v2154, 64
        %v2173 = vpop.permute.xlu0 %2172
        %2174 = vrot.lane.b32.xlu0 %v2155, 64
        %v2175 = vpop.permute.xlu0 %2174
        %2176 = vrot.lane.b32.xlu0 %v2156, 64
        %v2177 = vpop.permute.xlu0 %2176
        %2178 = vrot.lane.b32.xlu0 %v2157, 64
        %v2179 = vpop.permute.xlu0 %2178
        %2180 = vrot.lane.b32.xlu0 %v2158, 64
        %v2181 = vpop.permute.xlu0 %2180
        %2182 = vrot.lane.b32.xlu0 %v2159, 64
        %v2183 = vpop.permute.xlu0 %2182
        %2184 = vrot.lane.b32.xlu0 %v2160, 64
        %v2185 = vpop.permute.xlu0 %2184
        %2186 = vrot.lane.b32.xlu0 %v2161, 64
        %v2187 = vpop.permute.xlu0 %2186
        %2188 = vrot.lane.b32.xlu0 %v2162, 64
        %v2189 = vpop.permute.xlu0 %2188
        %2190 = vrot.lane.b32.xlu0 %v2163, 64
        %v2191 = vpop.permute.xlu0 %2190
        %2192 = vrot.lane.b32.xlu0 %v2164, 64
        %v2193 = vpop.permute.xlu0 %2192
        %2194 = vrot.lane.b32.xlu0 %v2165, 64
        %v2195 = vpop.permute.xlu0 %2194
        %2196 = vrot.lane.b32.xlu0 %v2166, 64
        %v2197 = vpop.permute.xlu0 %2196
        %2198 = vrot.lane.b32.xlu0 %v2167, 64
        %v2199 = vpop.permute.xlu0 %2198
        %v2200 = vunpack.c.l.b16 %v729
        %v2201 = vunpack.c.l.b16 %v732
        %v2202 = vunpack.c.l.b16 %v736
        %v2203 = vunpack.c.l.b16 %v739
        %v2204 = vunpack.c.l.b16 %v743
        %v2205 = vunpack.c.l.b16 %v746
        %v2206 = vunpack.c.l.b16 %v750
        %v2207 = vunpack.c.l.b16 %v753
        %v2208 = vunpack.c.l.b16 %v757
        %v2209 = vunpack.c.l.b16 %v760
        %v2210 = vunpack.c.l.b16 %v764
        %v2211 = vunpack.c.l.b16 %v767
        %v2212 = vunpack.c.l.b16 %v771
        %v2213 = vunpack.c.l.b16 %v774
        %v2214 = vunpack.c.l.b16 %v778
        %v2215 = vunpack.c.l.b16 %v781
        %v2216 = vunpack.c.l.b16 %v785
        %v2217 = vunpack.c.l.b16 %v788
        %v2218 = vunpack.c.l.b16 %v792
        %v2219 = vunpack.c.l.b16 %v795
        %v2220 = vunpack.c.l.b16 %v799
        %v2221 = vunpack.c.l.b16 %v802
        %v2222 = vunpack.c.l.b16 %v806
        %v2223 = vunpack.c.l.b16 %v809
        %v2224 = vunpack.c.l.b16 %v813
        %v2225 = vunpack.c.l.b16 %v816
        %v2226 = vunpack.c.l.b16 %v820
        %v2227 = vunpack.c.l.b16 %v823
        %v2228 = vunpack.c.l.b16 %v827
        %v2229 = vunpack.c.l.b16 %v830
        %v2230 = vunpack.c.l.b16 %v834
        %v2231 = vunpack.c.l.b16 %v837
        %v2232 = vpack.c.b16 %v2201, %v2200
        %v2233 = vpack.c.b16 %v2203, %v2202
        %v2234 = vpack.c.b16 %v2205, %v2204
        %v2235 = vpack.c.b16 %v2207, %v2206
        %v2236 = vpack.c.b16 %v2209, %v2208
        %v2237 = vpack.c.b16 %v2211, %v2210
        %v2238 = vpack.c.b16 %v2213, %v2212
        %v2239 = vpack.c.b16 %v2215, %v2214
        %v2240 = vpack.c.b16 %v2217, %v2216
        %v2241 = vpack.c.b16 %v2219, %v2218
        %v2242 = vpack.c.b16 %v2221, %v2220
        %v2243 = vpack.c.b16 %v2223, %v2222
        %v2244 = vpack.c.b16 %v2225, %v2224
        %v2245 = vpack.c.b16 %v2227, %v2226
        %v2246 = vpack.c.b16 %v2229, %v2228
        %v2247 = vpack.c.b16 %v2231, %v2230
        %v2264 = vunpack.c.l.b16 %v839
        %v2265 = vunpack.c.l.b16 %v840
        %v2266 = vunpack.c.l.b16 %v841
        %v2267 = vunpack.c.l.b16 %v842
        %v2268 = vunpack.c.l.b16 %v843
        %v2269 = vunpack.c.l.b16 %v844
        %v2270 = vunpack.c.l.b16 %v845
        %v2271 = vunpack.c.l.b16 %v846
        %v2272 = vunpack.c.l.b16 %v847
        %v2273 = vunpack.c.l.b16 %v848
        %v2274 = vunpack.c.l.b16 %v849
        %v2275 = vunpack.c.l.b16 %v850
        %v2276 = vunpack.c.l.b16 %v851
        %v2277 = vunpack.c.l.b16 %v852
        %v2278 = vunpack.c.l.b16 %v853
        %v2279 = vunpack.c.l.b16 %v854
        %v2280 = vunpack.c.l.b16 %v855
        %v2281 = vunpack.c.l.b16 %v856
        %v2282 = vunpack.c.l.b16 %v857
        %v2283 = vunpack.c.l.b16 %v858
        %v2284 = vunpack.c.l.b16 %v859
        %v2285 = vunpack.c.l.b16 %v860
        %v2286 = vunpack.c.l.b16 %v861
        %v2287 = vunpack.c.l.b16 %v862
        %v2288 = vunpack.c.l.b16 %v863
        %v2289 = vunpack.c.l.b16 %v864
        %v2290 = vunpack.c.l.b16 %v865
        %v2291 = vunpack.c.l.b16 %v866
        %v2292 = vunpack.c.l.b16 %v867
        %v2293 = vunpack.c.l.b16 %v868
        %v2294 = vunpack.c.l.b16 %v869
        %v2295 = vunpack.c.l.b16 %v870
        %v2296 = vpack.c.b16 %v2265, %v2264
        %v2297 = vpack.c.b16 %v2267, %v2266
        %v2298 = vpack.c.b16 %v2269, %v2268
        %v2299 = vpack.c.b16 %v2271, %v2270
        %v2300 = vpack.c.b16 %v2273, %v2272
        %v2301 = vpack.c.b16 %v2275, %v2274
        %v2302 = vpack.c.b16 %v2277, %v2276
        %v2303 = vpack.c.b16 %v2279, %v2278
        %v2304 = vpack.c.b16 %v2281, %v2280
        %v2305 = vpack.c.b16 %v2283, %v2282
        %v2306 = vpack.c.b16 %v2285, %v2284
        %v2307 = vpack.c.b16 %v2287, %v2286
        %v2308 = vpack.c.b16 %v2289, %v2288
        %v2309 = vpack.c.b16 %v2291, %v2290
        %v2310 = vpack.c.b16 %v2293, %v2292
        %v2311 = vpack.c.b16 %v2295, %v2294
        %2312 = vrot.lane.b32.xlu0 %v2296, 64
        %v2313 = vpop.permute.xlu0 %2312
        %2314 = vrot.lane.b32.xlu0 %v2297, 64
        %v2315 = vpop.permute.xlu0 %2314
        %2316 = vrot.lane.b32.xlu0 %v2298, 64
        %v2317 = vpop.permute.xlu0 %2316
        %2318 = vrot.lane.b32.xlu0 %v2299, 64
        %v2319 = vpop.permute.xlu0 %2318
        %2320 = vrot.lane.b32.xlu0 %v2300, 64
        %v2321 = vpop.permute.xlu0 %2320
        %2322 = vrot.lane.b32.xlu0 %v2301, 64
        %v2323 = vpop.permute.xlu0 %2322
        %2324 = vrot.lane.b32.xlu0 %v2302, 64
        %v2325 = vpop.permute.xlu0 %2324
        %2326 = vrot.lane.b32.xlu0 %v2303, 64
        %v2327 = vpop.permute.xlu0 %2326
        %2328 = vrot.lane.b32.xlu0 %v2304, 64
        %v2329 = vpop.permute.xlu0 %2328
        %2330 = vrot.lane.b32.xlu0 %v2305, 64
        %v2331 = vpop.permute.xlu0 %2330
        %2332 = vrot.lane.b32.xlu0 %v2306, 64
        %v2333 = vpop.permute.xlu0 %2332
        %2334 = vrot.lane.b32.xlu0 %v2307, 64
        %v2335 = vpop.permute.xlu0 %2334
        %2336 = vrot.lane.b32.xlu0 %v2308, 64
        %v2337 = vpop.permute.xlu0 %2336
        %2338 = vrot.lane.b32.xlu0 %v2309, 64
        %v2339 = vpop.permute.xlu0 %2338
        %2340 = vrot.lane.b32.xlu0 %v2310, 64
        %v2341 = vpop.permute.xlu0 %2340
        %2342 = vrot.lane.b32.xlu0 %v2311, 64
        %v2343 = vpop.permute.xlu0 %2342
        %v2344 = vunpack.c.l.b16 %v900
        %v2345 = vunpack.c.l.b16 %v910
        %v2346 = vunpack.c.l.b16 %v924
        %v2347 = vunpack.c.l.b16 %v934
        %v2348 = vunpack.c.l.b16 %v948
        %v2349 = vunpack.c.l.b16 %v958
        %v2350 = vunpack.c.l.b16 %v972
        %v2351 = vunpack.c.l.b16 %v982
        %v2352 = vunpack.c.l.b16 %v996
        %v2353 = vunpack.c.l.b16 %v1006
        %v2354 = vunpack.c.l.b16 %v1020
        %v2355 = vunpack.c.l.b16 %v1030
        %v2356 = vunpack.c.l.b16 %v1044
        %v2357 = vunpack.c.l.b16 %v1054
        %v2358 = vunpack.c.l.b16 %v1068
        %v2359 = vunpack.c.l.b16 %v1078
        %v2360 = vunpack.c.l.b16 %v1092
        %v2361 = vunpack.c.l.b16 %v1102
        %v2362 = vunpack.c.l.b16 %v1116
        %v2363 = vunpack.c.l.b16 %v1126
        %v2364 = vunpack.c.l.b16 %v1140
        %v2365 = vunpack.c.l.b16 %v1150
        %v2366 = vunpack.c.l.b16 %v1164
        %v2367 = vunpack.c.l.b16 %v1174
        %v2368 = vunpack.c.l.b16 %v1188
        %v2369 = vunpack.c.l.b16 %v1198
        %v2370 = vunpack.c.l.b16 %v1212
        %v2371 = vunpack.c.l.b16 %v1222
        %v2372 = vunpack.c.l.b16 %v1236
        %v2373 = vunpack.c.l.b16 %v1246
        %v2374 = vunpack.c.l.b16 %v1260
        %v2375 = vunpack.c.l.b16 %v1270
        %v2376 = vpack.c.b16 %v2345, %v2344
        %v2377 = vpack.c.b16 %v2347, %v2346
        %v2378 = vpack.c.b16 %v2349, %v2348
        %v2379 = vpack.c.b16 %v2351, %v2350
        %v2380 = vpack.c.b16 %v2353, %v2352
        %v2381 = vpack.c.b16 %v2355, %v2354
        %v2382 = vpack.c.b16 %v2357, %v2356
        %v2383 = vpack.c.b16 %v2359, %v2358
        %v2384 = vpack.c.b16 %v2361, %v2360
        %v2385 = vpack.c.b16 %v2363, %v2362
        %v2386 = vpack.c.b16 %v2365, %v2364
        %v2387 = vpack.c.b16 %v2367, %v2366
        %v2388 = vpack.c.b16 %v2369, %v2368
        %v2389 = vpack.c.b16 %v2371, %v2370
        %v2390 = vpack.c.b16 %v2373, %v2372
        %v2391 = vpack.c.b16 %v2375, %v2374
        %v2392 = vunpack.c.l.b16 %v1338
        %v2393 = vunpack.c.l.b16 %v1341
        %v2394 = vunpack.c.l.b16 %v1345
        %v2395 = vunpack.c.l.b16 %v1348
        %v2396 = vunpack.c.l.b16 %v1352
        %v2397 = vunpack.c.l.b16 %v1355
        %v2398 = vunpack.c.l.b16 %v1359
        %v2399 = vunpack.c.l.b16 %v1362
        %v2400 = vunpack.c.l.b16 %v1366
        %v2401 = vunpack.c.l.b16 %v1369
        %v2402 = vunpack.c.l.b16 %v1373
        %v2403 = vunpack.c.l.b16 %v1376
        %v2404 = vunpack.c.l.b16 %v1380
        %v2405 = vunpack.c.l.b16 %v1383
        %v2406 = vunpack.c.l.b16 %v1387
        %v2407 = vunpack.c.l.b16 %v1390
        %v2408 = vunpack.c.l.b16 %v1394
        %v2409 = vunpack.c.l.b16 %v1397
        %v2410 = vunpack.c.l.b16 %v1401
        %v2411 = vunpack.c.l.b16 %v1404
        %v2412 = vunpack.c.l.b16 %v1408
        %v2413 = vunpack.c.l.b16 %v1411
        %v2414 = vunpack.c.l.b16 %v1415
        %v2415 = vunpack.c.l.b16 %v1418
        %v2416 = vunpack.c.l.b16 %v1422
        %v2417 = vunpack.c.l.b16 %v1425
        %v2418 = vunpack.c.l.b16 %v1429
        %v2419 = vunpack.c.l.b16 %v1432
        %v2420 = vunpack.c.l.b16 %v1436
        %v2421 = vunpack.c.l.b16 %v1439
        %v2422 = vunpack.c.l.b16 %v1443
        %v2423 = vunpack.c.l.b16 %v1446
        %v2424 = vpack.c.b16 %v2393, %v2392
        %v2425 = vpack.c.b16 %v2395, %v2394
        %v2426 = vpack.c.b16 %v2397, %v2396
        %v2427 = vpack.c.b16 %v2399, %v2398
        %v2428 = vpack.c.b16 %v2401, %v2400
        %v2429 = vpack.c.b16 %v2403, %v2402
        %v2430 = vpack.c.b16 %v2405, %v2404
        %v2431 = vpack.c.b16 %v2407, %v2406
        %v2432 = vpack.c.b16 %v2409, %v2408
        %v2433 = vpack.c.b16 %v2411, %v2410
        %v2434 = vpack.c.b16 %v2413, %v2412
        %v2435 = vpack.c.b16 %v2415, %v2414
        %v2436 = vpack.c.b16 %v2417, %v2416
        %v2437 = vpack.c.b16 %v2419, %v2418
        %v2438 = vpack.c.b16 %v2421, %v2420
        %v2439 = vpack.c.b16 %v2423, %v2422
        %2440 = vrot.lane.b32.xlu0 %v2424, 64
        %v2441 = vpop.permute.xlu0 %2440
        %2442 = vrot.lane.b32.xlu0 %v2425, 64
        %v2443 = vpop.permute.xlu0 %2442
        %2444 = vrot.lane.b32.xlu0 %v2426, 64
        %v2445 = vpop.permute.xlu0 %2444
        %2446 = vrot.lane.b32.xlu0 %v2427, 64
        %v2447 = vpop.permute.xlu0 %2446
        %2448 = vrot.lane.b32.xlu0 %v2428, 64
        %v2449 = vpop.permute.xlu0 %2448
        %2450 = vrot.lane.b32.xlu0 %v2429, 64
        %v2451 = vpop.permute.xlu0 %2450
        %2452 = vrot.lane.b32.xlu0 %v2430, 64
        %v2453 = vpop.permute.xlu0 %2452
        %2454 = vrot.lane.b32.xlu0 %v2431, 64
        %v2455 = vpop.permute.xlu0 %2454
        %2456 = vrot.lane.b32.xlu0 %v2432, 64
        %v2457 = vpop.permute.xlu0 %2456
        %2458 = vrot.lane.b32.xlu0 %v2433, 64
        %v2459 = vpop.permute.xlu0 %2458
        %2460 = vrot.lane.b32.xlu0 %v2434, 64
        %v2461 = vpop.permute.xlu0 %2460
        %2462 = vrot.lane.b32.xlu0 %v2435, 64
        %v2463 = vpop.permute.xlu0 %2462
        %2464 = vrot.lane.b32.xlu0 %v2436, 64
        %v2465 = vpop.permute.xlu0 %2464
        %2466 = vrot.lane.b32.xlu0 %v2437, 64
        %v2467 = vpop.permute.xlu0 %2466
        %2468 = vrot.lane.b32.xlu0 %v2438, 64
        %v2469 = vpop.permute.xlu0 %2468
        %2470 = vrot.lane.b32.xlu0 %v2439, 64
        %v2471 = vpop.permute.xlu0 %2470
        %v2488 = vunpack.c.l.b16 %v1448
        %v2489 = vunpack.c.l.b16 %v1449
        %v2490 = vunpack.c.l.b16 %v1450
        %v2491 = vunpack.c.l.b16 %v1451
        %v2492 = vunpack.c.l.b16 %v1452
        %v2493 = vunpack.c.l.b16 %v1453
        %v2494 = vunpack.c.l.b16 %v1454
        %v2495 = vunpack.c.l.b16 %v1455
        %v2496 = vunpack.c.l.b16 %v1456
        %v2497 = vunpack.c.l.b16 %v1457
        %v2498 = vunpack.c.l.b16 %v1458
        %v2499 = vunpack.c.l.b16 %v1459
        %v2500 = vunpack.c.l.b16 %v1460
        %v2501 = vunpack.c.l.b16 %v1461
        %v2502 = vunpack.c.l.b16 %v1462
        %v2503 = vunpack.c.l.b16 %v1463
        %v2504 = vunpack.c.l.b16 %v1464
        %v2505 = vunpack.c.l.b16 %v1465
        %v2506 = vunpack.c.l.b16 %v1466
        %v2507 = vunpack.c.l.b16 %v1467
        %v2508 = vunpack.c.l.b16 %v1468
        %v2509 = vunpack.c.l.b16 %v1469
        %v2510 = vunpack.c.l.b16 %v1470
        %v2511 = vunpack.c.l.b16 %v1471
        %v2512 = vunpack.c.l.b16 %v1472
        %v2513 = vunpack.c.l.b16 %v1473
        %v2514 = vunpack.c.l.b16 %v1474
        %v2515 = vunpack.c.l.b16 %v1475
        %v2516 = vunpack.c.l.b16 %v1476
        %v2517 = vunpack.c.l.b16 %v1477
        %v2518 = vunpack.c.l.b16 %v1478
        %v2519 = vunpack.c.l.b16 %v1479
        %v2520 = vpack.c.b16 %v2489, %v2488
        %v2521 = vpack.c.b16 %v2491, %v2490
        %v2522 = vpack.c.b16 %v2493, %v2492
        %v2523 = vpack.c.b16 %v2495, %v2494
        %v2524 = vpack.c.b16 %v2497, %v2496
        %v2525 = vpack.c.b16 %v2499, %v2498
        %v2526 = vpack.c.b16 %v2501, %v2500
        %v2527 = vpack.c.b16 %v2503, %v2502
        %v2528 = vpack.c.b16 %v2505, %v2504
        %v2529 = vpack.c.b16 %v2507, %v2506
        %v2530 = vpack.c.b16 %v2509, %v2508
        %v2531 = vpack.c.b16 %v2511, %v2510
        %v2532 = vpack.c.b16 %v2513, %v2512
        %v2533 = vpack.c.b16 %v2515, %v2514
        %v2534 = vpack.c.b16 %v2517, %v2516
        %v2535 = vpack.c.b16 %v2519, %v2518
        %v2536 = vunpack.c.l.b16 %v1509
        %v2537 = vunpack.c.l.b16 %v1519
        %v2538 = vunpack.c.l.b16 %v1533
        %v2539 = vunpack.c.l.b16 %v1543
        %v2540 = vunpack.c.l.b16 %v1557
        %v2541 = vunpack.c.l.b16 %v1567
        %v2542 = vunpack.c.l.b16 %v1581
        %v2543 = vunpack.c.l.b16 %v1591
        %v2544 = vunpack.c.l.b16 %v1605
        %v2545 = vunpack.c.l.b16 %v1615
        %v2546 = vunpack.c.l.b16 %v1629
        %v2547 = vunpack.c.l.b16 %v1639
        %v2548 = vunpack.c.l.b16 %v1653
        %v2549 = vunpack.c.l.b16 %v1663
        %v2550 = vunpack.c.l.b16 %v1677
        %v2551 = vunpack.c.l.b16 %v1687
        %v2552 = vunpack.c.l.b16 %v1701
        %v2553 = vunpack.c.l.b16 %v1711
        %v2554 = vunpack.c.l.b16 %v1725
        %v2555 = vunpack.c.l.b16 %v1735
        %v2556 = vunpack.c.l.b16 %v1749
        %v2557 = vunpack.c.l.b16 %v1759
        %v2558 = vunpack.c.l.b16 %v1773
        %v2559 = vunpack.c.l.b16 %v1783
        %v2560 = vunpack.c.l.b16 %v1797
        %v2561 = vunpack.c.l.b16 %v1807
        %v2562 = vunpack.c.l.b16 %v1821
        %v2563 = vunpack.c.l.b16 %v1831
        %v2564 = vunpack.c.l.b16 %v1845
        %v2565 = vunpack.c.l.b16 %v1855
        %v2566 = vunpack.c.l.b16 %v1869
        %v2567 = vunpack.c.l.b16 %v1879
        %v2568 = vpack.c.b16 %v2537, %v2536
        %v2569 = vpack.c.b16 %v2539, %v2538
        %v2570 = vpack.c.b16 %v2541, %v2540
        %v2571 = vpack.c.b16 %v2543, %v2542
        %v2572 = vpack.c.b16 %v2545, %v2544
        %v2573 = vpack.c.b16 %v2547, %v2546
        %v2574 = vpack.c.b16 %v2549, %v2548
        %v2575 = vpack.c.b16 %v2551, %v2550
        %v2576 = vpack.c.b16 %v2553, %v2552
        %v2577 = vpack.c.b16 %v2555, %v2554
        %v2578 = vpack.c.b16 %v2557, %v2556
        %v2579 = vpack.c.b16 %v2559, %v2558
        %v2580 = vpack.c.b16 %v2561, %v2560
        %v2581 = vpack.c.b16 %v2563, %v2562
        %v2582 = vpack.c.b16 %v2565, %v2564
        %v2583 = vpack.c.b16 %v2567, %v2566
        %2584 = vrot.lane.b32.xlu0 %v2568, 64
        %v2585 = vpop.permute.xlu0 %2584
        %2586 = vrot.lane.b32.xlu0 %v2569, 64
        %v2587 = vpop.permute.xlu0 %2586
        %2588 = vrot.lane.b32.xlu0 %v2570, 64
        %v2589 = vpop.permute.xlu0 %2588
        %2590 = vrot.lane.b32.xlu0 %v2571, 64
        %v2591 = vpop.permute.xlu0 %2590
        %2592 = vrot.lane.b32.xlu0 %v2572, 64
        %v2593 = vpop.permute.xlu0 %2592
        %2594 = vrot.lane.b32.xlu0 %v2573, 64
        %v2595 = vpop.permute.xlu0 %2594
        %2596 = vrot.lane.b32.xlu0 %v2574, 64
        %v2597 = vpop.permute.xlu0 %2596
        %2598 = vrot.lane.b32.xlu0 %v2575, 64
        %v2599 = vpop.permute.xlu0 %2598
        %2600 = vrot.lane.b32.xlu0 %v2576, 64
        %v2601 = vpop.permute.xlu0 %2600
        %2602 = vrot.lane.b32.xlu0 %v2577, 64
        %v2603 = vpop.permute.xlu0 %2602
        %2604 = vrot.lane.b32.xlu0 %v2578, 64
        %v2605 = vpop.permute.xlu0 %2604
        %2606 = vrot.lane.b32.xlu0 %v2579, 64
        %v2607 = vpop.permute.xlu0 %2606
        %2608 = vrot.lane.b32.xlu0 %v2580, 64
        %v2609 = vpop.permute.xlu0 %2608
        %2610 = vrot.lane.b32.xlu0 %v2581, 64
        %v2611 = vpop.permute.xlu0 %2610
        %2612 = vrot.lane.b32.xlu0 %v2582, 64
        %v2613 = vpop.permute.xlu0 %2612
        %2614 = vrot.lane.b32.xlu0 %v2583, 64
        %v2615 = vpop.permute.xlu0 %2614
        %v2616 = vunpack.c.l.b16 %v1947
        %v2617 = vunpack.c.l.b16 %v1950
        %v2618 = vunpack.c.l.b16 %v1954
        %v2619 = vunpack.c.l.b16 %v1957
        %v2620 = vunpack.c.l.b16 %v1961
        %v2621 = vunpack.c.l.b16 %v1964
        %v2622 = vunpack.c.l.b16 %v1968
        %v2623 = vunpack.c.l.b16 %v1971
        %v2624 = vunpack.c.l.b16 %v1975
        %v2625 = vunpack.c.l.b16 %v1978
        %v2626 = vunpack.c.l.b16 %v1982
        %v2627 = vunpack.c.l.b16 %v1985
        %v2628 = vunpack.c.l.b16 %v1989
        %v2629 = vunpack.c.l.b16 %v1992
        %v2630 = vunpack.c.l.b16 %v1996
        %v2631 = vunpack.c.l.b16 %v1999
        %v2632 = vunpack.c.l.b16 %v2003
        %v2633 = vunpack.c.l.b16 %v2006
        %v2634 = vunpack.c.l.b16 %v2010
        %v2635 = vunpack.c.l.b16 %v2013
        %v2636 = vunpack.c.l.b16 %v2017
        %v2637 = vunpack.c.l.b16 %v2020
        %v2638 = vunpack.c.l.b16 %v2024
        %v2639 = vunpack.c.l.b16 %v2027
        %v2640 = vunpack.c.l.b16 %v2031
        %v2641 = vunpack.c.l.b16 %v2034
        %v2642 = vunpack.c.l.b16 %v2038
        %v2643 = vunpack.c.l.b16 %v2041
        %v2644 = vunpack.c.l.b16 %v2045
        %v2645 = vunpack.c.l.b16 %v2048
        %v2646 = vunpack.c.l.b16 %v2052
        %v2647 = vunpack.c.l.b16 %v2055
        %v2648 = vpack.c.b16 %v2617, %v2616
        %v2649 = vpack.c.b16 %v2619, %v2618
        %v2650 = vpack.c.b16 %v2621, %v2620
        %v2651 = vpack.c.b16 %v2623, %v2622
        %v2652 = vpack.c.b16 %v2625, %v2624
        %v2653 = vpack.c.b16 %v2627, %v2626
        %v2654 = vpack.c.b16 %v2629, %v2628
        %v2655 = vpack.c.b16 %v2631, %v2630
        %v2656 = vpack.c.b16 %v2633, %v2632
        %v2657 = vpack.c.b16 %v2635, %v2634
        %v2658 = vpack.c.b16 %v2637, %v2636
        %v2659 = vpack.c.b16 %v2639, %v2638
        %v2660 = vpack.c.b16 %v2641, %v2640
        %v2661 = vpack.c.b16 %v2643, %v2642
        %v2662 = vpack.c.b16 %v2645, %v2644
        %v2663 = vpack.c.b16 %v2647, %v2646
        %vm2664 = vcmask 523264
        %v2667 = vsel %vm2664, %v2104, %v2169
        %v2671 = vsel %vm2664, %v2105, %v2171
        %v2675 = vsel %vm2664, %v2106, %v2173
        %v2679 = vsel %vm2664, %v2107, %v2175
        %v2683 = vsel %vm2664, %v2108, %v2177
        %v2687 = vsel %vm2664, %v2109, %v2179
        %v2691 = vsel %vm2664, %v2110, %v2181
        %v2695 = vsel %vm2664, %v2111, %v2183
        %v2699 = vsel %vm2664, %v2112, %v2185
        %v2703 = vsel %vm2664, %v2113, %v2187
        %v2707 = vsel %vm2664, %v2114, %v2189
        %v2711 = vsel %vm2664, %v2115, %v2191
        %v2715 = vsel %vm2664, %v2116, %v2193
        %v2719 = vsel %vm2664, %v2117, %v2195
        %v2723 = vsel %vm2664, %v2118, %v2197
        %v2727 = vsel %vm2664, %v2119, %v2199
        %v2731 = vsel %vm2664, %v2232, %v2313
        %v2735 = vsel %vm2664, %v2233, %v2315
        %v2739 = vsel %vm2664, %v2234, %v2317
        %v2743 = vsel %vm2664, %v2235, %v2319
        %v2747 = vsel %vm2664, %v2236, %v2321
        %v2751 = vsel %vm2664, %v2237, %v2323
        %v2755 = vsel %vm2664, %v2238, %v2325
        %v2759 = vsel %vm2664, %v2239, %v2327
        %v2763 = vsel %vm2664, %v2240, %v2329
        %v2767 = vsel %vm2664, %v2241, %v2331
        %v2771 = vsel %vm2664, %v2242, %v2333
        %v2775 = vsel %vm2664, %v2243, %v2335
        %v2779 = vsel %vm2664, %v2244, %v2337
        %v2783 = vsel %vm2664, %v2245, %v2339
        %v2787 = vsel %vm2664, %v2246, %v2341
        %v2791 = vsel %vm2664, %v2247, %v2343
        %v2795 = vsel %vm2664, %v2376, %v2441
        %v2799 = vsel %vm2664, %v2377, %v2443
        %v2803 = vsel %vm2664, %v2378, %v2445
        %v2807 = vsel %vm2664, %v2379, %v2447
        %v2811 = vsel %vm2664, %v2380, %v2449
        %v2815 = vsel %vm2664, %v2381, %v2451
        %v2819 = vsel %vm2664, %v2382, %v2453
        %v2823 = vsel %vm2664, %v2383, %v2455
        %v2827 = vsel %vm2664, %v2384, %v2457
        %v2831 = vsel %vm2664, %v2385, %v2459
        %v2835 = vsel %vm2664, %v2386, %v2461
        %v2839 = vsel %vm2664, %v2387, %v2463
        %v2843 = vsel %vm2664, %v2388, %v2465
        %v2847 = vsel %vm2664, %v2389, %v2467
        %v2851 = vsel %vm2664, %v2390, %v2469
        %v2855 = vsel %vm2664, %v2391, %v2471
        %v2859 = vsel %vm2664, %v2520, %v2585
        %v2863 = vsel %vm2664, %v2521, %v2587
        %v2867 = vsel %vm2664, %v2522, %v2589
        %v2871 = vsel %vm2664, %v2523, %v2591
        %v2875 = vsel %vm2664, %v2524, %v2593
        %v2879 = vsel %vm2664, %v2525, %v2595
        %v2883 = vsel %vm2664, %v2526, %v2597
        %v2887 = vsel %vm2664, %v2527, %v2599
        %v2891 = vsel %vm2664, %v2528, %v2601
        %v2895 = vsel %vm2664, %v2529, %v2603
        %v2899 = vsel %vm2664, %v2530, %v2605
        %v2903 = vsel %vm2664, %v2531, %v2607
        %v2907 = vsel %vm2664, %v2532, %v2609
        %v2911 = vsel %vm2664, %v2533, %v2611
        %v2915 = vsel %vm2664, %v2534, %v2613
        %v2919 = vsel %vm2664, %v2535, %v2615
        %v2921 = vld [vmem:[%s1] sm:$0xff]
        %v2922 = vld [vmem:[%s1 + $0x8] sm:$0xff]
        %v2923 = vld [vmem:[%s1 + $0x10] sm:$0xff]
        %v2924 = vld [vmem:[%s1 + $0x18] sm:$0xff]
        %v2925 = vld [vmem:[%s1 + $0x20] sm:$0xff]
        %v2926 = vld [vmem:[%s1 + $0x28] sm:$0xff]
        %v2927 = vld [vmem:[%s1 + $0x30] sm:$0xff]
        %v2928 = vld [vmem:[%s1 + $0x38] sm:$0xff]
        %v2929 = vld [vmem:[%s1 + $0x40] sm:$0xff]
        %v2930 = vld [vmem:[%s1 + $0x48] sm:$0xff]
        %v2931 = vld [vmem:[%s1 + $0x50] sm:$0xff]
        %v2932 = vld [vmem:[%s1 + $0x58] sm:$0xff]
        %v2933 = vld [vmem:[%s1 + $0x60] sm:$0xff]
        %v2934 = vld [vmem:[%s1 + $0x68] sm:$0xff]
        %v2935 = vld [vmem:[%s1 + $0x70] sm:$0xff]
        %v2936 = vld [vmem:[%s1 + $0x78] sm:$0xff]
        %v2937 = vld [vmem:[%s1 + $0x80] sm:$0xff]
        %v2938 = vld [vmem:[%s1 + $0x88] sm:$0xff]
        %v2939 = vld [vmem:[%s1 + $0x90] sm:$0xff]
        %v2940 = vld [vmem:[%s1 + $0x98] sm:$0xff]
        %v2941 = vld [vmem:[%s1 + $0xa0] sm:$0xff]
        %v2942 = vld [vmem:[%s1 + $0xa8] sm:$0xff]
        %v2943 = vld [vmem:[%s1 + $0xb0] sm:$0xff]
        %v2944 = vld [vmem:[%s1 + $0xb8] sm:$0xff]
        %v2945 = vld [vmem:[%s1 + $0xc0] sm:$0xff]
        %v2946 = vld [vmem:[%s1 + $0xc8] sm:$0xff]
        %v2947 = vld [vmem:[%s1 + $0xd0] sm:$0xff]
        %v2948 = vld [vmem:[%s1 + $0xd8] sm:$0xff]
        %v2949 = vld [vmem:[%s1 + $0xe0] sm:$0xff]
        %v2950 = vld [vmem:[%s1 + $0xe8] sm:$0xff]
        %v2951 = vld [vmem:[%s1 + $0xf0] sm:$0xff]
        %v2952 = vld [vmem:[%s1 + $0xf8] sm:$0xff]
        %v2953 = vld [vmem:[%s1 + $0x100] sm:$0xff]
        %v2954 = vld [vmem:[%s1 + $0x108] sm:$0xff]
        %v2955 = vld [vmem:[%s1 + $0x110] sm:$0xff]
        %v2956 = vld [vmem:[%s1 + $0x118] sm:$0xff]
        %v2957 = vld [vmem:[%s1 + $0x120] sm:$0xff]
        %v2958 = vld [vmem:[%s1 + $0x128] sm:$0xff]
        %v2959 = vld [vmem:[%s1 + $0x130] sm:$0xff]
        %v2960 = vld [vmem:[%s1 + $0x138] sm:$0xff]
        %v2961 = vld [vmem:[%s1 + $0x140] sm:$0xff]
        %v2962 = vld [vmem:[%s1 + $0x148] sm:$0xff]
        %v2963 = vld [vmem:[%s1 + $0x150] sm:$0xff]
        %v2964 = vld [vmem:[%s1 + $0x158] sm:$0xff]
        %v2965 = vld [vmem:[%s1 + $0x160] sm:$0xff]
        %v2966 = vld [vmem:[%s1 + $0x168] sm:$0xff]
        %v2967 = vld [vmem:[%s1 + $0x170] sm:$0xff]
        %v2968 = vld [vmem:[%s1 + $0x178] sm:$0xff]
        %v2969 = vld [vmem:[%s1 + $0x180] sm:$0xff]
        %v2970 = vld [vmem:[%s1 + $0x188] sm:$0xff]
        %v2971 = vld [vmem:[%s1 + $0x190] sm:$0xff]
        %v2972 = vld [vmem:[%s1 + $0x198] sm:$0xff]
        %v2973 = vld [vmem:[%s1 + $0x1a0] sm:$0xff]
        %v2974 = vld [vmem:[%s1 + $0x1a8] sm:$0xff]
        %v2975 = vld [vmem:[%s1 + $0x1b0] sm:$0xff]
        %v2976 = vld [vmem:[%s1 + $0x1b8] sm:$0xff]
        %v2977 = vld [vmem:[%s1 + $0x1c0] sm:$0xff]
        %v2978 = vld [vmem:[%s1 + $0x1c8] sm:$0xff]
        %v2979 = vld [vmem:[%s1 + $0x1d0] sm:$0xff]
        %v2980 = vld [vmem:[%s1 + $0x1d8] sm:$0xff]
        %v2981 = vld [vmem:[%s1 + $0x1e0] sm:$0xff]
        %v2982 = vld [vmem:[%s1 + $0x1e8] sm:$0xff]
        %v2983 = vld [vmem:[%s1 + $0x1f0] sm:$0xff]
        %v2984 = vld [vmem:[%s1 + $0x1f8] sm:$0xff]
        %v2985 = vld [vmem:[%s1 + $0x200] sm:$0xff]
        %v2986 = vld [vmem:[%s1 + $0x208] sm:$0xff]
        %v2987 = vld [vmem:[%s1 + $0x210] sm:$0xff]
        %v2988 = vld [vmem:[%s1 + $0x218] sm:$0xff]
        %v2989 = vld [vmem:[%s1 + $0x220] sm:$0xff]
        %v2990 = vld [vmem:[%s1 + $0x228] sm:$0xff]
        %v2991 = vld [vmem:[%s1 + $0x230] sm:$0xff]
        %v2992 = vld [vmem:[%s1 + $0x238] sm:$0xff]
        %v2993 = vld [vmem:[%s2] sm:$0x3]
        %v2995 = vperm.slane %v2993, 0
        %v2996 = vperm.slane %v2993, 1
        %v3071 = vunpack.c.l.b16 %v2921
        %v3072 = vunpack.c.h.b16 %v2921
        %v3073 = vunpack.c.l.b16 %v2922
        %v3074 = vunpack.c.h.b16 %v2922
        %v3075 = vunpack.c.l.b16 %v2923
        %v3076 = vunpack.c.h.b16 %v2923
        %v3077 = vunpack.c.l.b16 %v2924
        %v3078 = vunpack.c.h.b16 %v2924
        %v3079 = vunpack.c.l.b16 %v2925
        %v3080 = vunpack.c.h.b16 %v2925
        %v3081 = vunpack.c.l.b16 %v2926
        %v3082 = vunpack.c.h.b16 %v2926
        %v3083 = vunpack.c.l.b16 %v2927
        %v3084 = vunpack.c.h.b16 %v2927
        %v3085 = vunpack.c.l.b16 %v2928
        %v3086 = vunpack.c.h.b16 %v2928
        %v3087 = vunpack.c.l.b16 %v2929
        %v3088 = vunpack.c.h.b16 %v2929
        %v3089 = vunpack.c.l.b16 %v2930
        %v3090 = vunpack.c.h.b16 %v2930
        %v3091 = vunpack.c.l.b16 %v2931
        %v3092 = vunpack.c.h.b16 %v2931
        %v3093 = vunpack.c.l.b16 %v2932
        %v3094 = vunpack.c.h.b16 %v2932
        %v3095 = vunpack.c.l.b16 %v2933
        %v3096 = vunpack.c.h.b16 %v2933
        %v3097 = vunpack.c.l.b16 %v2934
        %v3098 = vunpack.c.h.b16 %v2934
        %v3099 = vunpack.c.l.b16 %v2935
        %v3100 = vunpack.c.h.b16 %v2935
        %v3101 = vunpack.c.l.b16 %v2936
        %v3102 = vunpack.c.h.b16 %v2936
        %v3103 = vunpack.c.l.b16 %v2937
        %v3104 = vunpack.c.h.b16 %v2937
        %v3105 = vunpack.c.l.b16 %v2938
        %v3106 = vunpack.c.h.b16 %v2938
        %v3107 = vunpack.c.l.b16 %v2939
        %v3108 = vunpack.c.h.b16 %v2939
        %v3109 = vunpack.c.l.b16 %v2940
        %v3110 = vunpack.c.h.b16 %v2940
        %v3111 = vunpack.c.l.b16 %v2941
        %v3112 = vunpack.c.h.b16 %v2941
        %v3113 = vunpack.c.l.b16 %v2942
        %v3114 = vunpack.c.h.b16 %v2942
        %v3115 = vunpack.c.l.b16 %v2943
        %v3116 = vunpack.c.h.b16 %v2943
        %v3117 = vunpack.c.l.b16 %v2944
        %v3118 = vunpack.c.h.b16 %v2944
        %v3119 = vunpack.c.l.b16 %v2945
        %v3120 = vunpack.c.h.b16 %v2945
        %v3121 = vunpack.c.l.b16 %v2946
        %v3122 = vunpack.c.h.b16 %v2946
        %v3123 = vunpack.c.l.b16 %v2947
        %v3124 = vunpack.c.h.b16 %v2947
        %v3125 = vunpack.c.l.b16 %v2948
        %v3126 = vunpack.c.h.b16 %v2948
        %v3127 = vunpack.c.l.b16 %v2949
        %v3128 = vunpack.c.h.b16 %v2949
        %v3129 = vunpack.c.l.b16 %v2950
        %v3130 = vunpack.c.h.b16 %v2950
        %v3131 = vunpack.c.l.b16 %v2951
        %v3132 = vunpack.c.h.b16 %v2951
        %v3133 = vunpack.c.l.b16 %v2952
        %v3134 = vunpack.c.h.b16 %v2952
        %v3135 = vunpack.c.l.b16 %v2953
        %v3136 = vunpack.c.h.b16 %v2953
        %v3137 = vunpack.c.l.b16 %v2954
        %v3138 = vunpack.c.h.b16 %v2954
        %v3139 = vunpack.c.l.b16 %v2955
        %v3140 = vunpack.c.h.b16 %v2955
        %v3141 = vunpack.c.l.b16 %v2956
        %v3142 = vunpack.c.h.b16 %v2956
        %v3143 = vunpack.c.l.b16 %v2957
        %v3144 = vunpack.c.h.b16 %v2957
        %v3145 = vunpack.c.l.b16 %v2958
        %v3146 = vunpack.c.h.b16 %v2958
        %v3147 = vunpack.c.l.b16 %v2959
        %v3148 = vunpack.c.h.b16 %v2959
        %v3149 = vunpack.c.l.b16 %v2960
        %v3150 = vunpack.c.h.b16 %v2960
        %v3151 = vunpack.c.l.b16 %v2961
        %v3152 = vunpack.c.h.b16 %v2961
        %v3153 = vunpack.c.l.b16 %v2962
        %v3154 = vunpack.c.h.b16 %v2962
        %v3155 = vunpack.c.l.b16 %v2963
        %v3156 = vunpack.c.h.b16 %v2963
        %v3157 = vunpack.c.l.b16 %v2964
        %v3158 = vunpack.c.h.b16 %v2964
        %v3159 = vunpack.c.l.b16 %v2965
        %v3160 = vunpack.c.h.b16 %v2965
        %v3161 = vunpack.c.l.b16 %v2966
        %v3162 = vunpack.c.h.b16 %v2966
        %v3163 = vunpack.c.l.b16 %v2967
        %v3164 = vunpack.c.h.b16 %v2967
        %v3165 = vunpack.c.l.b16 %v2968
        %v3166 = vunpack.c.h.b16 %v2968
        %v3167 = vunpack.c.l.b16 %v2969
        %v3168 = vunpack.c.h.b16 %v2969
        %v3169 = vunpack.c.l.b16 %v2970
        %v3170 = vunpack.c.h.b16 %v2970
        %v3171 = vunpack.c.l.b16 %v2971
        %v3172 = vunpack.c.h.b16 %v2971
        %v3173 = vunpack.c.l.b16 %v2972
        %v3174 = vunpack.c.h.b16 %v2972
        %v3175 = vunpack.c.l.b16 %v2973
        %v3176 = vunpack.c.h.b16 %v2973
        %v3177 = vunpack.c.l.b16 %v2974
        %v3178 = vunpack.c.h.b16 %v2974
        %v3179 = vunpack.c.l.b16 %v2975
        %v3180 = vunpack.c.h.b16 %v2975
        %v3181 = vunpack.c.l.b16 %v2976
        %v3182 = vunpack.c.h.b16 %v2976
        %v3183 = vunpack.c.l.b16 %v2977
        %v3184 = vunpack.c.h.b16 %v2977
        %v3185 = vunpack.c.l.b16 %v2978
        %v3186 = vunpack.c.h.b16 %v2978
        %v3187 = vunpack.c.l.b16 %v2979
        %v3188 = vunpack.c.h.b16 %v2979
        %v3189 = vunpack.c.l.b16 %v2980
        %v3190 = vunpack.c.h.b16 %v2980
        %v3191 = vunpack.c.l.b16 %v2981
        %v3192 = vunpack.c.h.b16 %v2981
        %v3193 = vunpack.c.l.b16 %v2982
        %v3194 = vunpack.c.h.b16 %v2982
        %v3195 = vunpack.c.l.b16 %v2983
        %v3196 = vunpack.c.h.b16 %v2983
        %v3197 = vunpack.c.l.b16 %v2984
        %v3198 = vunpack.c.h.b16 %v2984
        %v3199 = vunpack.c.l.b16 %v2985
        %v3200 = vunpack.c.h.b16 %v2985
        %v3201 = vunpack.c.l.b16 %v2986
        %v3202 = vunpack.c.h.b16 %v2986
        %v3203 = vunpack.c.l.b16 %v2987
        %v3204 = vunpack.c.h.b16 %v2987
        %v3205 = vunpack.c.l.b16 %v2988
        %v3206 = vunpack.c.h.b16 %v2988
        %v3207 = vunpack.c.l.b16 %v2989
        %v3208 = vunpack.c.h.b16 %v2989
        %v3209 = vunpack.c.l.b16 %v2990
        %v3210 = vunpack.c.h.b16 %v2990
        %v3211 = vunpack.c.l.b16 %v2991
        %v3212 = vunpack.c.h.b16 %v2991
        %v3213 = vunpack.c.l.b16 %v2992
        %v3214 = vunpack.c.h.b16 %v2992
        %v3215 = vpack.c.b16 %v3073, %v3071
        %v3216 = vpack.c.b16 %v3074, %v3072
        %v3217 = vpack.c.b16 %v3077, %v3075
        %v3218 = vpack.c.b16 %v3078, %v3076
        %v3219 = vpack.c.b16 %v3081, %v3079
        %v3220 = vpack.c.b16 %v3082, %v3080
        %v3221 = vpack.c.b16 %v3085, %v3083
        %v3222 = vpack.c.b16 %v3086, %v3084
        %v3223 = vpack.c.b16 %v3089, %v3087
        %v3224 = vpack.c.b16 %v3090, %v3088
        %v3225 = vpack.c.b16 %v3093, %v3091
        %v3226 = vpack.c.b16 %v3094, %v3092
        %v3227 = vpack.c.b16 %v3097, %v3095
        %v3228 = vpack.c.b16 %v3098, %v3096
        %v3229 = vpack.c.b16 %v3101, %v3099
        %v3230 = vpack.c.b16 %v3102, %v3100
        %v3231 = vpack.c.b16 %v3105, %v3103
        %v3232 = vpack.c.b16 %v3106, %v3104
        %v3233 = vpack.c.b16 %v3109, %v3107
        %v3234 = vpack.c.b16 %v3110, %v3108
        %v3235 = vpack.c.b16 %v3113, %v3111
        %v3236 = vpack.c.b16 %v3114, %v3112
        %v3237 = vpack.c.b16 %v3117, %v3115
        %v3238 = vpack.c.b16 %v3118, %v3116
        %v3239 = vpack.c.b16 %v3121, %v3119
        %v3240 = vpack.c.b16 %v3122, %v3120
        %v3241 = vpack.c.b16 %v3125, %v3123
        %v3242 = vpack.c.b16 %v3126, %v3124
        %v3243 = vpack.c.b16 %v3129, %v3127
        %v3244 = vpack.c.b16 %v3130, %v3128
        %v3245 = vpack.c.b16 %v3133, %v3131
        %v3246 = vpack.c.b16 %v3134, %v3132
        %v3247 = vpack.c.b16 %v3137, %v3135
        %v3248 = vpack.c.b16 %v3138, %v3136
        %v3249 = vpack.c.b16 %v3141, %v3139
        %v3250 = vpack.c.b16 %v3142, %v3140
        %v3251 = vpack.c.b16 %v3145, %v3143
        %v3252 = vpack.c.b16 %v3146, %v3144
        %v3253 = vpack.c.b16 %v3149, %v3147
        %v3254 = vpack.c.b16 %v3150, %v3148
        %v3255 = vpack.c.b16 %v3153, %v3151
        %v3256 = vpack.c.b16 %v3154, %v3152
        %v3257 = vpack.c.b16 %v3157, %v3155
        %v3258 = vpack.c.b16 %v3158, %v3156
        %v3259 = vpack.c.b16 %v3161, %v3159
        %v3260 = vpack.c.b16 %v3162, %v3160
        %v3261 = vpack.c.b16 %v3165, %v3163
        %v3262 = vpack.c.b16 %v3166, %v3164
        %v3263 = vpack.c.b16 %v3169, %v3167
        %v3264 = vpack.c.b16 %v3170, %v3168
        %v3265 = vpack.c.b16 %v3173, %v3171
        %v3266 = vpack.c.b16 %v3174, %v3172
        %v3267 = vpack.c.b16 %v3177, %v3175
        %v3268 = vpack.c.b16 %v3178, %v3176
        %v3269 = vpack.c.b16 %v3181, %v3179
        %v3270 = vpack.c.b16 %v3182, %v3180
        %v3271 = vpack.c.b16 %v3185, %v3183
        %v3272 = vpack.c.b16 %v3186, %v3184
        %v3273 = vpack.c.b16 %v3189, %v3187
        %v3274 = vpack.c.b16 %v3190, %v3188
        %v3275 = vpack.c.b16 %v3193, %v3191
        %v3276 = vpack.c.b16 %v3194, %v3192
        %v3277 = vpack.c.b16 %v3197, %v3195
        %v3278 = vpack.c.b16 %v3198, %v3196
        %v3279 = vpack.c.b16 %v3201, %v3199
        %v3280 = vpack.c.b16 %v3202, %v3200
        %v3281 = vpack.c.b16 %v3205, %v3203
        %v3282 = vpack.c.b16 %v3206, %v3204
        %v3283 = vpack.c.b16 %v3209, %v3207
        %v3284 = vpack.c.b16 %v3210, %v3208
        %v3285 = vpack.c.b16 %v3213, %v3211
        %v3286 = vpack.c.b16 %v3214, %v3212
        %v3360 = vsel %vm2664, %v2648, 0
        %v3363 = vsel %vm2664, %v2649, 0
        %v3366 = vsel %vm2664, %v2650, 0
        %v3369 = vsel %vm2664, %v2651, 0
        %v3372 = vsel %vm2664, %v2652, 0
        %v3375 = vsel %vm2664, %v2653, 0
        %v3378 = vsel %vm2664, %v2654, 0
        %v3381 = vsel %vm2664, %v2655, 0
        %v3384 = vsel %vm2664, %v2656, 0
        %v3387 = vsel %vm2664, %v2657, 0
        %v3390 = vsel %vm2664, %v2658, 0
        %v3393 = vsel %vm2664, %v2659, 0
        %v3396 = vsel %vm2664, %v2660, 0
        %v3399 = vsel %vm2664, %v2661, 0
        %v3402 = vsel %vm2664, %v2662, 0
        %v3405 = vsel %vm2664, %v2663, 0
        %3407 = vmatpush.bf16.msra.mxu0 %v3229
        %3408 = vmatpush.bf16.msra.mxu0 %v3227
        %3409 = vmatpush.bf16.msra.mxu0 %v3225
        %3410 = vmatpush.bf16.msra.mxu0 %v3223
        %3411 = vmatpush.bf16.msra.mxu0 %v3221
        %3412 = vmatpush.bf16.msra.mxu0 %v3219
        %3413 = vmatpush.bf16.msra.mxu0 %v3217
        %3414 = vmatpush.bf16.msra.mxu0 %v3215
        %3415 = vmatmul.bf16.gmra.mxu0 %v2667
        %v3416 = vpop.f32.mrf.mxu0
        %v3417 = vadd.f32 %v2995, %v3416
        %v3418 = vpop.f32.mrf.mxu0
        %v3419 = vadd.f32 %v2995, %v3418
        %3420 = vmatmul.bf16.gmra.mxu0 %v2671
        %v3421 = vpop.f32.mrf.mxu0
        %v3422 = vadd.f32 %v2995, %v3421
        %v3423 = vpop.f32.mrf.mxu0
        %v3424 = vadd.f32 %v2995, %v3423
        %3425 = vmatmul.bf16.gmra.mxu0 %v2675
        %v3426 = vpop.f32.mrf.mxu0
        %v3427 = vadd.f32 %v2995, %v3426
        %v3428 = vpop.f32.mrf.mxu0
        %v3429 = vadd.f32 %v2995, %v3428
        %3430 = vmatmul.bf16.gmra.mxu0 %v2679
        %v3431 = vpop.f32.mrf.mxu0
        %v3432 = vadd.f32 %v2995, %v3431
        %v3433 = vpop.f32.mrf.mxu0
        %v3434 = vadd.f32 %v2995, %v3433
        %3435 = vmatmul.bf16.gmra.mxu0 %v2683
        %v3436 = vpop.f32.mrf.mxu0
        %v3437 = vadd.f32 %v2995, %v3436
        %v3438 = vpop.f32.mrf.mxu0
        %v3439 = vadd.f32 %v2995, %v3438
        %3440 = vmatmul.bf16.gmra.mxu0 %v2687
        %v3441 = vpop.f32.mrf.mxu0
        %v3442 = vadd.f32 %v2995, %v3441
        %v3443 = vpop.f32.mrf.mxu0
        %v3444 = vadd.f32 %v2995, %v3443
        %3445 = vmatmul.bf16.gmra.mxu0 %v2691
        %v3446 = vpop.f32.mrf.mxu0
        %v3447 = vadd.f32 %v2995, %v3446
        %v3448 = vpop.f32.mrf.mxu0
        %v3449 = vadd.f32 %v2995, %v3448
        %3450 = vmatmul.bf16.gmra.mxu0 %v2695
        %v3451 = vpop.f32.mrf.mxu0
        %v3452 = vadd.f32 %v2995, %v3451
        %v3453 = vpop.f32.mrf.mxu0
        %v3454 = vadd.f32 %v2995, %v3453
        %3455 = vmatmul.bf16.gmra.mxu0 %v2699
        %v3456 = vpop.f32.mrf.mxu0
        %v3457 = vadd.f32 %v2995, %v3456
        %v3458 = vpop.f32.mrf.mxu0
        %v3459 = vadd.f32 %v2995, %v3458
        %3460 = vmatmul.bf16.gmra.mxu0 %v2703
        %v3461 = vpop.f32.mrf.mxu0
        %v3462 = vadd.f32 %v2995, %v3461
        %v3463 = vpop.f32.mrf.mxu0
        %v3464 = vadd.f32 %v2995, %v3463
        %3465 = vmatmul.bf16.gmra.mxu0 %v2707
        %v3466 = vpop.f32.mrf.mxu0
        %v3467 = vadd.f32 %v2995, %v3466
        %v3468 = vpop.f32.mrf.mxu0
        %v3469 = vadd.f32 %v2995, %v3468
        %3470 = vmatmul.bf16.gmra.mxu0 %v2711
        %v3471 = vpop.f32.mrf.mxu0
        %v3472 = vadd.f32 %v2995, %v3471
        %v3473 = vpop.f32.mrf.mxu0
        %v3474 = vadd.f32 %v2995, %v3473
        %3475 = vmatmul.bf16.gmra.mxu0 %v2715
        %v3476 = vpop.f32.mrf.mxu0
        %v3477 = vadd.f32 %v2995, %v3476
        %v3478 = vpop.f32.mrf.mxu0
        %v3479 = vadd.f32 %v2995, %v3478
        %3480 = vmatmul.bf16.gmra.mxu0 %v2719
        %v3481 = vpop.f32.mrf.mxu0
        %v3482 = vadd.f32 %v2995, %v3481
        %v3483 = vpop.f32.mrf.mxu0
        %v3484 = vadd.f32 %v2995, %v3483
        %3485 = vmatmul.bf16.gmra.mxu0 %v2723
        %v3486 = vpop.f32.mrf.mxu0
        %v3487 = vadd.f32 %v2995, %v3486
        %v3488 = vpop.f32.mrf.mxu0
        %v3489 = vadd.f32 %v2995, %v3488
        %3490 = vmatmul.bf16.gmra.mxu0 %v2727
        %v3491 = vpop.f32.mrf.mxu0
        %v3492 = vadd.f32 %v2995, %v3491
        %v3493 = vpop.f32.mrf.mxu0
        %v3494 = vadd.f32 %v2995, %v3493
        %3495 = vdwg.mxu0
        %3496 = vmatpush.bf16.msra.mxu0 %v3245
        %3497 = vmatpush.bf16.msra.mxu0 %v3243
        %3498 = vmatpush.bf16.msra.mxu0 %v3241
        %3499 = vmatpush.bf16.msra.mxu0 %v3239
        %3500 = vmatpush.bf16.msra.mxu0 %v3237
        %3501 = vmatpush.bf16.msra.mxu0 %v3235
        %3502 = vmatpush.bf16.msra.mxu0 %v3233
        %3503 = vmatpush.bf16.msra.mxu0 %v3231
        %3504 = vmatmul.bf16.gmra.mxu0 %v2731
        %v3505 = vpop.f32.mrf.mxu0
        %v3506 = vadd.f32 %v3417, %v3505
        %v3507 = vpop.f32.mrf.mxu0
        %v3508 = vadd.f32 %v3419, %v3507
        %3509 = vmatmul.bf16.gmra.mxu0 %v2735
        %v3510 = vpop.f32.mrf.mxu0
        %v3511 = vadd.f32 %v3422, %v3510
        %v3512 = vpop.f32.mrf.mxu0
        %v3513 = vadd.f32 %v3424, %v3512
        %3514 = vmatmul.bf16.gmra.mxu0 %v2739
        %v3515 = vpop.f32.mrf.mxu0
        %v3516 = vadd.f32 %v3427, %v3515
        %v3517 = vpop.f32.mrf.mxu0
        %v3518 = vadd.f32 %v3429, %v3517
        %3519 = vmatmul.bf16.gmra.mxu0 %v2743
        %v3520 = vpop.f32.mrf.mxu0
        %v3521 = vadd.f32 %v3432, %v3520
        %v3522 = vpop.f32.mrf.mxu0
        %v3523 = vadd.f32 %v3434, %v3522
        %3524 = vmatmul.bf16.gmra.mxu0 %v2747
        %v3525 = vpop.f32.mrf.mxu0
        %v3526 = vadd.f32 %v3437, %v3525
        %v3527 = vpop.f32.mrf.mxu0
        %v3528 = vadd.f32 %v3439, %v3527
        %3529 = vmatmul.bf16.gmra.mxu0 %v2751
        %v3530 = vpop.f32.mrf.mxu0
        %v3531 = vadd.f32 %v3442, %v3530
        %v3532 = vpop.f32.mrf.mxu0
        %v3533 = vadd.f32 %v3444, %v3532
        %3534 = vmatmul.bf16.gmra.mxu0 %v2755
        %v3535 = vpop.f32.mrf.mxu0
        %v3536 = vadd.f32 %v3447, %v3535
        %v3537 = vpop.f32.mrf.mxu0
        %v3538 = vadd.f32 %v3449, %v3537
        %3539 = vmatmul.bf16.gmra.mxu0 %v2759
        %v3540 = vpop.f32.mrf.mxu0
        %v3541 = vadd.f32 %v3452, %v3540
        %v3542 = vpop.f32.mrf.mxu0
        %v3543 = vadd.f32 %v3454, %v3542
        %3544 = vmatmul.bf16.gmra.mxu0 %v2763
        %v3545 = vpop.f32.mrf.mxu0
        %v3546 = vadd.f32 %v3457, %v3545
        %v3547 = vpop.f32.mrf.mxu0
        %v3548 = vadd.f32 %v3459, %v3547
        %3549 = vmatmul.bf16.gmra.mxu0 %v2767
        %v3550 = vpop.f32.mrf.mxu0
        %v3551 = vadd.f32 %v3462, %v3550
        %v3552 = vpop.f32.mrf.mxu0
        %v3553 = vadd.f32 %v3464, %v3552
        %3554 = vmatmul.bf16.gmra.mxu0 %v2771
        %v3555 = vpop.f32.mrf.mxu0
        %v3556 = vadd.f32 %v3467, %v3555
        %v3557 = vpop.f32.mrf.mxu0
        %v3558 = vadd.f32 %v3469, %v3557
        %3559 = vmatmul.bf16.gmra.mxu0 %v2775
        %v3560 = vpop.f32.mrf.mxu0
        %v3561 = vadd.f32 %v3472, %v3560
        %v3562 = vpop.f32.mrf.mxu0
        %v3563 = vadd.f32 %v3474, %v3562
        %3564 = vmatmul.bf16.gmra.mxu0 %v2779
        %v3565 = vpop.f32.mrf.mxu0
        %v3566 = vadd.f32 %v3477, %v3565
        %v3567 = vpop.f32.mrf.mxu0
        %v3568 = vadd.f32 %v3479, %v3567
        %3569 = vmatmul.bf16.gmra.mxu0 %v2783
        %v3570 = vpop.f32.mrf.mxu0
        %v3571 = vadd.f32 %v3482, %v3570
        %v3572 = vpop.f32.mrf.mxu0
        %v3573 = vadd.f32 %v3484, %v3572
        %3574 = vmatmul.bf16.gmra.mxu0 %v2787
        %v3575 = vpop.f32.mrf.mxu0
        %v3576 = vadd.f32 %v3487, %v3575
        %v3577 = vpop.f32.mrf.mxu0
        %v3578 = vadd.f32 %v3489, %v3577
        %3579 = vmatmul.bf16.gmra.mxu0 %v2791
        %v3580 = vpop.f32.mrf.mxu0
        %v3581 = vadd.f32 %v3492, %v3580
        %v3582 = vpop.f32.mrf.mxu0
        %v3583 = vadd.f32 %v3494, %v3582
        %3584 = vdwg.mxu0
        %3585 = vmatpush.bf16.msra.mxu0 %v3261
        %3586 = vmatpush.bf16.msra.mxu0 %v3259
        %3587 = vmatpush.bf16.msra.mxu0 %v3257
        %3588 = vmatpush.bf16.msra.mxu0 %v3255
        %3589 = vmatpush.bf16.msra.mxu0 %v3253
        %3590 = vmatpush.bf16.msra.mxu0 %v3251
        %3591 = vmatpush.bf16.msra.mxu0 %v3249
        %3592 = vmatpush.bf16.msra.mxu0 %v3247
        %3593 = vmatmul.bf16.gmra.mxu0 %v2795
        %v3594 = vpop.f32.mrf.mxu0
        %v3595 = vadd.f32 %v3506, %v3594
        %v3596 = vpop.f32.mrf.mxu0
        %v3597 = vadd.f32 %v3508, %v3596
        %3598 = vmatmul.bf16.gmra.mxu0 %v2799
        %v3599 = vpop.f32.mrf.mxu0
        %v3600 = vadd.f32 %v3511, %v3599
        %v3601 = vpop.f32.mrf.mxu0
        %v3602 = vadd.f32 %v3513, %v3601
        %3603 = vmatmul.bf16.gmra.mxu0 %v2803
        %v3604 = vpop.f32.mrf.mxu0
        %v3605 = vadd.f32 %v3516, %v3604
        %v3606 = vpop.f32.mrf.mxu0
        %v3607 = vadd.f32 %v3518, %v3606
        %3608 = vmatmul.bf16.gmra.mxu0 %v2807
        %v3609 = vpop.f32.mrf.mxu0
        %v3610 = vadd.f32 %v3521, %v3609
        %v3611 = vpop.f32.mrf.mxu0
        %v3612 = vadd.f32 %v3523, %v3611
        %3613 = vmatmul.bf16.gmra.mxu0 %v2811
        %v3614 = vpop.f32.mrf.mxu0
        %v3615 = vadd.f32 %v3526, %v3614
        %v3616 = vpop.f32.mrf.mxu0
        %v3617 = vadd.f32 %v3528, %v3616
        %3618 = vmatmul.bf16.gmra.mxu0 %v2815
        %v3619 = vpop.f32.mrf.mxu0
        %v3620 = vadd.f32 %v3531, %v3619
        %v3621 = vpop.f32.mrf.mxu0
        %v3622 = vadd.f32 %v3533, %v3621
        %3623 = vmatmul.bf16.gmra.mxu0 %v2819
        %v3624 = vpop.f32.mrf.mxu0
        %v3625 = vadd.f32 %v3536, %v3624
        %v3626 = vpop.f32.mrf.mxu0
        %v3627 = vadd.f32 %v3538, %v3626
        %3628 = vmatmul.bf16.gmra.mxu0 %v2823
        %v3629 = vpop.f32.mrf.mxu0
        %v3630 = vadd.f32 %v3541, %v3629
        %v3631 = vpop.f32.mrf.mxu0
        %v3632 = vadd.f32 %v3543, %v3631
        %3633 = vmatmul.bf16.gmra.mxu0 %v2827
        %v3634 = vpop.f32.mrf.mxu0
        %v3635 = vadd.f32 %v3546, %v3634
        %v3636 = vpop.f32.mrf.mxu0
        %v3637 = vadd.f32 %v3548, %v3636
        %3638 = vmatmul.bf16.gmra.mxu0 %v2831
        %v3639 = vpop.f32.mrf.mxu0
        %v3640 = vadd.f32 %v3551, %v3639
        %v3641 = vpop.f32.mrf.mxu0
        %v3642 = vadd.f32 %v3553, %v3641
        %3643 = vmatmul.bf16.gmra.mxu0 %v2835
        %v3644 = vpop.f32.mrf.mxu0
        %v3645 = vadd.f32 %v3556, %v3644
        %v3646 = vpop.f32.mrf.mxu0
        %v3647 = vadd.f32 %v3558, %v3646
        %3648 = vmatmul.bf16.gmra.mxu0 %v2839
        %v3649 = vpop.f32.mrf.mxu0
        %v3650 = vadd.f32 %v3561, %v3649
        %v3651 = vpop.f32.mrf.mxu0
        %v3652 = vadd.f32 %v3563, %v3651
        %3653 = vmatmul.bf16.gmra.mxu0 %v2843
        %v3654 = vpop.f32.mrf.mxu0
        %v3655 = vadd.f32 %v3566, %v3654
        %v3656 = vpop.f32.mrf.mxu0
        %v3657 = vadd.f32 %v3568, %v3656
        %3658 = vmatmul.bf16.gmra.mxu0 %v2847
        %v3659 = vpop.f32.mrf.mxu0
        %v3660 = vadd.f32 %v3571, %v3659
        %v3661 = vpop.f32.mrf.mxu0
        %v3662 = vadd.f32 %v3573, %v3661
        %3663 = vmatmul.bf16.gmra.mxu0 %v2851
        %v3664 = vpop.f32.mrf.mxu0
        %v3665 = vadd.f32 %v3576, %v3664
        %v3666 = vpop.f32.mrf.mxu0
        %v3667 = vadd.f32 %v3578, %v3666
        %3668 = vmatmul.bf16.gmra.mxu0 %v2855
        %v3669 = vpop.f32.mrf.mxu0
        %v3670 = vadd.f32 %v3581, %v3669
        %v3671 = vpop.f32.mrf.mxu0
        %v3672 = vadd.f32 %v3583, %v3671
        %3673 = vdwg.mxu0
        %3674 = vmatpush.bf16.msra.mxu0 %v3277
        %3675 = vmatpush.bf16.msra.mxu0 %v3275
        %3676 = vmatpush.bf16.msra.mxu0 %v3273
        %3677 = vmatpush.bf16.msra.mxu0 %v3271
        %3678 = vmatpush.bf16.msra.mxu0 %v3269
        %3679 = vmatpush.bf16.msra.mxu0 %v3267
        %3680 = vmatpush.bf16.msra.mxu0 %v3265
        %3681 = vmatpush.bf16.msra.mxu0 %v3263
        %3682 = vmatmul.bf16.gmra.mxu0 %v2859
        %v3683 = vpop.f32.mrf.mxu0
        %v3684 = vadd.f32 %v3595, %v3683
        %v3685 = vpop.f32.mrf.mxu0
        %v3686 = vadd.f32 %v3597, %v3685
        %3687 = vmatmul.bf16.gmra.mxu0 %v2863
        %v3688 = vpop.f32.mrf.mxu0
        %v3689 = vadd.f32 %v3600, %v3688
        %v3690 = vpop.f32.mrf.mxu0
        %v3691 = vadd.f32 %v3602, %v3690
        %3692 = vmatmul.bf16.gmra.mxu0 %v2867
        %v3693 = vpop.f32.mrf.mxu0
        %v3694 = vadd.f32 %v3605, %v3693
        %v3695 = vpop.f32.mrf.mxu0
        %v3696 = vadd.f32 %v3607, %v3695
        %3697 = vmatmul.bf16.gmra.mxu0 %v2871
        %v3698 = vpop.f32.mrf.mxu0
        %v3699 = vadd.f32 %v3610, %v3698
        %v3700 = vpop.f32.mrf.mxu0
        %v3701 = vadd.f32 %v3612, %v3700
        %3702 = vmatmul.bf16.gmra.mxu0 %v2875
        %v3703 = vpop.f32.mrf.mxu0
        %v3704 = vadd.f32 %v3615, %v3703
        %v3705 = vpop.f32.mrf.mxu0
        %v3706 = vadd.f32 %v3617, %v3705
        %3707 = vmatmul.bf16.gmra.mxu0 %v2879
        %v3708 = vpop.f32.mrf.mxu0
        %v3709 = vadd.f32 %v3620, %v3708
        %v3710 = vpop.f32.mrf.mxu0
        %v3711 = vadd.f32 %v3622, %v3710
        %3712 = vmatmul.bf16.gmra.mxu0 %v2883
        %v3713 = vpop.f32.mrf.mxu0
        %v3714 = vadd.f32 %v3625, %v3713
        %v3715 = vpop.f32.mrf.mxu0
        %v3716 = vadd.f32 %v3627, %v3715
        %3717 = vmatmul.bf16.gmra.mxu0 %v2887
        %v3718 = vpop.f32.mrf.mxu0
        %v3719 = vadd.f32 %v3630, %v3718
        %v3720 = vpop.f32.mrf.mxu0
        %v3721 = vadd.f32 %v3632, %v3720
        %3722 = vmatmul.bf16.gmra.mxu0 %v2891
        %v3723 = vpop.f32.mrf.mxu0
        %v3724 = vadd.f32 %v3635, %v3723
        %v3725 = vpop.f32.mrf.mxu0
        %v3726 = vadd.f32 %v3637, %v3725
        %3727 = vmatmul.bf16.gmra.mxu0 %v2895
        %v3728 = vpop.f32.mrf.mxu0
        %v3729 = vadd.f32 %v3640, %v3728
        %v3730 = vpop.f32.mrf.mxu0
        %v3731 = vadd.f32 %v3642, %v3730
        %3732 = vmatmul.bf16.gmra.mxu0 %v2899
        %v3733 = vpop.f32.mrf.mxu0
        %v3734 = vadd.f32 %v3645, %v3733
        %v3735 = vpop.f32.mrf.mxu0
        %v3736 = vadd.f32 %v3647, %v3735
        %3737 = vmatmul.bf16.gmra.mxu0 %v2903
        %v3738 = vpop.f32.mrf.mxu0
        %v3739 = vadd.f32 %v3650, %v3738
        %v3740 = vpop.f32.mrf.mxu0
        %v3741 = vadd.f32 %v3652, %v3740
        %3742 = vmatmul.bf16.gmra.mxu0 %v2907
        %v3743 = vpop.f32.mrf.mxu0
        %v3744 = vadd.f32 %v3655, %v3743
        %v3745 = vpop.f32.mrf.mxu0
        %v3746 = vadd.f32 %v3657, %v3745
        %3747 = vmatmul.bf16.gmra.mxu0 %v2911
        %v3748 = vpop.f32.mrf.mxu0
        %v3749 = vadd.f32 %v3660, %v3748
        %v3750 = vpop.f32.mrf.mxu0
        %v3751 = vadd.f32 %v3662, %v3750
        %3752 = vmatmul.bf16.gmra.mxu0 %v2915
        %v3753 = vpop.f32.mrf.mxu0
        %v3754 = vadd.f32 %v3665, %v3753
        %v3755 = vpop.f32.mrf.mxu0
        %v3756 = vadd.f32 %v3667, %v3755
        %3757 = vmatmul.bf16.gmra.mxu0 %v2919
        %v3758 = vpop.f32.mrf.mxu0
        %v3759 = vadd.f32 %v3670, %v3758
        %v3760 = vpop.f32.mrf.mxu0
        %v3761 = vadd.f32 %v3672, %v3760
        %3762 = vdwg.mxu0
        %3763 = vmatpush.bf16.msra.mxu0 0
        %3764 = vmatpush.bf16.msra.mxu0 0
        %3765 = vmatpush.bf16.msra.mxu0 0
        %3766 = vmatpush.bf16.msra.mxu0 0
        %3767 = vmatpush.bf16.msra.mxu0 %v3285
        %3768 = vmatpush.bf16.msra.mxu0 %v3283
        %3769 = vmatpush.bf16.msra.mxu0 %v3281
        %3770 = vmatpush.bf16.msra.mxu0 %v3279
        %3771 = vmatmul.bf16.gmra.mxu0 %v3360
        %v3772 = vpop.f32.mrf.mxu0
        %v3773 = vadd.f32 %v3684, %v3772
        %v3774 = vpop.f32.mrf.mxu0
        %v3775 = vadd.f32 %v3686, %v3774
        %3776 = vmatmul.bf16.gmra.mxu0 %v3363
        %v3777 = vpop.f32.mrf.mxu0
        %v3778 = vadd.f32 %v3689, %v3777
        %v3779 = vpop.f32.mrf.mxu0
        %v3780 = vadd.f32 %v3691, %v3779
        %3781 = vmatmul.bf16.gmra.mxu0 %v3366
        %v3782 = vpop.f32.mrf.mxu0
        %v3783 = vadd.f32 %v3694, %v3782
        %v3784 = vpop.f32.mrf.mxu0
        %v3785 = vadd.f32 %v3696, %v3784
        %3786 = vmatmul.bf16.gmra.mxu0 %v3369
        %v3787 = vpop.f32.mrf.mxu0
        %v3788 = vadd.f32 %v3699, %v3787
        %v3789 = vpop.f32.mrf.mxu0
        %v3790 = vadd.f32 %v3701, %v3789
        %3791 = vmatmul.bf16.gmra.mxu0 %v3372
        %v3792 = vpop.f32.mrf.mxu0
        %v3793 = vadd.f32 %v3704, %v3792
        %v3794 = vpop.f32.mrf.mxu0
        %v3795 = vadd.f32 %v3706, %v3794
        %3796 = vmatmul.bf16.gmra.mxu0 %v3375
        %v3797 = vpop.f32.mrf.mxu0
        %v3798 = vadd.f32 %v3709, %v3797
        %v3799 = vpop.f32.mrf.mxu0
        %v3800 = vadd.f32 %v3711, %v3799
        %3801 = vmatmul.bf16.gmra.mxu0 %v3378
        %v3802 = vpop.f32.mrf.mxu0
        %v3803 = vadd.f32 %v3714, %v3802
        %v3804 = vpop.f32.mrf.mxu0
        %v3805 = vadd.f32 %v3716, %v3804
        %3806 = vmatmul.bf16.gmra.mxu0 %v3381
        %v3807 = vpop.f32.mrf.mxu0
        %v3808 = vadd.f32 %v3719, %v3807
        %v3809 = vpop.f32.mrf.mxu0
        %v3810 = vadd.f32 %v3721, %v3809
        %3811 = vmatmul.bf16.gmra.mxu0 %v3384
        %v3812 = vpop.f32.mrf.mxu0
        %v3813 = vadd.f32 %v3724, %v3812
        %v3814 = vpop.f32.mrf.mxu0
        %v3815 = vadd.f32 %v3726, %v3814
        %3816 = vmatmul.bf16.gmra.mxu0 %v3387
        %v3817 = vpop.f32.mrf.mxu0
        %v3818 = vadd.f32 %v3729, %v3817
        %v3819 = vpop.f32.mrf.mxu0
        %v3820 = vadd.f32 %v3731, %v3819
        %3821 = vmatmul.bf16.gmra.mxu0 %v3390
        %v3822 = vpop.f32.mrf.mxu0
        %v3823 = vadd.f32 %v3734, %v3822
        %v3824 = vpop.f32.mrf.mxu0
        %v3825 = vadd.f32 %v3736, %v3824
        %3826 = vmatmul.bf16.gmra.mxu0 %v3393
        %v3827 = vpop.f32.mrf.mxu0
        %v3828 = vadd.f32 %v3739, %v3827
        %v3829 = vpop.f32.mrf.mxu0
        %v3830 = vadd.f32 %v3741, %v3829
        %3831 = vmatmul.bf16.gmra.mxu0 %v3396
        %v3832 = vpop.f32.mrf.mxu0
        %v3833 = vadd.f32 %v3744, %v3832
        %v3834 = vpop.f32.mrf.mxu0
        %v3835 = vadd.f32 %v3746, %v3834
        %3836 = vmatmul.bf16.gmra.mxu0 %v3399
        %v3837 = vpop.f32.mrf.mxu0
        %v3838 = vadd.f32 %v3749, %v3837
        %v3839 = vpop.f32.mrf.mxu0
        %v3840 = vadd.f32 %v3751, %v3839
        %3841 = vmatmul.bf16.gmra.mxu0 %v3402
        %v3842 = vpop.f32.mrf.mxu0
        %v3843 = vadd.f32 %v3754, %v3842
        %v3844 = vpop.f32.mrf.mxu0
        %v3845 = vadd.f32 %v3756, %v3844
        %3846 = vmatmul.bf16.gmra.mxu0 %v3405
        %v3847 = vpop.f32.mrf.mxu0
        %v3848 = vadd.f32 %v3759, %v3847
        %v3849 = vpop.f32.mrf.mxu0
        %v3850 = vadd.f32 %v3761, %v3849
        %3851 = vdwg.mxu0
        %3852 = vmatpush.bf16.msra.mxu0 %v3230
        %3853 = vmatpush.bf16.msra.mxu0 %v3228
        %3854 = vmatpush.bf16.msra.mxu0 %v3226
        %3855 = vmatpush.bf16.msra.mxu0 %v3224
        %3856 = vmatpush.bf16.msra.mxu0 %v3222
        %3857 = vmatpush.bf16.msra.mxu0 %v3220
        %3858 = vmatpush.bf16.msra.mxu0 %v3218
        %3859 = vmatpush.bf16.msra.mxu0 %v3216
        %3860 = vmatmul.bf16.gmra.mxu0 %v2667
        %v3861 = vpop.f32.mrf.mxu0
        %v3862 = vadd.f32 %v2996, %v3861
        %v3863 = vpop.f32.mrf.mxu0
        %v3864 = vadd.f32 %v2996, %v3863
        %3865 = vmatmul.bf16.gmra.mxu0 %v2671
        %v3866 = vpop.f32.mrf.mxu0
        %v3867 = vadd.f32 %v2996, %v3866
        %v3868 = vpop.f32.mrf.mxu0
        %v3869 = vadd.f32 %v2996, %v3868
        %3870 = vmatmul.bf16.gmra.mxu0 %v2675
        %v3871 = vpop.f32.mrf.mxu0
        %v3872 = vadd.f32 %v2996, %v3871
        %v3873 = vpop.f32.mrf.mxu0
        %v3874 = vadd.f32 %v2996, %v3873
        %3875 = vmatmul.bf16.gmra.mxu0 %v2679
        %v3876 = vpop.f32.mrf.mxu0
        %v3877 = vadd.f32 %v2996, %v3876
        %v3878 = vpop.f32.mrf.mxu0
        %v3879 = vadd.f32 %v2996, %v3878
        %3880 = vmatmul.bf16.gmra.mxu0 %v2683
        %v3881 = vpop.f32.mrf.mxu0
        %v3882 = vadd.f32 %v2996, %v3881
        %v3883 = vpop.f32.mrf.mxu0
        %v3884 = vadd.f32 %v2996, %v3883
        %3885 = vmatmul.bf16.gmra.mxu0 %v2687
        %v3886 = vpop.f32.mrf.mxu0
        %v3887 = vadd.f32 %v2996, %v3886
        %v3888 = vpop.f32.mrf.mxu0
        %v3889 = vadd.f32 %v2996, %v3888
        %3890 = vmatmul.bf16.gmra.mxu0 %v2691
        %v3891 = vpop.f32.mrf.mxu0
        %v3892 = vadd.f32 %v2996, %v3891
        %v3893 = vpop.f32.mrf.mxu0
        %v3894 = vadd.f32 %v2996, %v3893
        %3895 = vmatmul.bf16.gmra.mxu0 %v2695
        %v3896 = vpop.f32.mrf.mxu0
        %v3897 = vadd.f32 %v2996, %v3896
        %v3898 = vpop.f32.mrf.mxu0
        %v3899 = vadd.f32 %v2996, %v3898
        %3900 = vmatmul.bf16.gmra.mxu0 %v2699
        %v3901 = vpop.f32.mrf.mxu0
        %v3902 = vadd.f32 %v2996, %v3901
        %v3903 = vpop.f32.mrf.mxu0
        %v3904 = vadd.f32 %v2996, %v3903
        %3905 = vmatmul.bf16.gmra.mxu0 %v2703
        %v3906 = vpop.f32.mrf.mxu0
        %v3907 = vadd.f32 %v2996, %v3906
        %v3908 = vpop.f32.mrf.mxu0
        %v3909 = vadd.f32 %v2996, %v3908
        %3910 = vmatmul.bf16.gmra.mxu0 %v2707
        %v3911 = vpop.f32.mrf.mxu0
        %v3912 = vadd.f32 %v2996, %v3911
        %v3913 = vpop.f32.mrf.mxu0
        %v3914 = vadd.f32 %v2996, %v3913
        %3915 = vmatmul.bf16.gmra.mxu0 %v2711
        %v3916 = vpop.f32.mrf.mxu0
        %v3917 = vadd.f32 %v2996, %v3916
        %v3918 = vpop.f32.mrf.mxu0
        %v3919 = vadd.f32 %v2996, %v3918
        %3920 = vmatmul.bf16.gmra.mxu0 %v2715
        %v3921 = vpop.f32.mrf.mxu0
        %v3922 = vadd.f32 %v2996, %v3921
        %v3923 = vpop.f32.mrf.mxu0
        %v3924 = vadd.f32 %v2996, %v3923
        %3925 = vmatmul.bf16.gmra.mxu0 %v2719
        %v3926 = vpop.f32.mrf.mxu0
        %v3927 = vadd.f32 %v2996, %v3926
        %v3928 = vpop.f32.mrf.mxu0
        %v3929 = vadd.f32 %v2996, %v3928
        %3930 = vmatmul.bf16.gmra.mxu0 %v2723
        %v3931 = vpop.f32.mrf.mxu0
        %v3932 = vadd.f32 %v2996, %v3931
        %v3933 = vpop.f32.mrf.mxu0
        %v3934 = vadd.f32 %v2996, %v3933
        %3935 = vmatmul.bf16.gmra.mxu0 %v2727
        %v3936 = vpop.f32.mrf.mxu0
        %v3937 = vadd.f32 %v2996, %v3936
        %v3938 = vpop.f32.mrf.mxu0
        %v3939 = vadd.f32 %v2996, %v3938
        %3940 = vdwg.mxu0
        %3941 = vmatpush.bf16.msra.mxu0 %v3246
        %3942 = vmatpush.bf16.msra.mxu0 %v3244
        %3943 = vmatpush.bf16.msra.mxu0 %v3242
        %3944 = vmatpush.bf16.msra.mxu0 %v3240
        %3945 = vmatpush.bf16.msra.mxu0 %v3238
        %3946 = vmatpush.bf16.msra.mxu0 %v3236
        %3947 = vmatpush.bf16.msra.mxu0 %v3234
        %3948 = vmatpush.bf16.msra.mxu0 %v3232
        %3949 = vmatmul.bf16.gmra.mxu0 %v2731
        %v3950 = vpop.f32.mrf.mxu0
        %v3951 = vadd.f32 %v3862, %v3950
        %v3952 = vpop.f32.mrf.mxu0
        %v3953 = vadd.f32 %v3864, %v3952
        %3954 = vmatmul.bf16.gmra.mxu0 %v2735
        %v3955 = vpop.f32.mrf.mxu0
        %v3956 = vadd.f32 %v3867, %v3955
        %v3957 = vpop.f32.mrf.mxu0
        %v3958 = vadd.f32 %v3869, %v3957
        %3959 = vmatmul.bf16.gmra.mxu0 %v2739
        %v3960 = vpop.f32.mrf.mxu0
        %v3961 = vadd.f32 %v3872, %v3960
        %v3962 = vpop.f32.mrf.mxu0
        %v3963 = vadd.f32 %v3874, %v3962
        %3964 = vmatmul.bf16.gmra.mxu0 %v2743
        %v3965 = vpop.f32.mrf.mxu0
        %v3966 = vadd.f32 %v3877, %v3965
        %v3967 = vpop.f32.mrf.mxu0
        %v3968 = vadd.f32 %v3879, %v3967
        %3969 = vmatmul.bf16.gmra.mxu0 %v2747
        %v3970 = vpop.f32.mrf.mxu0
        %v3971 = vadd.f32 %v3882, %v3970
        %v3972 = vpop.f32.mrf.mxu0
        %v3973 = vadd.f32 %v3884, %v3972
        %3974 = vmatmul.bf16.gmra.mxu0 %v2751
        %v3975 = vpop.f32.mrf.mxu0
        %v3976 = vadd.f32 %v3887, %v3975
        %v3977 = vpop.f32.mrf.mxu0
        %v3978 = vadd.f32 %v3889, %v3977
        %3979 = vmatmul.bf16.gmra.mxu0 %v2755
        %v3980 = vpop.f32.mrf.mxu0
        %v3981 = vadd.f32 %v3892, %v3980
        %v3982 = vpop.f32.mrf.mxu0
        %v3983 = vadd.f32 %v3894, %v3982
        %3984 = vmatmul.bf16.gmra.mxu0 %v2759
        %v3985 = vpop.f32.mrf.mxu0
        %v3986 = vadd.f32 %v3897, %v3985
        %v3987 = vpop.f32.mrf.mxu0
        %v3988 = vadd.f32 %v3899, %v3987
        %3989 = vmatmul.bf16.gmra.mxu0 %v2763
        %v3990 = vpop.f32.mrf.mxu0
        %v3991 = vadd.f32 %v3902, %v3990
        %v3992 = vpop.f32.mrf.mxu0
        %v3993 = vadd.f32 %v3904, %v3992
        %3994 = vmatmul.bf16.gmra.mxu0 %v2767
        %v3995 = vpop.f32.mrf.mxu0
        %v3996 = vadd.f32 %v3907, %v3995
        %v3997 = vpop.f32.mrf.mxu0
        %v3998 = vadd.f32 %v3909, %v3997
        %3999 = vmatmul.bf16.gmra.mxu0 %v2771
        %v4000 = vpop.f32.mrf.mxu0
        %v4001 = vadd.f32 %v3912, %v4000
        %v4002 = vpop.f32.mrf.mxu0
        %v4003 = vadd.f32 %v3914, %v4002
        %4004 = vmatmul.bf16.gmra.mxu0 %v2775
        %v4005 = vpop.f32.mrf.mxu0
        %v4006 = vadd.f32 %v3917, %v4005
        %v4007 = vpop.f32.mrf.mxu0
        %v4008 = vadd.f32 %v3919, %v4007
        %4009 = vmatmul.bf16.gmra.mxu0 %v2779
        %v4010 = vpop.f32.mrf.mxu0
        %v4011 = vadd.f32 %v3922, %v4010
        %v4012 = vpop.f32.mrf.mxu0
        %v4013 = vadd.f32 %v3924, %v4012
        %4014 = vmatmul.bf16.gmra.mxu0 %v2783
        %v4015 = vpop.f32.mrf.mxu0
        %v4016 = vadd.f32 %v3927, %v4015
        %v4017 = vpop.f32.mrf.mxu0
        %v4018 = vadd.f32 %v3929, %v4017
        %4019 = vmatmul.bf16.gmra.mxu0 %v2787
        %v4020 = vpop.f32.mrf.mxu0
        %v4021 = vadd.f32 %v3932, %v4020
        %v4022 = vpop.f32.mrf.mxu0
        %v4023 = vadd.f32 %v3934, %v4022
        %4024 = vmatmul.bf16.gmra.mxu0 %v2791
        %v4025 = vpop.f32.mrf.mxu0
        %v4026 = vadd.f32 %v3937, %v4025
        %v4027 = vpop.f32.mrf.mxu0
        %v4028 = vadd.f32 %v3939, %v4027
        %4029 = vdwg.mxu0
        %4030 = vmatpush.bf16.msra.mxu0 %v3262
        %4031 = vmatpush.bf16.msra.mxu0 %v3260
        %4032 = vmatpush.bf16.msra.mxu0 %v3258
        %4033 = vmatpush.bf16.msra.mxu0 %v3256
        %4034 = vmatpush.bf16.msra.mxu0 %v3254
        %4035 = vmatpush.bf16.msra.mxu0 %v3252
        %4036 = vmatpush.bf16.msra.mxu0 %v3250
        %4037 = vmatpush.bf16.msra.mxu0 %v3248
        %4038 = vmatmul.bf16.gmra.mxu0 %v2795
        %v4039 = vpop.f32.mrf.mxu0
        %v4040 = vadd.f32 %v3951, %v4039
        %v4041 = vpop.f32.mrf.mxu0
        %v4042 = vadd.f32 %v3953, %v4041
        %4043 = vmatmul.bf16.gmra.mxu0 %v2799
        %v4044 = vpop.f32.mrf.mxu0
        %v4045 = vadd.f32 %v3956, %v4044
        %v4046 = vpop.f32.mrf.mxu0
        %v4047 = vadd.f32 %v3958, %v4046
        %4048 = vmatmul.bf16.gmra.mxu0 %v2803
        %v4049 = vpop.f32.mrf.mxu0
        %v4050 = vadd.f32 %v3961, %v4049
        %v4051 = vpop.f32.mrf.mxu0
        %v4052 = vadd.f32 %v3963, %v4051
        %4053 = vmatmul.bf16.gmra.mxu0 %v2807
        %v4054 = vpop.f32.mrf.mxu0
        %v4055 = vadd.f32 %v3966, %v4054
        %v4056 = vpop.f32.mrf.mxu0
        %v4057 = vadd.f32 %v3968, %v4056
        %4058 = vmatmul.bf16.gmra.mxu0 %v2811
        %v4059 = vpop.f32.mrf.mxu0
        %v4060 = vadd.f32 %v3971, %v4059
        %v4061 = vpop.f32.mrf.mxu0
        %v4062 = vadd.f32 %v3973, %v4061
        %4063 = vmatmul.bf16.gmra.mxu0 %v2815
        %v4064 = vpop.f32.mrf.mxu0
        %v4065 = vadd.f32 %v3976, %v4064
        %v4066 = vpop.f32.mrf.mxu0
        %v4067 = vadd.f32 %v3978, %v4066
        %4068 = vmatmul.bf16.gmra.mxu0 %v2819
        %v4069 = vpop.f32.mrf.mxu0
        %v4070 = vadd.f32 %v3981, %v4069
        %v4071 = vpop.f32.mrf.mxu0
        %v4072 = vadd.f32 %v3983, %v4071
        %4073 = vmatmul.bf16.gmra.mxu0 %v2823
        %v4074 = vpop.f32.mrf.mxu0
        %v4075 = vadd.f32 %v3986, %v4074
        %v4076 = vpop.f32.mrf.mxu0
        %v4077 = vadd.f32 %v3988, %v4076
        %4078 = vmatmul.bf16.gmra.mxu0 %v2827
        %v4079 = vpop.f32.mrf.mxu0
        %v4080 = vadd.f32 %v3991, %v4079
        %v4081 = vpop.f32.mrf.mxu0
        %v4082 = vadd.f32 %v3993, %v4081
        %4083 = vmatmul.bf16.gmra.mxu0 %v2831
        %v4084 = vpop.f32.mrf.mxu0
        %v4085 = vadd.f32 %v3996, %v4084
        %v4086 = vpop.f32.mrf.mxu0
        %v4087 = vadd.f32 %v3998, %v4086
        %4088 = vmatmul.bf16.gmra.mxu0 %v2835
        %v4089 = vpop.f32.mrf.mxu0
        %v4090 = vadd.f32 %v4001, %v4089
        %v4091 = vpop.f32.mrf.mxu0
        %v4092 = vadd.f32 %v4003, %v4091
        %4093 = vmatmul.bf16.gmra.mxu0 %v2839
        %v4094 = vpop.f32.mrf.mxu0
        %v4095 = vadd.f32 %v4006, %v4094
        %v4096 = vpop.f32.mrf.mxu0
        %v4097 = vadd.f32 %v4008, %v4096
        %4098 = vmatmul.bf16.gmra.mxu0 %v2843
        %v4099 = vpop.f32.mrf.mxu0
        %v4100 = vadd.f32 %v4011, %v4099
        %v4101 = vpop.f32.mrf.mxu0
        %v4102 = vadd.f32 %v4013, %v4101
        %4103 = vmatmul.bf16.gmra.mxu0 %v2847
        %v4104 = vpop.f32.mrf.mxu0
        %v4105 = vadd.f32 %v4016, %v4104
        %v4106 = vpop.f32.mrf.mxu0
        %v4107 = vadd.f32 %v4018, %v4106
        %4108 = vmatmul.bf16.gmra.mxu0 %v2851
        %v4109 = vpop.f32.mrf.mxu0
        %v4110 = vadd.f32 %v4021, %v4109
        %v4111 = vpop.f32.mrf.mxu0
        %v4112 = vadd.f32 %v4023, %v4111
        %4113 = vmatmul.bf16.gmra.mxu0 %v2855
        %v4114 = vpop.f32.mrf.mxu0
        %v4115 = vadd.f32 %v4026, %v4114
        %v4116 = vpop.f32.mrf.mxu0
        %v4117 = vadd.f32 %v4028, %v4116
        %4118 = vdwg.mxu0
        %4119 = vmatpush.bf16.msra.mxu0 %v3278
        %4120 = vmatpush.bf16.msra.mxu0 %v3276
        %4121 = vmatpush.bf16.msra.mxu0 %v3274
        %4122 = vmatpush.bf16.msra.mxu0 %v3272
        %4123 = vmatpush.bf16.msra.mxu0 %v3270
        %4124 = vmatpush.bf16.msra.mxu0 %v3268
        %4125 = vmatpush.bf16.msra.mxu0 %v3266
        %4126 = vmatpush.bf16.msra.mxu0 %v3264
        %4127 = vmatmul.bf16.gmra.mxu0 %v2859
        %v4128 = vpop.f32.mrf.mxu0
        %v4129 = vadd.f32 %v4040, %v4128
        %v4130 = vpop.f32.mrf.mxu0
        %v4131 = vadd.f32 %v4042, %v4130
        %4132 = vmatmul.bf16.gmra.mxu0 %v2863
        %v4133 = vpop.f32.mrf.mxu0
        %v4134 = vadd.f32 %v4045, %v4133
        %v4135 = vpop.f32.mrf.mxu0
        %v4136 = vadd.f32 %v4047, %v4135
        %4137 = vmatmul.bf16.gmra.mxu0 %v2867
        %v4138 = vpop.f32.mrf.mxu0
        %v4139 = vadd.f32 %v4050, %v4138
        %v4140 = vpop.f32.mrf.mxu0
        %v4141 = vadd.f32 %v4052, %v4140
        %4142 = vmatmul.bf16.gmra.mxu0 %v2871
        %v4143 = vpop.f32.mrf.mxu0
        %v4144 = vadd.f32 %v4055, %v4143
        %v4145 = vpop.f32.mrf.mxu0
        %v4146 = vadd.f32 %v4057, %v4145
        %4147 = vmatmul.bf16.gmra.mxu0 %v2875
        %v4148 = vpop.f32.mrf.mxu0
        %v4149 = vadd.f32 %v4060, %v4148
        %v4150 = vpop.f32.mrf.mxu0
        %v4151 = vadd.f32 %v4062, %v4150
        %4152 = vmatmul.bf16.gmra.mxu0 %v2879
        %v4153 = vpop.f32.mrf.mxu0
        %v4154 = vadd.f32 %v4065, %v4153
        %v4155 = vpop.f32.mrf.mxu0
        %v4156 = vadd.f32 %v4067, %v4155
        %4157 = vmatmul.bf16.gmra.mxu0 %v2883
        %v4158 = vpop.f32.mrf.mxu0
        %v4159 = vadd.f32 %v4070, %v4158
        %v4160 = vpop.f32.mrf.mxu0
        %v4161 = vadd.f32 %v4072, %v4160
        %4162 = vmatmul.bf16.gmra.mxu0 %v2887
        %v4163 = vpop.f32.mrf.mxu0
        %v4164 = vadd.f32 %v4075, %v4163
        %v4165 = vpop.f32.mrf.mxu0
        %v4166 = vadd.f32 %v4077, %v4165
        %4167 = vmatmul.bf16.gmra.mxu0 %v2891
        %v4168 = vpop.f32.mrf.mxu0
        %v4169 = vadd.f32 %v4080, %v4168
        %v4170 = vpop.f32.mrf.mxu0
        %v4171 = vadd.f32 %v4082, %v4170
        %4172 = vmatmul.bf16.gmra.mxu0 %v2895
        %v4173 = vpop.f32.mrf.mxu0
        %v4174 = vadd.f32 %v4085, %v4173
        %v4175 = vpop.f32.mrf.mxu0
        %v4176 = vadd.f32 %v4087, %v4175
        %4177 = vmatmul.bf16.gmra.mxu0 %v2899
        %v4178 = vpop.f32.mrf.mxu0
        %v4179 = vadd.f32 %v4090, %v4178
        %v4180 = vpop.f32.mrf.mxu0
        %v4181 = vadd.f32 %v4092, %v4180
        %4182 = vmatmul.bf16.gmra.mxu0 %v2903
        %v4183 = vpop.f32.mrf.mxu0
        %v4184 = vadd.f32 %v4095, %v4183
        %v4185 = vpop.f32.mrf.mxu0
        %v4186 = vadd.f32 %v4097, %v4185
        %4187 = vmatmul.bf16.gmra.mxu0 %v2907
        %v4188 = vpop.f32.mrf.mxu0
        %v4189 = vadd.f32 %v4100, %v4188
        %v4190 = vpop.f32.mrf.mxu0
        %v4191 = vadd.f32 %v4102, %v4190
        %4192 = vmatmul.bf16.gmra.mxu0 %v2911
        %v4193 = vpop.f32.mrf.mxu0
        %v4194 = vadd.f32 %v4105, %v4193
        %v4195 = vpop.f32.mrf.mxu0
        %v4196 = vadd.f32 %v4107, %v4195
        %4197 = vmatmul.bf16.gmra.mxu0 %v2915
        %v4198 = vpop.f32.mrf.mxu0
        %v4199 = vadd.f32 %v4110, %v4198
        %v4200 = vpop.f32.mrf.mxu0
        %v4201 = vadd.f32 %v4112, %v4200
        %4202 = vmatmul.bf16.gmra.mxu0 %v2919
        %v4203 = vpop.f32.mrf.mxu0
        %v4204 = vadd.f32 %v4115, %v4203
        %v4205 = vpop.f32.mrf.mxu0
        %v4206 = vadd.f32 %v4117, %v4205
        %4207 = vdwg.mxu0
        %4208 = vmatpush.bf16.msra.mxu0 0
        %4209 = vmatpush.bf16.msra.mxu0 0
        %4210 = vmatpush.bf16.msra.mxu0 0
        %4211 = vmatpush.bf16.msra.mxu0 0
        %4212 = vmatpush.bf16.msra.mxu0 %v3286
        %4213 = vmatpush.bf16.msra.mxu0 %v3284
        %4214 = vmatpush.bf16.msra.mxu0 %v3282
        %4215 = vmatpush.bf16.msra.mxu0 %v3280
        %4216 = vmatmul.bf16.gmra.mxu0 %v3360
        %v4217 = vpop.f32.mrf.mxu0
        %v4218 = vadd.f32 %v4129, %v4217
        %v4219 = vpop.f32.mrf.mxu0
        %v4220 = vadd.f32 %v4131, %v4219
        %4221 = vmatmul.bf16.gmra.mxu0 %v3363
        %v4222 = vpop.f32.mrf.mxu0
        %v4223 = vadd.f32 %v4134, %v4222
        %v4224 = vpop.f32.mrf.mxu0
        %v4225 = vadd.f32 %v4136, %v4224
        %4226 = vmatmul.bf16.gmra.mxu0 %v3366
        %v4227 = vpop.f32.mrf.mxu0
        %v4228 = vadd.f32 %v4139, %v4227
        %v4229 = vpop.f32.mrf.mxu0
        %v4230 = vadd.f32 %v4141, %v4229
        %4231 = vmatmul.bf16.gmra.mxu0 %v3369
        %v4232 = vpop.f32.mrf.mxu0
        %v4233 = vadd.f32 %v4144, %v4232
        %v4234 = vpop.f32.mrf.mxu0
        %v4235 = vadd.f32 %v4146, %v4234
        %4236 = vmatmul.bf16.gmra.mxu0 %v3372
        %v4237 = vpop.f32.mrf.mxu0
        %v4238 = vadd.f32 %v4149, %v4237
        %v4239 = vpop.f32.mrf.mxu0
        %v4240 = vadd.f32 %v4151, %v4239
        %4241 = vmatmul.bf16.gmra.mxu0 %v3375
        %v4242 = vpop.f32.mrf.mxu0
        %v4243 = vadd.f32 %v4154, %v4242
        %v4244 = vpop.f32.mrf.mxu0
        %v4245 = vadd.f32 %v4156, %v4244
        %4246 = vmatmul.bf16.gmra.mxu0 %v3378
        %v4247 = vpop.f32.mrf.mxu0
        %v4248 = vadd.f32 %v4159, %v4247
        %v4249 = vpop.f32.mrf.mxu0
        %v4250 = vadd.f32 %v4161, %v4249
        %4251 = vmatmul.bf16.gmra.mxu0 %v3381
        %v4252 = vpop.f32.mrf.mxu0
        %v4253 = vadd.f32 %v4164, %v4252
        %v4254 = vpop.f32.mrf.mxu0
        %v4255 = vadd.f32 %v4166, %v4254
        %4256 = vmatmul.bf16.gmra.mxu0 %v3384
        %v4257 = vpop.f32.mrf.mxu0
        %v4258 = vadd.f32 %v4169, %v4257
        %v4259 = vpop.f32.mrf.mxu0
        %v4260 = vadd.f32 %v4171, %v4259
        %4261 = vmatmul.bf16.gmra.mxu0 %v3387
        %v4262 = vpop.f32.mrf.mxu0
        %v4263 = vadd.f32 %v4174, %v4262
        %v4264 = vpop.f32.mrf.mxu0
        %v4265 = vadd.f32 %v4176, %v4264
        %4266 = vmatmul.bf16.gmra.mxu0 %v3390
        %v4267 = vpop.f32.mrf.mxu0
        %v4268 = vadd.f32 %v4179, %v4267
        %v4269 = vpop.f32.mrf.mxu0
        %v4270 = vadd.f32 %v4181, %v4269
        %4271 = vmatmul.bf16.gmra.mxu0 %v3393
        %v4272 = vpop.f32.mrf.mxu0
        %v4273 = vadd.f32 %v4184, %v4272
        %v4274 = vpop.f32.mrf.mxu0
        %v4275 = vadd.f32 %v4186, %v4274
        %4276 = vmatmul.bf16.gmra.mxu0 %v3396
        %v4277 = vpop.f32.mrf.mxu0
        %v4278 = vadd.f32 %v4189, %v4277
        %v4279 = vpop.f32.mrf.mxu0
        %v4280 = vadd.f32 %v4191, %v4279
        %4281 = vmatmul.bf16.gmra.mxu0 %v3399
        %v4282 = vpop.f32.mrf.mxu0
        %v4283 = vadd.f32 %v4194, %v4282
        %v4284 = vpop.f32.mrf.mxu0
        %v4285 = vadd.f32 %v4196, %v4284
        %4286 = vmatmul.bf16.gmra.mxu0 %v3402
        %v4287 = vpop.f32.mrf.mxu0
        %v4288 = vadd.f32 %v4199, %v4287
        %v4289 = vpop.f32.mrf.mxu0
        %v4290 = vadd.f32 %v4201, %v4289
        %4291 = vmatmul.bf16.gmra.mxu0 %v3405
        %v4292 = vpop.f32.mrf.mxu0
        %v4293 = vadd.f32 %v4204, %v4292
        %v4294 = vpop.f32.mrf.mxu0
        %v4295 = vadd.f32 %v4206, %v4294
        %4296 = vdwg.mxu0
        %v4297 = vmax.f32 %v3773, 0.0
        %v4298 = vmax.f32 %v4218, 0.0
        %v4299 = vmax.f32 %v3775, 0.0
        %v4300 = vmax.f32 %v4220, 0.0
        %v4301 = vmax.f32 %v3778, 0.0
        %v4302 = vmax.f32 %v4223, 0.0
        %v4303 = vmax.f32 %v3780, 0.0
        %v4304 = vmax.f32 %v4225, 0.0
        %v4305 = vmax.f32 %v3783, 0.0
        %v4306 = vmax.f32 %v4228, 0.0
        %v4307 = vmax.f32 %v3785, 0.0
        %v4308 = vmax.f32 %v4230, 0.0
        %v4309 = vmax.f32 %v3788, 0.0
        %v4310 = vmax.f32 %v4233, 0.0
        %v4311 = vmax.f32 %v3790, 0.0
        %v4312 = vmax.f32 %v4235, 0.0
        %v4313 = vmax.f32 %v3793, 0.0
        %v4314 = vmax.f32 %v4238, 0.0
        %v4315 = vmax.f32 %v3795, 0.0
        %v4316 = vmax.f32 %v4240, 0.0
        %v4317 = vmax.f32 %v3798, 0.0
        %v4318 = vmax.f32 %v4243, 0.0
        %v4319 = vmax.f32 %v3800, 0.0
        %v4320 = vmax.f32 %v4245, 0.0
        %v4321 = vmax.f32 %v3803, 0.0
        %v4322 = vmax.f32 %v4248, 0.0
        %v4323 = vmax.f32 %v3805, 0.0
        %v4324 = vmax.f32 %v4250, 0.0
        %v4325 = vmax.f32 %v3808, 0.0
        %v4326 = vmax.f32 %v4253, 0.0
        %v4327 = vmax.f32 %v3810, 0.0
        %v4328 = vmax.f32 %v4255, 0.0
        %v4329 = vmax.f32 %v3813, 0.0
        %v4330 = vmax.f32 %v4258, 0.0
        %v4331 = vmax.f32 %v3815, 0.0
        %v4332 = vmax.f32 %v4260, 0.0
        %v4333 = vmax.f32 %v3818, 0.0
        %v4334 = vmax.f32 %v4263, 0.0
        %v4335 = vmax.f32 %v3820, 0.0
        %v4336 = vmax.f32 %v4265, 0.0
        %v4337 = vmax.f32 %v3823, 0.0
        %v4338 = vmax.f32 %v4268, 0.0
        %v4339 = vmax.f32 %v3825, 0.0
        %v4340 = vmax.f32 %v4270, 0.0
        %v4341 = vmax.f32 %v3828, 0.0
        %v4342 = vmax.f32 %v4273, 0.0
        %v4343 = vmax.f32 %v3830, 0.0
        %v4344 = vmax.f32 %v4275, 0.0
        %v4345 = vmax.f32 %v3833, 0.0
        %v4346 = vmax.f32 %v4278, 0.0
        %v4347 = vmax.f32 %v3835, 0.0
        %v4348 = vmax.f32 %v4280, 0.0
        %v4349 = vmax.f32 %v3838, 0.0
        %v4350 = vmax.f32 %v4283, 0.0
        %v4351 = vmax.f32 %v3840, 0.0
        %v4352 = vmax.f32 %v4285, 0.0
        %v4353 = vmax.f32 %v3843, 0.0
        %v4354 = vmax.f32 %v4288, 0.0
        %v4355 = vmax.f32 %v3845, 0.0
        %v4356 = vmax.f32 %v4290, 0.0
        %v4357 = vmax.f32 %v3848, 0.0
        %v4358 = vmax.f32 %v4293, 0.0
        %v4359 = vmax.f32 %v3850, 0.0
        %v4360 = vmax.f32 %v4295, 0.0
        %v4361 = vpack.c.bf16 %v4299, %v4297
        %v4362 = vpack.c.bf16 %v4300, %v4298
        %v4363 = vpack.c.bf16 %v4303, %v4301
        %v4364 = vpack.c.bf16 %v4304, %v4302
        %v4365 = vpack.c.bf16 %v4307, %v4305
        %v4366 = vpack.c.bf16 %v4308, %v4306
        %v4367 = vpack.c.bf16 %v4311, %v4309
        %v4368 = vpack.c.bf16 %v4312, %v4310
        %v4369 = vpack.c.bf16 %v4315, %v4313
        %v4370 = vpack.c.bf16 %v4316, %v4314
        %v4371 = vpack.c.bf16 %v4319, %v4317
        %v4372 = vpack.c.bf16 %v4320, %v4318
        %v4373 = vpack.c.bf16 %v4323, %v4321
        %v4374 = vpack.c.bf16 %v4324, %v4322
        %v4375 = vpack.c.bf16 %v4327, %v4325
        %v4376 = vpack.c.bf16 %v4328, %v4326
        %v4377 = vpack.c.bf16 %v4331, %v4329
        %v4378 = vpack.c.bf16 %v4332, %v4330
        %v4379 = vpack.c.bf16 %v4335, %v4333
        %v4380 = vpack.c.bf16 %v4336, %v4334
        %v4381 = vpack.c.bf16 %v4339, %v4337
        %v4382 = vpack.c.bf16 %v4340, %v4338
        %v4383 = vpack.c.bf16 %v4343, %v4341
        %v4384 = vpack.c.bf16 %v4344, %v4342
        %v4385 = vpack.c.bf16 %v4347, %v4345
        %v4386 = vpack.c.bf16 %v4348, %v4346
        %v4387 = vpack.c.bf16 %v4351, %v4349
        %v4388 = vpack.c.bf16 %v4352, %v4350
        %v4389 = vpack.c.bf16 %v4355, %v4353
        %v4390 = vpack.c.bf16 %v4356, %v4354
        %v4391 = vpack.c.bf16 %v4359, %v4357
        %v4392 = vpack.c.bf16 %v4360, %v4358
        %v4393 = vld [vmem:[%s3] sm:$0xf]
        %v4394 = vld [vmem:[%s3 + $0x4] sm:$0xf]
        %v4395 = vld [vmem:[%s3 + $0x8] sm:$0xf]
        %v4396 = vld [vmem:[%s3 + $0xc] sm:$0xf]
        %v4397 = vld [vmem:[%s3 + $0x10] sm:$0xf]
        %v4398 = vld [vmem:[%s3 + $0x14] sm:$0xf]
        %v4399 = vld [vmem:[%s3 + $0x18] sm:$0xf]
        %v4400 = vld [vmem:[%s3 + $0x1c] sm:$0xf]
        %v4401 = vld [vmem:[%s3 + $0x20] sm:$0xf]
        %v4402 = vld [vmem:[%s3 + $0x24] sm:$0xf]
        %v4403 = vld [vmem:[%s3 + $0x28] sm:$0xf]
        %v4404 = vld [vmem:[%s3 + $0x2c] sm:$0xf]
        %v4405 = vld [vmem:[%s3 + $0x30] sm:$0xf]
        %v4406 = vld [vmem:[%s3 + $0x34] sm:$0xf]
        %v4407 = vld [vmem:[%s3 + $0x38] sm:$0xf]
        %v4408 = vld [vmem:[%s3 + $0x3c] sm:$0xf]
        %v4409 = vld [vmem:[%s3 + $0x40] sm:$0xf]
        %v4410 = vld [vmem:[%s3 + $0x44] sm:$0xf]
        %v4411 = vld [vmem:[%s3 + $0x48] sm:$0xf]
        %v4412 = vld [vmem:[%s3 + $0x4c] sm:$0xf]
        %v4413 = vld [vmem:[%s3 + $0x50] sm:$0xf]
        %v4414 = vld [vmem:[%s3 + $0x54] sm:$0xf]
        %v4415 = vld [vmem:[%s3 + $0x58] sm:$0xf]
        %v4416 = vld [vmem:[%s3 + $0x5c] sm:$0xf]
        %v4417 = vld [vmem:[%s3 + $0x60] sm:$0xf]
        %v4418 = vld [vmem:[%s3 + $0x64] sm:$0xf]
        %v4419 = vld [vmem:[%s3 + $0x68] sm:$0xf]
        %v4420 = vld [vmem:[%s3 + $0x6c] sm:$0xf]
        %v4421 = vld [vmem:[%s3 + $0x70] sm:$0xf]
        %v4422 = vld [vmem:[%s3 + $0x74] sm:$0xf]
        %v4423 = vld [vmem:[%s3 + $0x78] sm:$0xf]
        %v4424 = vld [vmem:[%s3 + $0x7c] sm:$0xf]
        %v4425 = vld [vmem:[%s4] sm:$0x1]
        %v4427 = vperm.slane %v4425, 0
        %v4461 = vunpack.c.l.b16 %v4393
        %v4462 = vunpack.c.l.b16 %v4394
        %v4463 = vunpack.c.l.b16 %v4395
        %v4464 = vunpack.c.l.b16 %v4396
        %v4465 = vunpack.c.l.b16 %v4397
        %v4466 = vunpack.c.l.b16 %v4398
        %v4467 = vunpack.c.l.b16 %v4399
        %v4468 = vunpack.c.l.b16 %v4400
        %v4469 = vunpack.c.l.b16 %v4401
        %v4470 = vunpack.c.l.b16 %v4402
        %v4471 = vunpack.c.l.b16 %v4403
        %v4472 = vunpack.c.l.b16 %v4404
        %v4473 = vunpack.c.l.b16 %v4405
        %v4474 = vunpack.c.l.b16 %v4406
        %v4475 = vunpack.c.l.b16 %v4407
        %v4476 = vunpack.c.l.b16 %v4408
        %v4477 = vunpack.c.l.b16 %v4409
        %v4478 = vunpack.c.l.b16 %v4410
        %v4479 = vunpack.c.l.b16 %v4411
        %v4480 = vunpack.c.l.b16 %v4412
        %v4481 = vunpack.c.l.b16 %v4413
        %v4482 = vunpack.c.l.b16 %v4414
        %v4483 = vunpack.c.l.b16 %v4415
        %v4484 = vunpack.c.l.b16 %v4416
        %v4485 = vunpack.c.l.b16 %v4417
        %v4486 = vunpack.c.l.b16 %v4418
        %v4487 = vunpack.c.l.b16 %v4419
        %v4488 = vunpack.c.l.b16 %v4420
        %v4489 = vunpack.c.l.b16 %v4421
        %v4490 = vunpack.c.l.b16 %v4422
        %v4491 = vunpack.c.l.b16 %v4423
        %v4492 = vunpack.c.l.b16 %v4424
        %v4493 = vpack.c.b16 %v4462, %v4461
        %v4494 = vpack.c.b16 %v4464, %v4463
        %v4495 = vpack.c.b16 %v4466, %v4465
        %v4496 = vpack.c.b16 %v4468, %v4467
        %v4497 = vpack.c.b16 %v4470, %v4469
        %v4498 = vpack.c.b16 %v4472, %v4471
        %v4499 = vpack.c.b16 %v4474, %v4473
        %v4500 = vpack.c.b16 %v4476, %v4475
        %v4501 = vpack.c.b16 %v4478, %v4477
        %v4502 = vpack.c.b16 %v4480, %v4479
        %v4503 = vpack.c.b16 %v4482, %v4481
        %v4504 = vpack.c.b16 %v4484, %v4483
        %v4505 = vpack.c.b16 %v4486, %v4485
        %v4506 = vpack.c.b16 %v4488, %v4487
        %v4507 = vpack.c.b16 %v4490, %v4489
        %v4508 = vpack.c.b16 %v4492, %v4491
        %4525 = vmatpush.bf16.msra.mxu0 %v4500
        %4526 = vmatpush.bf16.msra.mxu0 %v4499
        %4527 = vmatpush.bf16.msra.mxu0 %v4498
        %4528 = vmatpush.bf16.msra.mxu0 %v4497
        %4529 = vmatpush.bf16.msra.mxu0 %v4496
        %4530 = vmatpush.bf16.msra.mxu0 %v4495
        %4531 = vmatpush.bf16.msra.mxu0 %v4494
        %4532 = vmatpush.bf16.msra.mxu0 %v4493
        %4533 = vmatmul.bf16.gmra.mxu0 %v4361
        %v4534 = vpop.f32.mrf.mxu0
        %v4535 = vadd.f32 %v4427, %v4534
        %v4536 = vpop.f32.mrf.mxu0
        %v4537 = vadd.f32 %v4427, %v4536
        %4538 = vmatmul.bf16.gmra.mxu0 %v4363
        %v4539 = vpop.f32.mrf.mxu0
        %v4540 = vadd.f32 %v4427, %v4539
        %v4541 = vpop.f32.mrf.mxu0
        %v4542 = vadd.f32 %v4427, %v4541
        %4543 = vmatmul.bf16.gmra.mxu0 %v4365
        %v4544 = vpop.f32.mrf.mxu0
        %v4545 = vadd.f32 %v4427, %v4544
        %v4546 = vpop.f32.mrf.mxu0
        %v4547 = vadd.f32 %v4427, %v4546
        %4548 = vmatmul.bf16.gmra.mxu0 %v4367
        %v4549 = vpop.f32.mrf.mxu0
        %v4550 = vadd.f32 %v4427, %v4549
        %v4551 = vpop.f32.mrf.mxu0
        %v4552 = vadd.f32 %v4427, %v4551
        %4553 = vmatmul.bf16.gmra.mxu0 %v4369
        %v4554 = vpop.f32.mrf.mxu0
        %v4555 = vadd.f32 %v4427, %v4554
        %v4556 = vpop.f32.mrf.mxu0
        %v4557 = vadd.f32 %v4427, %v4556
        %4558 = vmatmul.bf16.gmra.mxu0 %v4371
        %v4559 = vpop.f32.mrf.mxu0
        %v4560 = vadd.f32 %v4427, %v4559
        %v4561 = vpop.f32.mrf.mxu0
        %v4562 = vadd.f32 %v4427, %v4561
        %4563 = vmatmul.bf16.gmra.mxu0 %v4373
        %v4564 = vpop.f32.mrf.mxu0
        %v4565 = vadd.f32 %v4427, %v4564
        %v4566 = vpop.f32.mrf.mxu0
        %v4567 = vadd.f32 %v4427, %v4566
        %4568 = vmatmul.bf16.gmra.mxu0 %v4375
        %v4569 = vpop.f32.mrf.mxu0
        %v4570 = vadd.f32 %v4427, %v4569
        %v4571 = vpop.f32.mrf.mxu0
        %v4572 = vadd.f32 %v4427, %v4571
        %4573 = vmatmul.bf16.gmra.mxu0 %v4377
        %v4574 = vpop.f32.mrf.mxu0
        %v4575 = vadd.f32 %v4427, %v4574
        %v4576 = vpop.f32.mrf.mxu0
        %v4577 = vadd.f32 %v4427, %v4576
        %4578 = vmatmul.bf16.gmra.mxu0 %v4379
        %v4579 = vpop.f32.mrf.mxu0
        %v4580 = vadd.f32 %v4427, %v4579
        %v4581 = vpop.f32.mrf.mxu0
        %v4582 = vadd.f32 %v4427, %v4581
        %4583 = vmatmul.bf16.gmra.mxu0 %v4381
        %v4584 = vpop.f32.mrf.mxu0
        %v4585 = vadd.f32 %v4427, %v4584
        %v4586 = vpop.f32.mrf.mxu0
        %v4587 = vadd.f32 %v4427, %v4586
        %4588 = vmatmul.bf16.gmra.mxu0 %v4383
        %v4589 = vpop.f32.mrf.mxu0
        %v4590 = vadd.f32 %v4427, %v4589
        %v4591 = vpop.f32.mrf.mxu0
        %v4592 = vadd.f32 %v4427, %v4591
        %4593 = vmatmul.bf16.gmra.mxu0 %v4385
        %v4594 = vpop.f32.mrf.mxu0
        %v4595 = vadd.f32 %v4427, %v4594
        %v4596 = vpop.f32.mrf.mxu0
        %v4597 = vadd.f32 %v4427, %v4596
        %4598 = vmatmul.bf16.gmra.mxu0 %v4387
        %v4599 = vpop.f32.mrf.mxu0
        %v4600 = vadd.f32 %v4427, %v4599
        %v4601 = vpop.f32.mrf.mxu0
        %v4602 = vadd.f32 %v4427, %v4601
        %4603 = vmatmul.bf16.gmra.mxu0 %v4389
        %v4604 = vpop.f32.mrf.mxu0
        %v4605 = vadd.f32 %v4427, %v4604
        %v4606 = vpop.f32.mrf.mxu0
        %v4607 = vadd.f32 %v4427, %v4606
        %4608 = vmatmul.bf16.gmra.mxu0 %v4391
        %v4609 = vpop.f32.mrf.mxu0
        %v4610 = vadd.f32 %v4427, %v4609
        %v4611 = vpop.f32.mrf.mxu0
        %v4612 = vadd.f32 %v4427, %v4611
        %4613 = vdwg.mxu0
        %4614 = vmatpush.bf16.msra.mxu0 %v4508
        %4615 = vmatpush.bf16.msra.mxu0 %v4507
        %4616 = vmatpush.bf16.msra.mxu0 %v4506
        %4617 = vmatpush.bf16.msra.mxu0 %v4505
        %4618 = vmatpush.bf16.msra.mxu0 %v4504
        %4619 = vmatpush.bf16.msra.mxu0 %v4503
        %4620 = vmatpush.bf16.msra.mxu0 %v4502
        %4621 = vmatpush.bf16.msra.mxu0 %v4501
        %4622 = vmatmul.bf16.gmra.mxu0 %v4362
        %v4623 = vpop.f32.mrf.mxu0
        %v4624 = vadd.f32 %v4535, %v4623
        %v4625 = vpop.f32.mrf.mxu0
        %v4626 = vadd.f32 %v4537, %v4625
        %4627 = vmatmul.bf16.gmra.mxu0 %v4364
        %v4628 = vpop.f32.mrf.mxu0
        %v4629 = vadd.f32 %v4540, %v4628
        %v4630 = vpop.f32.mrf.mxu0
        %v4631 = vadd.f32 %v4542, %v4630
        %4632 = vmatmul.bf16.gmra.mxu0 %v4366
        %v4633 = vpop.f32.mrf.mxu0
        %v4634 = vadd.f32 %v4545, %v4633
        %v4635 = vpop.f32.mrf.mxu0
        %v4636 = vadd.f32 %v4547, %v4635
        %4637 = vmatmul.bf16.gmra.mxu0 %v4368
        %v4638 = vpop.f32.mrf.mxu0
        %v4639 = vadd.f32 %v4550, %v4638
        %v4640 = vpop.f32.mrf.mxu0
        %v4641 = vadd.f32 %v4552, %v4640
        %4642 = vmatmul.bf16.gmra.mxu0 %v4370
        %v4643 = vpop.f32.mrf.mxu0
        %v4644 = vadd.f32 %v4555, %v4643
        %v4645 = vpop.f32.mrf.mxu0
        %v4646 = vadd.f32 %v4557, %v4645
        %4647 = vmatmul.bf16.gmra.mxu0 %v4372
        %v4648 = vpop.f32.mrf.mxu0
        %v4649 = vadd.f32 %v4560, %v4648
        %v4650 = vpop.f32.mrf.mxu0
        %v4651 = vadd.f32 %v4562, %v4650
        %4652 = vmatmul.bf16.gmra.mxu0 %v4374
        %v4653 = vpop.f32.mrf.mxu0
        %v4654 = vadd.f32 %v4565, %v4653
        %v4655 = vpop.f32.mrf.mxu0
        %v4656 = vadd.f32 %v4567, %v4655
        %4657 = vmatmul.bf16.gmra.mxu0 %v4376
        %v4658 = vpop.f32.mrf.mxu0
        %v4659 = vadd.f32 %v4570, %v4658
        %v4660 = vpop.f32.mrf.mxu0
        %v4661 = vadd.f32 %v4572, %v4660
        %4662 = vmatmul.bf16.gmra.mxu0 %v4378
        %v4663 = vpop.f32.mrf.mxu0
        %v4664 = vadd.f32 %v4575, %v4663
        %v4665 = vpop.f32.mrf.mxu0
        %v4666 = vadd.f32 %v4577, %v4665
        %4667 = vmatmul.bf16.gmra.mxu0 %v4380
        %v4668 = vpop.f32.mrf.mxu0
        %v4669 = vadd.f32 %v4580, %v4668
        %v4670 = vpop.f32.mrf.mxu0
        %v4671 = vadd.f32 %v4582, %v4670
        %4672 = vmatmul.bf16.gmra.mxu0 %v4382
        %v4673 = vpop.f32.mrf.mxu0
        %v4674 = vadd.f32 %v4585, %v4673
        %v4675 = vpop.f32.mrf.mxu0
        %v4676 = vadd.f32 %v4587, %v4675
        %4677 = vmatmul.bf16.gmra.mxu0 %v4384
        %v4678 = vpop.f32.mrf.mxu0
        %v4679 = vadd.f32 %v4590, %v4678
        %v4680 = vpop.f32.mrf.mxu0
        %v4681 = vadd.f32 %v4592, %v4680
        %4682 = vmatmul.bf16.gmra.mxu0 %v4386
        %v4683 = vpop.f32.mrf.mxu0
        %v4684 = vadd.f32 %v4595, %v4683
        %v4685 = vpop.f32.mrf.mxu0
        %v4686 = vadd.f32 %v4597, %v4685
        %4687 = vmatmul.bf16.gmra.mxu0 %v4388
        %v4688 = vpop.f32.mrf.mxu0
        %v4689 = vadd.f32 %v4600, %v4688
        %v4690 = vpop.f32.mrf.mxu0
        %v4691 = vadd.f32 %v4602, %v4690
        %4692 = vmatmul.bf16.gmra.mxu0 %v4390
        %v4693 = vpop.f32.mrf.mxu0
        %v4694 = vadd.f32 %v4605, %v4693
        %v4695 = vpop.f32.mrf.mxu0
        %v4696 = vadd.f32 %v4607, %v4695
        %4697 = vmatmul.bf16.gmra.mxu0 %v4392
        %v4698 = vpop.f32.mrf.mxu0
        %v4699 = vadd.f32 %v4610, %v4698
        %v4700 = vpop.f32.mrf.mxu0
        %v4701 = vadd.f32 %v4612, %v4700
        %4702 = vdwg.mxu0
        %4703 = vxpose.xlu0.b32.start [1/16] %v4624, 128
        %4704 = vxpose.xlu0.b32.cont [2/16] %v4626, 128
        %4705 = vxpose.xlu0.b32.cont [3/16] %v4629, 128
        %4706 = vxpose.xlu0.b32.cont [4/16] %v4631, 128
        %4707 = vxpose.xlu0.b32.cont [5/16] %v4634, 128
        %4708 = vxpose.xlu0.b32.cont [6/16] %v4636, 128
        %4709 = vxpose.xlu0.b32.cont [7/16] %v4639, 128
        %4710 = vxpose.xlu0.b32.cont [8/16] %v4641, 128
        %4711 = vxpose.xlu0.b32.cont [9/16] %v4644, 128
        %4712 = vxpose.xlu0.b32.cont [10/16] %v4646, 128
        %4713 = vxpose.xlu0.b32.cont [11/16] %v4649, 128
        %4714 = vxpose.xlu0.b32.cont [12/16] %v4651, 128
        %4715 = vxpose.xlu0.b32.cont [13/16] %v4654, 128
        %4716 = vxpose.xlu0.b32.cont [14/16] %v4656, 128
        %4717 = vxpose.xlu0.b32.cont [15/16] %v4659, 128
        %4718 = vxpose.xlu0.b32.end [16/16] %v4661, 128
        %v4719 = vpop.trf.xlu0
        %v4720 = vpop.trf.xlu0
        %v4721 = vpop.trf.xlu0
        %v4722 = vpop.trf.xlu0
        %v4723 = vpop.trf.xlu0
        %v4724 = vpop.trf.xlu0
        %v4725 = vpop.trf.xlu0
        %v4726 = vpop.trf.xlu0
        %v4727 = vpop.trf.xlu0
        %v4728 = vpop.trf.xlu0
        %v4729 = vpop.trf.xlu0
        %v4730 = vpop.trf.xlu0
        %v4731 = vpop.trf.xlu0
        %v4732 = vpop.trf.xlu0
        %v4733 = vpop.trf.xlu0
        %v4734 = vpop.trf.xlu0
        %4735 = vxpose.xlu0.b32.start [1/16] %v4664, 128
        %4736 = vxpose.xlu0.b32.cont [2/16] %v4666, 128
        %4737 = vxpose.xlu0.b32.cont [3/16] %v4669, 128
        %4738 = vxpose.xlu0.b32.cont [4/16] %v4671, 128
        %4739 = vxpose.xlu0.b32.cont [5/16] %v4674, 128
        %4740 = vxpose.xlu0.b32.cont [6/16] %v4676, 128
        %4741 = vxpose.xlu0.b32.cont [7/16] %v4679, 128
        %4742 = vxpose.xlu0.b32.cont [8/16] %v4681, 128
        %4743 = vxpose.xlu0.b32.cont [9/16] %v4684, 128
        %4744 = vxpose.xlu0.b32.cont [10/16] %v4686, 128
        %4745 = vxpose.xlu0.b32.cont [11/16] %v4689, 128
        %4746 = vxpose.xlu0.b32.cont [12/16] %v4691, 128
        %4747 = vxpose.xlu0.b32.cont [13/16] %v4694, 128
        %4748 = vxpose.xlu0.b32.cont [14/16] %v4696, 128
        %4749 = vxpose.xlu0.b32.cont [15/16] %v4699, 128
        %4750 = vxpose.xlu0.b32.end [16/16] %v4701, 128
        %v4751 = vpop.trf.xlu0
        %v4752 = vpop.trf.xlu0
        %v4753 = vpop.trf.xlu0
        %v4754 = vpop.trf.xlu0
        %v4755 = vpop.trf.xlu0
        %v4756 = vpop.trf.xlu0
        %v4757 = vpop.trf.xlu0
        %v4758 = vpop.trf.xlu0
        %v4759 = vpop.trf.xlu0
        %v4760 = vpop.trf.xlu0
        %v4761 = vpop.trf.xlu0
        %v4762 = vpop.trf.xlu0
        %v4763 = vpop.trf.xlu0
        %v4764 = vpop.trf.xlu0
        %v4765 = vpop.trf.xlu0
        %v4766 = vpop.trf.xlu0
        %4767 = vst [vmem:[%s217] sm:$0xff] %v4719
        %4768 = vst [vmem:[%s217 + $0x8] sm:$0xff] %v4751
        %4769 = vst [vmem:[%s217 + $0x10] sm:$0xff] %v4720
        %4770 = vst [vmem:[%s217 + $0x18] sm:$0xff] %v4752
        %4771 = vst [vmem:[%s217 + $0x20] sm:$0xff] %v4721
        %4772 = vst [vmem:[%s217 + $0x28] sm:$0xff] %v4753
        %4773 = vst [vmem:[%s217 + $0x30] sm:$0xff] %v4722
        %4774 = vst [vmem:[%s217 + $0x38] sm:$0xff] %v4754
        %4775 = vst [vmem:[%s217 + $0x40] sm:$0xff] %v4723
        %4776 = vst [vmem:[%s217 + $0x48] sm:$0xff] %v4755
        %4777 = vst [vmem:[%s217 + $0x50] sm:$0xff] %v4724
        %4778 = vst [vmem:[%s217 + $0x58] sm:$0xff] %v4756
        %4779 = vst [vmem:[%s217 + $0x60] sm:$0xff] %v4725
        %4780 = vst [vmem:[%s217 + $0x68] sm:$0xff] %v4757
        %4781 = vst [vmem:[%s217 + $0x70] sm:$0xff] %v4726
        %4782 = vst [vmem:[%s217 + $0x78] sm:$0xff] %v4758
        %s4783 = sand.u32 %s137, 1
        %s4784 = scalar_lea.sflag [#allocation3], %s4783
        %s4785 = sand.u32 %s137, 1
        %s4786 = smul.addr %s4785, 128
        %s4787 = scalar_lea.vmem [#allocation2], %s4786
        // Predicated region
        $region41: #{tpu_custom_call.1} parent=39 // pred_check
          %p4788 = pneg %p147
        $region42: #{tpu_custom_call.1} parent=39 // pred_check_branch
          %4790 = sbr.rel (%p4788) target = $region44
        $region43: #{tpu_custom_call.1} parent=39 // pred_region
          %4792 = vsyncadd %s4784, 0
          %s4793 = smul.addr %s19, 16
          %s4794 = smul.addr %s4793, 8
          %s4795 = scalar_lea.hbm %s5, %s4794
          %s4796 = sshll.u32 %s4787, 4
          %s4797 = int_to_ptr.vmem [resolvable:$true] %s4796
          %s4798 = sshll.u32 %s4795, 4
          %s4799 = int_to_ptr.hbm [resolvable:$true] %s4798
          %4804 = dma.vmem_to_hbm [thread:$0]  %s4797, 2048, %s4799, %s4784, 256, 256, 16
        $region44: #{tpu_custom_call.1} parent=39 // pred_fallthru
          _
      $region40: #{tpu_custom_call.1} parent=5 // pred_fallthru
        _
      %p4805 = scmp.le.s32.totalorder 2, %s14
      // Predicated region
      $region45: #{tpu_custom_call.1} parent=5 // pred_check
        %p4806 = pneg %p4805
      $region46: #{tpu_custom_call.1} parent=5 // pred_check_branch
        %4808 = sbr.rel (%p4806) target = $region48
      $region47: #{tpu_custom_call.1} parent=5 // pred_region
        %s4809 = ssub.s32 %s14, 2
        // Predicated region
        $region49: #{tpu_custom_call.1} parent=47 // pred_check
          %p4810 = pneg %p153
        $region50: #{tpu_custom_call.1} parent=47 // pred_check_branch
          %4812 = sbr.rel (%p4810) target = $region52
        $region51: #{tpu_custom_call.1} parent=47 // pred_region
          %s4813 = sand.u32 %s138, 1
          %s4814 = scalar_lea.sflag [#allocation3], %s4813
          %s4815 = sand.u32 %s138, 1
          %s4816 = smul.addr %s4815, 128
          %s4817 = scalar_lea.vmem [#allocation2], %s4816
          %4819 = dma.done %s4814, 2048
        $region52: #{tpu_custom_call.1} parent=47 // pred_fallthru
          _
      $region48: #{tpu_custom_call.1} parent=5 // pred_fallthru
        _
    $region6: #{tpu_custom_call.1} parent=1 // loop_footer
      %s18 = sadd.s32 1, %s14
    $region7: #{tpu_custom_call.1} parent=1 // loop_footer_branch
      %13 = sbr.rel target = $region3
    $region8: #{tpu_custom_call.1} parent=1 // loop_exit
      _
    %4820 = vsyncpa [#allocation3], 1
    %s4821 = scalar_lea.sflag [#allocation3], 1
    %4822 = vsyncpa %s4821, 1

</llo_original>
